<compile_context>
chip_gen: v7x
topology: tpu7x:2x2x1
jax: 0.10.0
libtpu: 0.0.40
codegen_flags: <defaults>
</compile_context>

<pallas_src>
from functools import partial

import jax
import jax.numpy as jnp
from jax.experimental import pallas as pl
from jax.experimental.pallas import tpu as pltpu

NODE_FEATURE_DIM = 4
STATE_DIM = 32
NUM_ROUNDS = 3
MAX_TILE_N = 512          # node-tile (lane) width for the gridded kernels


# ---------------------------------------------------------------------------
# Kernels
# ---------------------------------------------------------------------------
def input_kernel(x_ref, win_ref, bin_ref, wm0_ref, bm0_ref,
                 state_ref, msg_ref):
    """state[:, t] = relu(Win @ x[:, t] + bin); msg0[:, t] = relu(Wm0 @ state + bm0).

    Nodes live on the lane (last) axis; msg0 is emitted in bf16 so round 0
    streams half the bytes for its src operand.
    """
    st = jnp.maximum(
        jnp.dot(win_ref[...], x_ref[...], preferred_element_type=jnp.float32)
        + bin_ref[...], 0.0)
    state_ref[...] = st
    msg_ref[...] = jnp.maximum(
        jnp.dot(wm0_ref[...], st, preferred_element_type=jnp.float32)
        + bm0_ref[...], 0.0).astype(jnp.bfloat16)


def round_kernel(msg_ref, state_ref, a_ref,
                 wu_ref, bu_ref, wm_next_ref, bm_next_ref,
                 out_state_ref, out_msg_ref, acc_ref):
    """One message-passing round, tiled over (dst_tile, src_tile).

      acc[:, dst]       = sum_src msg[:, src] @ A_T[src, dst]      (bf16 MXU, f32 acc)
      new_state[:, dst] = state[:, dst] + relu(Wu @ acc + bu)
      next_msg[:, dst]  = relu(Wm_next @ new_state + bm_next)       (bf16, for round r+1)
    """
    s = pl.program_id(1)

    @pl.when(s == 0)
    def _init():
        acc_ref[...] = jnp.zeros_like(acc_ref)

    # edge gather + scatter-add == adjacency matmul; int8 A tile is cast to
    # bf16 after the DMA (exact), accumulation stays f32.
    acc_ref[...] += jnp.dot(msg_ref[...], a_ref[...].astype(jnp.bfloat16),
                            preferred_element_type=jnp.float32)

    @pl.when(s == pl.num_programs(1) - 1)
    def _finalize():
        upd = jnp.maximum(
            jnp.dot(wu_ref[...], acc_ref[...],
                    preferred_element_type=jnp.float32)
            + bu_ref[...], 0.0)
        new_state = state_ref[...] + upd
        out_state_ref[...] = new_state
        out_msg_ref[...] = jnp.maximum(
            jnp.dot(wm_next_ref[...], new_state,
                    preferred_element_type=jnp.float32)
            + bm_next_ref[...], 0.0).astype(jnp.bfloat16)


def pool_out_kernel(state_ref, p_ref, wout_ref, bout_ref, out_ref, acc_ref):
    """Per-graph sum pooling (matmul with bf16 P_T) + output head, lane-padded."""
    n = pl.program_id(0)

    @pl.when(n == 0)
    def _init():
        acc_ref[...] = jnp.zeros_like(acc_ref)

    acc_ref[...] += jnp.dot(state_ref[...].astype(jnp.bfloat16), p_ref[...],
                            preferred_element_type=jnp.float32)

    @pl.when(n == pl.num_programs(0) - 1)
    def _finalize():
        out_ref[...] = (
            jnp.dot(wout_ref[...], acc_ref[...],
                    preferred_element_type=jnp.float32)
            + bout_ref[...])


# ---------------------------------------------------------------------------
# Wrapper
# ---------------------------------------------------------------------------
def _round_up(n, m):
    return ((n + m - 1) // m) * m


def message_passing_nn(x, edge_index, batch, params, num_graphs,
                       num_rounds=NUM_ROUNDS):
    """Pallas-backed forward pass. Returns (num_graphs,) float32."""
    num_nodes, feat_dim = x.shape
    state_dim = params["win"].shape[0]
    f32 = jnp.float32
    bf16 = jnp.bfloat16

    # Node tiling (lane axis): pad to >= 128 lanes so every store is
    # lane-dense; large graphs use 512-wide tiles (multiple of 256 -> fills
    # the v6e/v7x MXU; also a multiple of 128 for v5e).
    if num_nodes <= MAX_TILE_N:
        n_pad = max(_round_up(num_nodes, 128), 128)
        tile_n = n_pad
    else:
        n_pad = _round_up(num_nodes, MAX_TILE_N)
        tile_n = MAX_TILE_N
    grid_n = n_pad // tile_n
    g_pad = max(_round_up(num_graphs, 128), 128)

    # Glue: dense scatter operators in node-on-lanes orientation.
    # A_T[s, d] = #edges s->d, int8 (exact up to 127; clipped above --
    # TODO(synk): keep a wider path for heavy multigraphs).  Padded rows/cols
    # stay zero so padded nodes never affect real nodes.
    a_t = jnp.clip(
        jnp.zeros((n_pad, n_pad), f32)
        .at[edge_index[0], edge_index[1]].add(1.0),
        0.0, 127.0).astype(jnp.int8)
    # P_T[n, g] = 1 iff batch[n] == g (0/1 exact in bf16; padded rows zero).
    p_t = (jnp.zeros((n_pad, g_pad), f32)
           .at[jnp.arange(num_nodes), batch].add(1.0)).astype(bf16)
    # x_T : [feat, n_pad]
    x_t = jnp.zeros((feat_dim, n_pad), f32).at[:, :num_nodes].set(
        x.astype(f32).T)

    # ---- input_net (+ round-0 message precompute) --------------------------
    state, msg = pl.pallas_call(
        input_kernel,
        out_shape=(jax.ShapeDtypeStruct((state_dim, n_pad), f32),
                   jax.ShapeDtypeStruct((state_dim, n_pad), bf16)),
        grid_spec=pltpu.PrefetchScalarGridSpec(
            num_scalar_prefetch=0,
            grid=(grid_n,),
            in_specs=[
                pl.BlockSpec((feat_dim, tile_n), lambda i: (0, i)),
                pl.BlockSpec((state_dim, feat_dim), lambda i: (0, 0)),
                pl.BlockSpec((state_dim, 1), lambda i: (0, 0)),
                pl.BlockSpec((state_dim, state_dim), lambda i: (0, 0)),
                pl.BlockSpec((state_dim, 1), lambda i: (0, 0)),
            ],
            out_specs=[
                pl.BlockSpec((state_dim, tile_n), lambda i: (0, i)),
                pl.BlockSpec((state_dim, tile_n), lambda i: (0, i)),
            ],
        ),
        compiler_params=pltpu.CompilerParams(
            dimension_semantics=("parallel",)),
    )(x_t, params["win"], params["bin"], params["wm"][0], params["bm"][0])

    # ---- message-passing rounds ---------------------------------------------
    blk_bytes = (state_dim * tile_n * (2 + 4 + 4 + 2)    # msg-src, state-dst, out-state, out-msg
                 + tile_n * tile_n * 1                    # int8 A_T tile
                 + 2 * state_dim * state_dim * 4          # Wu, Wm_next
                 + 2 * state_dim * 4)                     # bu, bm_next
    acc_bytes = state_dim * tile_n * 4
    # Double-buffered blocks + accumulator + headroom; capped at 32 MiB so the
    # same budget is safe on v7x's 64 MiB physical VMEM.
    vmem_limit = int(min(32 << 20, max(16 << 20, 4 * (2 * blk_bytes + acc_bytes))))

    cost = pl.CostEstimate(
        flops=int(2 * state_dim * n_pad * n_pad                    # adjacency
                  + 2 * 2 * state_dim * state_dim * n_pad),        # Wu + Wm_next
        transcendentals=0,
        bytes_accessed=int(n_pad * n_pad * 1                       # int8 A_T
                           + state_dim * n_pad * (2 * grid_n + 4 + 4 + 2)
                           + 2 * state_dim * state_dim * 4),
    )

    round_call = pl.pallas_call(
        round_kernel,
        out_shape=(jax.ShapeDtypeStruct((state_dim, n_pad), f32),
                   jax.ShapeDtypeStruct((state_dim, n_pad), bf16)),
        grid_spec=pltpu.PrefetchScalarGridSpec(
            num_scalar_prefetch=0,
            grid=(grid_n, grid_n),                    # (dst tiles, src tiles)
            in_specs=[
                pl.BlockSpec((state_dim, tile_n), lambda d, s: (0, s)),     # msg (src, bf16)
                pl.BlockSpec((state_dim, tile_n), lambda d, s: (0, d)),     # state (dst, f32)
                pl.BlockSpec((tile_n, tile_n), lambda d, s: (s, d)),        # A_T tile (int8)
                pl.BlockSpec((state_dim, state_dim), lambda d, s: (0, 0)),  # Wu
                pl.BlockSpec((state_dim, 1), lambda d, s: (0, 0)),          # bu
                pl.BlockSpec((state_dim, state_dim), lambda d, s: (0, 0)),  # Wm_next
                pl.BlockSpec((state_dim, 1), lambda d, s: (0, 0)),          # bm_next
            ],
            out_specs=[
                pl.BlockSpec((state_dim, tile_n), lambda d, s: (0, d)),     # new state
                pl.BlockSpec((state_dim, tile_n), lambda d, s: (0, d)),     # next msg
            ],
            scratch_shapes=[pltpu.VMEM((state_dim, tile_n), jnp.float32)],
        ),
        compiler_params=pltpu.CompilerParams(
            dimension_semantics=("parallel", "arbitrary"),
            vmem_limit_bytes=vmem_limit),
        cost_estimate=cost,
    )

    for r in range(num_rounds):
        # Wm_next/bm_next feed the NEXT round's precomputed messages; on the
        # last round the msg output is simply discarded (negligible work).
        nxt = (r + 1) % num_rounds
        state, msg = round_call(msg, state, a_t,
                                params["wu"][r], params["bu"][r],
                                params["wm"][nxt], params["bm"][nxt])

    # ---- pooling + output head ----------------------------------------------
    out_pad = pl.pallas_call(
        pool_out_kernel,
        out_shape=jax.ShapeDtypeStruct((1, g_pad), f32),
        grid_spec=pltpu.PrefetchScalarGridSpec(
            num_scalar_prefetch=0,
            grid=(grid_n,),
            in_specs=[
                pl.BlockSpec((state_dim, tile_n), lambda i: (0, i)),
                pl.BlockSpec((tile_n, g_pad), lambda i: (i, 0)),
                pl.BlockSpec((1, state_dim), lambda i: (0, 0)),
                pl.BlockSpec((1, 1), lambda i: (0, 0)),
            ],
            out_specs=pl.BlockSpec((1, g_pad), lambda i: (0, 0)),
            scratch_shapes=[pltpu.VMEM((state_dim, g_pad), jnp.float32)],
        ),
        compiler_params=pltpu.CompilerParams(
            dimension_semantics=("arbitrary",)),
    )(state, p_t, params["wout"], params["bout"])

    return out_pad[0, :num_graphs]


# ---------------------------------------------------------------------------
# Params + pure-JAX reference
# ---------------------------------------------------------------------------
def init_params(key, node_feature_dim=NODE_FEATURE_DIM, state_dim=STATE_DIM,
                num_rounds=NUM_ROUNDS):
    ks = jax.random.split(key, 8)
    s = 0.1
    # PyTorch-native [out, in] weights; biases stored as [out, 1] columns
    # (broadcast over the node-lane axis inside the kernels).
    return dict(
        win=s * jax.random.normal(ks[0], (state_dim, node_feature_dim), jnp.float32),
        bin=s * jax.random.normal(ks[1], (state_dim, 1), jnp.float32),
        wm=s * jax.random.normal(ks[2], (num_rounds, state_dim, state_dim), jnp.float32),
        bm=s * jax.random.normal(ks[3], (num_rounds, state_dim, 1), jnp.float32),
        wu=s * jax.random.normal(ks[4], (num_rounds, state_dim, state_dim), jnp.float32),
        bu=s * jax.random.normal(ks[5], (num_rounds, state_dim, 1), jnp.float32),
        wout=s * jax.random.normal(ks[6], (1, state_dim), jnp.float32),
        bout=s * jax.random.normal(ks[7], (1, 1), jnp.float32),
    )


def reference_forward(x, edge_index, batch, params, num_graphs,
                      num_rounds=NUM_ROUNDS):
    """Pure-JAX mirror of the PyTorch module (row-major layout)."""
    num_nodes = x.shape[0]
    state_dim = params["win"].shape[0]
    state = jax.nn.relu(x @ params["win"].T + params["bin"].T)
    for r in range(num_rounds):
        message = jax.nn.relu(state @ params["wm"][r].T + params["bm"][r].T)
        aggregated = jnp.zeros((num_nodes, state_dim), jnp.float32).at[
            edge_index[1]].add(message[edge_index[0]])
        state = state + jax.nn.relu(aggregated @ params["wu"][r].T
                                    + params["bu"][r].T)
    graph_state = jnp.zeros((num_graphs, state_dim), jnp.float32).at[
        batch].add(state)
    return (graph_state @ params["wout"].T + params["bout"].T).reshape(-1)


if __name__ == "__main__":
    key = jax.random.PRNGKey(0)
    k_params, k_x, k_src, k_dst = jax.random.split(key, 4)

    num_nodes = 640     # pads to 1024 -> 2x2 grid of 512-wide tiles (exercises tiling + padding)
    num_edges = 2048
    num_graphs = 8

    params = init_params(k_params)

    x = jax.random.normal(k_x, (num_nodes, NODE_FEATURE_DIM), jnp.float32)
    edge_src = jax.random.randint(k_src, (num_edges,), 0, num_nodes)
    edge_dst = jax.random.randint(k_dst, (num_edges,), 0, num_nodes)
    edge_index = jnp.stack([edge_src, edge_dst], axis=0)          # (2, num_edges)
    batch = jnp.repeat(jnp.arange(num_graphs, dtype=jnp.int32),
                       num_nodes // num_graphs)                   # (num_nodes,)

    fwd = jax.jit(partial(message_passing_nn, num_graphs=num_graphs))
    out = jax.block_until_ready(fwd(x, edge_index, batch, params))

    ref = reference_forward(x, edge_index, batch, params, num_graphs)
    assert out.shape == (num_graphs,)
    # bf16 message stream + int8 adjacency (exact small counts) with f32
    # accumulation => ~1e-3 relative error per round; compare against the
    # output scale so near-zero components don't trip the check.
    err = float(jnp.max(jnp.abs(out - ref)))
    scale = float(jnp.maximum(jnp.max(jnp.abs(ref)), 1.0))
    assert err <= 2e-2 * scale, (err, scale, out, ref)

    print("KERNEL_OK")
</pallas_src>

<mosaic_0001>
module attributes {stable_mosaic.version = 11 : i64} {
  func.func private @main(%arg0: i32) attributes {dimension_semantics = [#tpu.dimension_semantics<core_parallel>], iteration_bounds = array<i64: 2>, tpu.core_type = #tpu.core_type<sc_scalar_subcore>, window_params = []} {
    return
  }
}

module attributes {stable_mosaic.version = 11 : i64} {
  func.func private @main(%arg0: i32) attributes {dimension_semantics = [#tpu.dimension_semantics<core_parallel>], iteration_bounds = array<i64: 2>, tpu.core_type = #tpu.core_type<sc_scalar_subcore>, window_params = []} {
    return
  }
}

module attributes {stable_mosaic.version = 11 : i64} {
  func.func @input_kernel(%arg0: i32, %arg1: memref<4x512xf32, #tpu.memory_space<vmem>>, %arg2: memref<32x4xf32, #tpu.memory_space<vmem>>, %arg3: memref<32x1xf32, #tpu.memory_space<vmem>>, %arg4: memref<32x32xf32, #tpu.memory_space<vmem>>, %arg5: memref<32x1xf32, #tpu.memory_space<vmem>>, %arg6: memref<32x512xf32, #tpu.memory_space<vmem>>, %arg7: memref<32x512xbf16, #tpu.memory_space<vmem>>) attributes {dimension_semantics = [#tpu.dimension_semantics<parallel>], iteration_bounds = array<i64: 2>, scalar_prefetch = 0 : i64, scratch_operands = 0 : i64, tpu.core_type = #tpu.core_type<tc>, window_params = [{transform_indices = @transform_0, window_bounds = array<i64: 4, 512>}, {pipeline_mode = #tpu.pipeline_mode<synchronous>, transform_indices = @transform_1, window_bounds = array<i64: 32, 4>}, {pipeline_mode = #tpu.pipeline_mode<synchronous>, transform_indices = @transform_2, window_bounds = array<i64: 32, 1>}, {pipeline_mode = #tpu.pipeline_mode<synchronous>, transform_indices = @transform_3, window_bounds = array<i64: 32, 32>}, {pipeline_mode = #tpu.pipeline_mode<synchronous>, transform_indices = @transform_4, window_bounds = array<i64: 32, 1>}, {transform_indices = @transform_5, window_bounds = array<i64: 32, 512>}, {transform_indices = @transform_6, window_bounds = array<i64: 32, 512>}]} {
    %c0 = arith.constant 0 : index
    %c0_0 = arith.constant 0 : index
    %0 = vector.load %arg2[%c0, %c0_0] : memref<32x4xf32, #tpu.memory_space<vmem>>, vector<32x4xf32>
    %c0_1 = arith.constant 0 : index
    %c0_2 = arith.constant 0 : index
    %1 = vector.load %arg1[%c0_1, %c0_2] : memref<4x512xf32, #tpu.memory_space<vmem>>, vector<4x512xf32>
    %cst = arith.constant dense<0.000000e+00> : vector<32x512xf32>
    %2 = tpu.matmul %0, %1, %cst {dimension_numbers = #tpu.dot_dimension_numbers<[1], [0], [0], [1], [0, 0, 1, 1], [], []>} : vector<32x4xf32>, vector<4x512xf32>, vector<32x512xf32> -> vector<32x512xf32>
    %c0_3 = arith.constant 0 : index
    %c0_4 = arith.constant 0 : index
    %3 = vector.load %arg3[%c0_3, %c0_4] : memref<32x1xf32, #tpu.memory_space<vmem>>, vector<32x1xf32>
    %4 = vector.broadcast %3 : vector<32x1xf32> to vector<32x512xf32>
    %5 = arith.addf %2, %4 : vector<32x512xf32>
    %cst_5 = arith.constant 0.000000e+00 : f32
    %6 = vector.broadcast %cst_5 : f32 to vector<32x512xf32>
    %7 = arith.maximumf %5, %6 : vector<32x512xf32>
    %c0_6 = arith.constant 0 : index
    %c0_7 = arith.constant 0 : index
    %8 = vector.load %arg6[%c0_6, %c0_7] : memref<32x512xf32, #tpu.memory_space<vmem>>, vector<32x512xf32>
    tpu.vector_store %arg6[%c0_6, %c0_7], %7 {strides = array<i32>} : memref<32x512xf32, #tpu.memory_space<vmem>>, vector<32x512xf32>,
    %c0_8 = arith.constant 0 : index
    %c0_9 = arith.constant 0 : index
    %9 = vector.load %arg4[%c0_8, %c0_9] : memref<32x32xf32, #tpu.memory_space<vmem>>, vector<32x32xf32>
    %cst_10 = arith.constant dense<0.000000e+00> : vector<32x512xf32>
    %10 = tpu.matmul %9, %7, %cst_10 {dimension_numbers = #tpu.dot_dimension_numbers<[1], [0], [0], [1], [0, 0, 1, 1], [], []>} : vector<32x32xf32>, vector<32x512xf32>, vector<32x512xf32> -> vector<32x512xf32>
    %c0_11 = arith.constant 0 : index
    %c0_12 = arith.constant 0 : index
    %11 = vector.load %arg5[%c0_11, %c0_12] : memref<32x1xf32, #tpu.memory_space<vmem>>, vector<32x1xf32>
    %12 = vector.broadcast %11 : vector<32x1xf32> to vector<32x512xf32>
    %13 = arith.addf %10, %12 : vector<32x512xf32>
    %cst_13 = arith.constant 0.000000e+00 : f32
    %14 = vector.broadcast %cst_13 : f32 to vector<32x512xf32>
    %15 = arith.maximumf %13, %14 : vector<32x512xf32>
    %16 = arith.truncf %15 : vector<32x512xf32> to vector<32x512xbf16>
    %c0_14 = arith.constant 0 : index
    %c0_15 = arith.constant 0 : index
    %17 = vector.load %arg7[%c0_14, %c0_15] : memref<32x512xbf16, #tpu.memory_space<vmem>>, vector<32x512xbf16>
    tpu.vector_store %arg7[%c0_14, %c0_15], %16 {strides = array<i32>} : memref<32x512xbf16, #tpu.memory_space<vmem>>, vector<32x512xbf16>,
    return
  }
  func.func @transform_0(%arg0: i32) -> (i32, i32) {
    %c0_i32 = arith.constant 0 : i32
    %c0_i32_0 = arith.constant 0 : i32
    return %c0_i32, %arg0 : i32, i32
  }
  func.func @transform_1(%arg0: i32) -> (i32, i32) {
    %c0_i32 = arith.constant 0 : i32
    %c0_i32_0 = arith.constant 0 : i32
    %c0_i32_1 = arith.constant 0 : i32
    return %c0_i32, %c0_i32_0 : i32, i32
  }
  func.func @transform_2(%arg0: i32) -> (i32, i32) {
    %c0_i32 = arith.constant 0 : i32
    %c0_i32_0 = arith.constant 0 : i32
    %c0_i32_1 = arith.constant 0 : i32
    return %c0_i32, %c0_i32_0 : i32, i32
  }
  func.func @transform_3(%arg0: i32) -> (i32, i32) {
    %c0_i32 = arith.constant 0 : i32
    %c0_i32_0 = arith.constant 0 : i32
    %c0_i32_1 = arith.constant 0 : i32
    return %c0_i32, %c0_i32_0 : i32, i32
  }
  func.func @transform_4(%arg0: i32) -> (i32, i32) {
    %c0_i32 = arith.constant 0 : i32
    %c0_i32_0 = arith.constant 0 : i32
    %c0_i32_1 = arith.constant 0 : i32
    return %c0_i32, %c0_i32_0 : i32, i32
  }
  func.func @transform_5(%arg0: i32) -> (i32, i32) {
    %c0_i32 = arith.constant 0 : i32
    %c0_i32_0 = arith.constant 0 : i32
    return %c0_i32, %arg0 : i32, i32
  }
  func.func @transform_6(%arg0: i32) -> (i32, i32) {
    %c0_i32 = arith.constant 0 : i32
    %c0_i32_0 = arith.constant 0 : i32
    return %c0_i32, %arg0 : i32, i32
  }
}

module attributes {stable_mosaic.version = 11 : i64} {
  func.func @round_kernel(%arg0: i32, %arg1: i32, %arg2: memref<32x512xbf16, #tpu.memory_space<vmem>>, %arg3: memref<32x512xf32, #tpu.memory_space<vmem>>, %arg4: memref<512x512xi8, #tpu.memory_space<vmem>>, %arg5: memref<32x32xf32, #tpu.memory_space<vmem>>, %arg6: memref<32x1xf32, #tpu.memory_space<vmem>>, %arg7: memref<32x32xf32, #tpu.memory_space<vmem>>, %arg8: memref<32x1xf32, #tpu.memory_space<vmem>>, %arg9: memref<32x512xf32, #tpu.memory_space<vmem>>, %arg10: memref<32x512xbf16, #tpu.memory_space<vmem>>, %arg11: memref<32x512xf32, #tpu.memory_space<vmem>>) attributes {dimension_semantics = [#tpu.dimension_semantics<parallel>, #tpu.dimension_semantics<arbitrary>], iteration_bounds = array<i64: 2, 2>, scalar_prefetch = 0 : i64, scratch_operands = 1 : i64, tpu.core_type = #tpu.core_type<tc>, window_params = [{transform_indices = @transform_0, window_bounds = array<i64: 32, 512>}, {transform_indices = @transform_1, window_bounds = array<i64: 32, 512>}, {transform_indices = @transform_2, window_bounds = array<i64: 512, 512>}, {pipeline_mode = #tpu.pipeline_mode<synchronous>, transform_indices = @transform_3, window_bounds = array<i64: 32, 32>}, {pipeline_mode = #tpu.pipeline_mode<synchronous>, transform_indices = @transform_4, window_bounds = array<i64: 32, 1>}, {pipeline_mode = #tpu.pipeline_mode<synchronous>, transform_indices = @transform_5, window_bounds = array<i64: 32, 32>}, {pipeline_mode = #tpu.pipeline_mode<synchronous>, transform_indices = @transform_6, window_bounds = array<i64: 32, 1>}, {transform_indices = @transform_7, window_bounds = array<i64: 32, 512>}, {transform_indices = @transform_8, window_bounds = array<i64: 32, 512>}]} {
    %c0_i32 = arith.constant 0 : i32
    %0 = arith.cmpi eq, %arg1, %c0_i32 : i32
    %1 = arith.extui %0 : i1 to i32
    %c0_i32_0 = arith.constant 0 : i32
    %2 = arith.cmpi ne, %1, %c0_i32_0 : i32
    scf.if %2 {
      %cst_9 = arith.constant 0.000000e+00 : f32
      %13 = vector.broadcast %cst_9 : f32 to vector<32x512xf32>
      %c0_10 = arith.constant 0 : index
      %c0_11 = arith.constant 0 : index
      %14 = vector.load %arg11[%c0_10, %c0_11] : memref<32x512xf32, #tpu.memory_space<vmem>>, vector<32x512xf32>
      tpu.vector_store %arg11[%c0_10, %c0_11], %13 {strides = array<i32>} : memref<32x512xf32, #tpu.memory_space<vmem>>, vector<32x512xf32>,
    } else {
    }
    %c0 = arith.constant 0 : index
    %c0_1 = arith.constant 0 : index
    %3 = vector.load %arg11[%c0, %c0_1] : memref<32x512xf32, #tpu.memory_space<vmem>>, vector<32x512xf32>
    %c0_2 = arith.constant 0 : index
    %c0_3 = arith.constant 0 : index
    %4 = vector.load %arg2[%c0_2, %c0_3] : memref<32x512xbf16, #tpu.memory_space<vmem>>, vector<32x512xbf16>
    %c0_4 = arith.constant 0 : index
    %c0_5 = arith.constant 0 : index
    %5 = vector.load %arg4[%c0_4, %c0_5] : memref<512x512xi8, #tpu.memory_space<vmem>>, vector<512x512xi8>
    %6 = arith.sitofp %5 : vector<512x512xi8> to vector<512x512xbf16>
    %cst = arith.constant dense<0.000000e+00> : vector<32x512xf32>
    %7 = tpu.matmul %4, %6, %cst {dimension_numbers = #tpu.dot_dimension_numbers<[1], [0], [0], [1], [0, 0, 1, 1], [], []>} : vector<32x512xbf16>, vector<512x512xbf16>, vector<32x512xf32> -> vector<32x512xf32>
    %8 = arith.addf %3, %7 : vector<32x512xf32>
    %c0_6 = arith.constant 0 : index
    %c0_7 = arith.constant 0 : index
    %9 = vector.load %arg11[%c0_6, %c0_7] : memref<32x512xf32, #tpu.memory_space<vmem>>, vector<32x512xf32>
    tpu.vector_store %arg11[%c0_6, %c0_7], %8 {strides = array<i32>} : memref<32x512xf32, #tpu.memory_space<vmem>>, vector<32x512xf32>,
    %c1_i32 = arith.constant 1 : i32
    %10 = arith.cmpi eq, %arg1, %c1_i32 : i32
    %11 = arith.extui %10 : i1 to i32
    %c0_i32_8 = arith.constant 0 : i32
    %12 = arith.cmpi ne, %11, %c0_i32_8 : i32
    scf.if %12 {
      %c0_9 = arith.constant 0 : index
      %c0_10 = arith.constant 0 : index
      %13 = vector.load %arg5[%c0_9, %c0_10] : memref<32x32xf32, #tpu.memory_space<vmem>>, vector<32x32xf32>
      %c0_11 = arith.constant 0 : index
      %c0_12 = arith.constant 0 : index
      %14 = vector.load %arg11[%c0_11, %c0_12] : memref<32x512xf32, #tpu.memory_space<vmem>>, vector<32x512xf32>
      %cst_13 = arith.constant dense<0.000000e+00> : vector<32x512xf32>
      %15 = tpu.matmul %13, %14, %cst_13 {dimension_numbers = #tpu.dot_dimension_numbers<[1], [0], [0], [1], [0, 0, 1, 1], [], []>} : vector<32x32xf32>, vector<32x512xf32>, vector<32x512xf32> -> vector<32x512xf32>
      %c0_14 = arith.constant 0 : index
      %c0_15 = arith.constant 0 : index
      %16 = vector.load %arg6[%c0_14, %c0_15] : memref<32x1xf32, #tpu.memory_space<vmem>>, vector<32x1xf32>
      %17 = vector.broadcast %16 : vector<32x1xf32> to vector<32x512xf32>
      %18 = arith.addf %15, %17 : vector<32x512xf32>
      %cst_16 = arith.constant 0.000000e+00 : f32
      %19 = vector.broadcast %cst_16 : f32 to vector<32x512xf32>
      %20 = arith.maximumf %18, %19 : vector<32x512xf32>
      %c0_17 = arith.constant 0 : index
      %c0_18 = arith.constant 0 : index
      %21 = vector.load %arg3[%c0_17, %c0_18] : memref<32x512xf32, #tpu.memory_space<vmem>>, vector<32x512xf32>
      %22 = arith.addf %21, %20 : vector<32x512xf32>
      %c0_19 = arith.constant 0 : index
      %c0_20 = arith.constant 0 : index
      %23 = vector.load %arg9[%c0_19, %c0_20] : memref<32x512xf32, #tpu.memory_space<vmem>>, vector<32x512xf32>
      tpu.vector_store %arg9[%c0_19, %c0_20], %22 {strides = array<i32>} : memref<32x512xf32, #tpu.memory_space<vmem>>, vector<32x512xf32>,
      %c0_21 = arith.constant 0 : index
      %c0_22 = arith.constant 0 : index
      %24 = vector.load %arg7[%c0_21, %c0_22] : memref<32x32xf32, #tpu.memory_space<vmem>>, vector<32x32xf32>
      %cst_23 = arith.constant dense<0.000000e+00> : vector<32x512xf32>
      %25 = tpu.matmul %24, %22, %cst_23 {dimension_numbers = #tpu.dot_dimension_numbers<[1], [0], [0], [1], [0, 0, 1, 1], [], []>} : vector<32x32xf32>, vector<32x512xf32>, vector<32x512xf32> -> vector<32x512xf32>
      %c0_24 = arith.constant 0 : index
      %c0_25 = arith.constant 0 : index
      %26 = vector.load %arg8[%c0_24, %c0_25] : memref<32x1xf32, #tpu.memory_space<vmem>>, vector<32x1xf32>
      %27 = vector.broadcast %26 : vector<32x1xf32> to vector<32x512xf32>
      %28 = arith.addf %25, %27 : vector<32x512xf32>
      %cst_26 = arith.constant 0.000000e+00 : f32
      %29 = vector.broadcast %cst_26 : f32 to vector<32x512xf32>
      %30 = arith.maximumf %28, %29 : vector<32x512xf32>
      %31 = arith.truncf %30 : vector<32x512xf32> to vector<32x512xbf16>
      %c0_27 = arith.constant 0 : index
      %c0_28 = arith.constant 0 : index
      %32 = vector.load %arg10[%c0_27, %c0_28] : memref<32x512xbf16, #tpu.memory_space<vmem>>, vector<32x512xbf16>
      tpu.vector_store %arg10[%c0_27, %c0_28], %31 {strides = array<i32>} : memref<32x512xbf16, #tpu.memory_space<vmem>>, vector<32x512xbf16>,
    } else {
    }
    return
  }
  func.func @transform_0(%arg0: i32, %arg1: i32) -> (i32, i32) {
    %c0_i32 = arith.constant 0 : i32
    %c0_i32_0 = arith.constant 0 : i32
    return %c0_i32, %arg1 : i32, i32
  }
  func.func @transform_1(%arg0: i32, %arg1: i32) -> (i32, i32) {
    %c0_i32 = arith.constant 0 : i32
    %c0_i32_0 = arith.constant 0 : i32
    return %c0_i32, %arg0 : i32, i32
  }
  func.func @transform_2(%arg0: i32, %arg1: i32) -> (i32, i32) {
    %c0_i32 = arith.constant 0 : i32
    return %arg1, %arg0 : i32, i32
  }
  func.func @transform_3(%arg0: i32, %arg1: i32) -> (i32, i32) {
    %c0_i32 = arith.constant 0 : i32
    %c0_i32_0 = arith.constant 0 : i32
    %c0_i32_1 = arith.constant 0 : i32
    return %c0_i32, %c0_i32_0 : i32, i32
  }
  func.func @transform_4(%arg0: i32, %arg1: i32) -> (i32, i32) {
    %c0_i32 = arith.constant 0 : i32
    %c0_i32_0 = arith.constant 0 : i32
    %c0_i32_1 = arith.constant 0 : i32
    return %c0_i32, %c0_i32_0 : i32, i32
  }
  func.func @transform_5(%arg0: i32, %arg1: i32) -> (i32, i32) {
    %c0_i32 = arith.constant 0 : i32
    %c0_i32_0 = arith.constant 0 : i32
    %c0_i32_1 = arith.constant 0 : i32
    return %c0_i32, %c0_i32_0 : i32, i32
  }
  func.func @transform_6(%arg0: i32, %arg1: i32) -> (i32, i32) {
    %c0_i32 = arith.constant 0 : i32
    %c0_i32_0 = arith.constant 0 : i32
    %c0_i32_1 = arith.constant 0 : i32
    return %c0_i32, %c0_i32_0 : i32, i32
  }
  func.func @transform_7(%arg0: i32, %arg1: i32) -> (i32, i32) {
    %c0_i32 = arith.constant 0 : i32
    %c0_i32_0 = arith.constant 0 : i32
    return %c0_i32, %arg0 : i32, i32
  }
  func.func @transform_8(%arg0: i32, %arg1: i32) -> (i32, i32) {
    %c0_i32 = arith.constant 0 : i32
    %c0_i32_0 = arith.constant 0 : i32
    return %c0_i32, %arg0 : i32, i32
  }
}

module attributes {stable_mosaic.version = 11 : i64} {
  func.func @round_kernel(%arg0: i32, %arg1: i32, %arg2: memref<32x512xbf16, #tpu.memory_space<vmem>>, %arg3: memref<32x512xf32, #tpu.memory_space<vmem>>, %arg4: memref<512x512xi8, #tpu.memory_space<vmem>>, %arg5: memref<32x32xf32, #tpu.memory_space<vmem>>, %arg6: memref<32x1xf32, #tpu.memory_space<vmem>>, %arg7: memref<32x32xf32, #tpu.memory_space<vmem>>, %arg8: memref<32x1xf32, #tpu.memory_space<vmem>>, %arg9: memref<32x512xf32, #tpu.memory_space<vmem>>, %arg10: memref<32x512xbf16, #tpu.memory_space<vmem>>, %arg11: memref<32x512xf32, #tpu.memory_space<vmem>>) attributes {dimension_semantics = [#tpu.dimension_semantics<parallel>, #tpu.dimension_semantics<arbitrary>], iteration_bounds = array<i64: 2, 2>, scalar_prefetch = 0 : i64, scratch_operands = 1 : i64, tpu.core_type = #tpu.core_type<tc>, window_params = [{transform_indices = @transform_0, window_bounds = array<i64: 32, 512>}, {transform_indices = @transform_1, window_bounds = array<i64: 32, 512>}, {transform_indices = @transform_2, window_bounds = array<i64: 512, 512>}, {pipeline_mode = #tpu.pipeline_mode<synchronous>, transform_indices = @transform_3, window_bounds = array<i64: 32, 32>}, {pipeline_mode = #tpu.pipeline_mode<synchronous>, transform_indices = @transform_4, window_bounds = array<i64: 32, 1>}, {pipeline_mode = #tpu.pipeline_mode<synchronous>, transform_indices = @transform_5, window_bounds = array<i64: 32, 32>}, {pipeline_mode = #tpu.pipeline_mode<synchronous>, transform_indices = @transform_6, window_bounds = array<i64: 32, 1>}, {transform_indices = @transform_7, window_bounds = array<i64: 32, 512>}, {transform_indices = @transform_8, window_bounds = array<i64: 32, 512>}]} {
    %c0_i32 = arith.constant 0 : i32
    %0 = arith.cmpi eq, %arg1, %c0_i32 : i32
    %1 = arith.extui %0 : i1 to i32
    %c0_i32_0 = arith.constant 0 : i32
    %2 = arith.cmpi ne, %1, %c0_i32_0 : i32
    scf.if %2 {
      %cst_9 = arith.constant 0.000000e+00 : f32
      %13 = vector.broadcast %cst_9 : f32 to vector<32x512xf32>
      %c0_10 = arith.constant 0 : index
      %c0_11 = arith.constant 0 : index
      %14 = vector.load %arg11[%c0_10, %c0_11] : memref<32x512xf32, #tpu.memory_space<vmem>>, vector<32x512xf32>
      tpu.vector_store %arg11[%c0_10, %c0_11], %13 {strides = array<i32>} : memref<32x512xf32, #tpu.memory_space<vmem>>, vector<32x512xf32>,
    } else {
    }
    %c0 = arith.constant 0 : index
    %c0_1 = arith.constant 0 : index
    %3 = vector.load %arg11[%c0, %c0_1] : memref<32x512xf32, #tpu.memory_space<vmem>>, vector<32x512xf32>
    %c0_2 = arith.constant 0 : index
    %c0_3 = arith.constant 0 : index
    %4 = vector.load %arg2[%c0_2, %c0_3] : memref<32x512xbf16, #tpu.memory_space<vmem>>, vector<32x512xbf16>
    %c0_4 = arith.constant 0 : index
    %c0_5 = arith.constant 0 : index
    %5 = vector.load %arg4[%c0_4, %c0_5] : memref<512x512xi8, #tpu.memory_space<vmem>>, vector<512x512xi8>
    %6 = arith.sitofp %5 : vector<512x512xi8> to vector<512x512xbf16>
    %cst = arith.constant dense<0.000000e+00> : vector<32x512xf32>
    %7 = tpu.matmul %4, %6, %cst {dimension_numbers = #tpu.dot_dimension_numbers<[1], [0], [0], [1], [0, 0, 1, 1], [], []>} : vector<32x512xbf16>, vector<512x512xbf16>, vector<32x512xf32> -> vector<32x512xf32>
    %8 = arith.addf %3, %7 : vector<32x512xf32>
    %c0_6 = arith.constant 0 : index
    %c0_7 = arith.constant 0 : index
    %9 = vector.load %arg11[%c0_6, %c0_7] : memref<32x512xf32, #tpu.memory_space<vmem>>, vector<32x512xf32>
    tpu.vector_store %arg11[%c0_6, %c0_7], %8 {strides = array<i32>} : memref<32x512xf32, #tpu.memory_space<vmem>>, vector<32x512xf32>,
    %c1_i32 = arith.constant 1 : i32
    %10 = arith.cmpi eq, %arg1, %c1_i32 : i32
    %11 = arith.extui %10 : i1 to i32
    %c0_i32_8 = arith.constant 0 : i32
    %12 = arith.cmpi ne, %11, %c0_i32_8 : i32
    scf.if %12 {
      %c0_9 = arith.constant 0 : index
      %c0_10 = arith.constant 0 : index
      %13 = vector.load %arg5[%c0_9, %c0_10] : memref<32x32xf32, #tpu.memory_space<vmem>>, vector<32x32xf32>
      %c0_11 = arith.constant 0 : index
      %c0_12 = arith.constant 0 : index
      %14 = vector.load %arg11[%c0_11, %c0_12] : memref<32x512xf32, #tpu.memory_space<vmem>>, vector<32x512xf32>
      %cst_13 = arith.constant dense<0.000000e+00> : vector<32x512xf32>
      %15 = tpu.matmul %13, %14, %cst_13 {dimension_numbers = #tpu.dot_dimension_numbers<[1], [0], [0], [1], [0, 0, 1, 1], [], []>} : vector<32x32xf32>, vector<32x512xf32>, vector<32x512xf32> -> vector<32x512xf32>
      %c0_14 = arith.constant 0 : index
      %c0_15 = arith.constant 0 : index
      %16 = vector.load %arg6[%c0_14, %c0_15] : memref<32x1xf32, #tpu.memory_space<vmem>>, vector<32x1xf32>
      %17 = vector.broadcast %16 : vector<32x1xf32> to vector<32x512xf32>
      %18 = arith.addf %15, %17 : vector<32x512xf32>
      %cst_16 = arith.constant 0.000000e+00 : f32
      %19 = vector.broadcast %cst_16 : f32 to vector<32x512xf32>
      %20 = arith.maximumf %18, %19 : vector<32x512xf32>
      %c0_17 = arith.constant 0 : index
      %c0_18 = arith.constant 0 : index
      %21 = vector.load %arg3[%c0_17, %c0_18] : memref<32x512xf32, #tpu.memory_space<vmem>>, vector<32x512xf32>
      %22 = arith.addf %21, %20 : vector<32x512xf32>
      %c0_19 = arith.constant 0 : index
      %c0_20 = arith.constant 0 : index
      %23 = vector.load %arg9[%c0_19, %c0_20] : memref<32x512xf32, #tpu.memory_space<vmem>>, vector<32x512xf32>
      tpu.vector_store %arg9[%c0_19, %c0_20], %22 {strides = array<i32>} : memref<32x512xf32, #tpu.memory_space<vmem>>, vector<32x512xf32>,
      %c0_21 = arith.constant 0 : index
      %c0_22 = arith.constant 0 : index
      %24 = vector.load %arg7[%c0_21, %c0_22] : memref<32x32xf32, #tpu.memory_space<vmem>>, vector<32x32xf32>
      %cst_23 = arith.constant dense<0.000000e+00> : vector<32x512xf32>
      %25 = tpu.matmul %24, %22, %cst_23 {dimension_numbers = #tpu.dot_dimension_numbers<[1], [0], [0], [1], [0, 0, 1, 1], [], []>} : vector<32x32xf32>, vector<32x512xf32>, vector<32x512xf32> -> vector<32x512xf32>
      %c0_24 = arith.constant 0 : index
      %c0_25 = arith.constant 0 : index
      %26 = vector.load %arg8[%c0_24, %c0_25] : memref<32x1xf32, #tpu.memory_space<vmem>>, vector<32x1xf32>
      %27 = vector.broadcast %26 : vector<32x1xf32> to vector<32x512xf32>
      %28 = arith.addf %25, %27 : vector<32x512xf32>
      %cst_26 = arith.constant 0.000000e+00 : f32
      %29 = vector.broadcast %cst_26 : f32 to vector<32x512xf32>
      %30 = arith.maximumf %28, %29 : vector<32x512xf32>
      %31 = arith.truncf %30 : vector<32x512xf32> to vector<32x512xbf16>
      %c0_27 = arith.constant 0 : index
      %c0_28 = arith.constant 0 : index
      %32 = vector.load %arg10[%c0_27, %c0_28] : memref<32x512xbf16, #tpu.memory_space<vmem>>, vector<32x512xbf16>
      tpu.vector_store %arg10[%c0_27, %c0_28], %31 {strides = array<i32>} : memref<32x512xbf16, #tpu.memory_space<vmem>>, vector<32x512xbf16>,
    } else {
    }
    return
  }
  func.func @transform_0(%arg0: i32, %arg1: i32) -> (i32, i32) {
    %c0_i32 = arith.constant 0 : i32
    %c0_i32_0 = arith.constant 0 : i32
    return %c0_i32, %arg1 : i32, i32
  }
  func.func @transform_1(%arg0: i32, %arg1: i32) -> (i32, i32) {
    %c0_i32 = arith.constant 0 : i32
    %c0_i32_0 = arith.constant 0 : i32
    return %c0_i32, %arg0 : i32, i32
  }
  func.func @transform_2(%arg0: i32, %arg1: i32) -> (i32, i32) {
    %c0_i32 = arith.constant 0 : i32
    return %arg1, %arg0 : i32, i32
  }
  func.func @transform_3(%arg0: i32, %arg1: i32) -> (i32, i32) {
    %c0_i32 = arith.constant 0 : i32
    %c0_i32_0 = arith.constant 0 : i32
    %c0_i32_1 = arith.constant 0 : i32
    return %c0_i32, %c0_i32_0 : i32, i32
  }
  func.func @transform_4(%arg0: i32, %arg1: i32) -> (i32, i32) {
    %c0_i32 = arith.constant 0 : i32
    %c0_i32_0 = arith.constant 0 : i32
    %c0_i32_1 = arith.constant 0 : i32
    return %c0_i32, %c0_i32_0 : i32, i32
  }
  func.func @transform_5(%arg0: i32, %arg1: i32) -> (i32, i32) {
    %c0_i32 = arith.constant 0 : i32
    %c0_i32_0 = arith.constant 0 : i32
    %c0_i32_1 = arith.constant 0 : i32
    return %c0_i32, %c0_i32_0 : i32, i32
  }
  func.func @transform_6(%arg0: i32, %arg1: i32) -> (i32, i32) {
    %c0_i32 = arith.constant 0 : i32
    %c0_i32_0 = arith.constant 0 : i32
    %c0_i32_1 = arith.constant 0 : i32
    return %c0_i32, %c0_i32_0 : i32, i32
  }
  func.func @transform_7(%arg0: i32, %arg1: i32) -> (i32, i32) {
    %c0_i32 = arith.constant 0 : i32
    %c0_i32_0 = arith.constant 0 : i32
    return %c0_i32, %arg0 : i32, i32
  }
  func.func @transform_8(%arg0: i32, %arg1: i32) -> (i32, i32) {
    %c0_i32 = arith.constant 0 : i32
    %c0_i32_0 = arith.constant 0 : i32
    return %c0_i32, %arg0 : i32, i32
  }
}

module attributes {stable_mosaic.version = 11 : i64} {
  func.func @pool_out_kernel(%arg0: i32, %arg1: memref<32x512xf32, #tpu.memory_space<vmem>>, %arg2: memref<512x128xbf16, #tpu.memory_space<vmem>>, %arg3: memref<1x32xf32, #tpu.memory_space<vmem>>, %arg4: memref<1x1xf32, #tpu.memory_space<vmem>>, %arg5: memref<1x128xf32, #tpu.memory_space<vmem>>, %arg6: memref<32x128xf32, #tpu.memory_space<vmem>>) attributes {dimension_semantics = [#tpu.dimension_semantics<arbitrary>], iteration_bounds = array<i64: 2>, scalar_prefetch = 0 : i64, scratch_operands = 1 : i64, tpu.core_type = #tpu.core_type<tc>, window_params = [{transform_indices = @transform_0, window_bounds = array<i64: 32, 512>}, {transform_indices = @transform_1, window_bounds = array<i64: 512, 128>}, {pipeline_mode = #tpu.pipeline_mode<synchronous>, transform_indices = @transform_2, window_bounds = array<i64: 1, 32>}, {pipeline_mode = #tpu.pipeline_mode<synchronous>, transform_indices = @transform_3, window_bounds = array<i64: 1, 1>}, {pipeline_mode = #tpu.pipeline_mode<synchronous>, transform_indices = @transform_4, window_bounds = array<i64: 1, 128>}]} {
    %c0_i32 = arith.constant 0 : i32
    %0 = arith.cmpi eq, %arg0, %c0_i32 : i32
    %1 = arith.extui %0 : i1 to i32
    %c0_i32_0 = arith.constant 0 : i32
    %2 = arith.cmpi ne, %1, %c0_i32_0 : i32
    scf.if %2 {
      %cst_9 = arith.constant 0.000000e+00 : f32
      %13 = vector.broadcast %cst_9 : f32 to vector<32x128xf32>
      %c0_10 = arith.constant 0 : index
      %c0_11 = arith.constant 0 : index
      %14 = vector.load %arg6[%c0_10, %c0_11] : memref<32x128xf32, #tpu.memory_space<vmem>>, vector<32x128xf32>
      tpu.vector_store %arg6[%c0_10, %c0_11], %13 {strides = array<i32>} : memref<32x128xf32, #tpu.memory_space<vmem>>, vector<32x128xf32>,
    } else {
    }
    %c0 = arith.constant 0 : index
    %c0_1 = arith.constant 0 : index
    %3 = vector.load %arg6[%c0, %c0_1] : memref<32x128xf32, #tpu.memory_space<vmem>>, vector<32x128xf32>
    %c0_2 = arith.constant 0 : index
    %c0_3 = arith.constant 0 : index
    %4 = vector.load %arg1[%c0_2, %c0_3] : memref<32x512xf32, #tpu.memory_space<vmem>>, vector<32x512xf32>
    %5 = arith.truncf %4 : vector<32x512xf32> to vector<32x512xbf16>
    %c0_4 = arith.constant 0 : index
    %c0_5 = arith.constant 0 : index
    %6 = vector.load %arg2[%c0_4, %c0_5] : memref<512x128xbf16, #tpu.memory_space<vmem>>, vector<512x128xbf16>
    %cst = arith.constant dense<0.000000e+00> : vector<32x128xf32>
    %7 = tpu.matmul %5, %6, %cst {dimension_numbers = #tpu.dot_dimension_numbers<[1], [0], [0], [1], [0, 0, 1, 1], [], []>} : vector<32x512xbf16>, vector<512x128xbf16>, vector<32x128xf32> -> vector<32x128xf32>
    %8 = arith.addf %3, %7 : vector<32x128xf32>
    %c0_6 = arith.constant 0 : index
    %c0_7 = arith.constant 0 : index
    %9 = vector.load %arg6[%c0_6, %c0_7] : memref<32x128xf32, #tpu.memory_space<vmem>>, vector<32x128xf32>
    tpu.vector_store %arg6[%c0_6, %c0_7], %8 {strides = array<i32>} : memref<32x128xf32, #tpu.memory_space<vmem>>, vector<32x128xf32>,
    %c1_i32 = arith.constant 1 : i32
    %10 = arith.cmpi eq, %arg0, %c1_i32 : i32
    %11 = arith.extui %10 : i1 to i32
    %c0_i32_8 = arith.constant 0 : i32
    %12 = arith.cmpi ne, %11, %c0_i32_8 : i32
    scf.if %12 {
      %c0_9 = arith.constant 0 : index
      %c0_10 = arith.constant 0 : index
      %13 = vector.load %arg3[%c0_9, %c0_10] : memref<1x32xf32, #tpu.memory_space<vmem>>, vector<1x32xf32>
      %c0_11 = arith.constant 0 : index
      %c0_12 = arith.constant 0 : index
      %14 = vector.load %arg6[%c0_11, %c0_12] : memref<32x128xf32, #tpu.memory_space<vmem>>, vector<32x128xf32>
      %cst_13 = arith.constant dense<0.000000e+00> : vector<1x128xf32>
      %15 = tpu.matmul %13, %14, %cst_13 {dimension_numbers = #tpu.dot_dimension_numbers<[1], [0], [0], [1], [0, 0, 1, 1], [], []>} : vector<1x32xf32>, vector<32x128xf32>, vector<1x128xf32> -> vector<1x128xf32>
      %c0_14 = arith.constant 0 : index
      %c0_15 = arith.constant 0 : index
      %16 = vector.load %arg4[%c0_14, %c0_15] : memref<1x1xf32, #tpu.memory_space<vmem>>, vector<1x1xf32>
      %17 = vector.broadcast %16 : vector<1x1xf32> to vector<1x128xf32>
      %18 = arith.addf %15, %17 : vector<1x128xf32>
      %c0_16 = arith.constant 0 : index
      %c0_17 = arith.constant 0 : index
      %19 = vector.load %arg5[%c0_16, %c0_17] : memref<1x128xf32, #tpu.memory_space<vmem>>, vector<1x128xf32>
      tpu.vector_store %arg5[%c0_16, %c0_17], %18 {strides = array<i32>} : memref<1x128xf32, #tpu.memory_space<vmem>>, vector<1x128xf32>,
    } else {
    }
    return
  }
  func.func @transform_0(%arg0: i32) -> (i32, i32) {
    %c0_i32 = arith.constant 0 : i32
    %c0_i32_0 = arith.constant 0 : i32
    return %c0_i32, %arg0 : i32, i32
  }
  func.func @transform_1(%arg0: i32) -> (i32, i32) {
    %c0_i32 = arith.constant 0 : i32
    %c0_i32_0 = arith.constant 0 : i32
    return %arg0, %c0_i32 : i32, i32
  }
  func.func @transform_2(%arg0: i32) -> (i32, i32) {
    %c0_i32 = arith.constant 0 : i32
    %c0_i32_0 = arith.constant 0 : i32
    %c0_i32_1 = arith.constant 0 : i32
    return %c0_i32, %c0_i32_0 : i32, i32
  }
  func.func @transform_3(%arg0: i32) -> (i32, i32) {
    %c0_i32 = arith.constant 0 : i32
    %c0_i32_0 = arith.constant 0 : i32
    %c0_i32_1 = arith.constant 0 : i32
    return %c0_i32, %c0_i32_0 : i32, i32
  }
  func.func @transform_4(%arg0: i32) -> (i32, i32) {
    %c0_i32 = arith.constant 0 : i32
    %c0_i32_0 = arith.constant 0 : i32
    %c0_i32_1 = arith.constant 0 : i32
    return %c0_i32, %c0_i32_0 : i32, i32
  }
}

</mosaic_0001>

<llo_original>
// kernel: message_passing_nn.5
$region0: #{message_passing_nn.5}
  #allocation0 [shape = 'u32[]', space=smem, size = 0x4, offset = 0x4, fixed_abs, tag = 'smem constant byte address 0x4 - core index']
  #allocation1 [shape = 'u32[144,128]{1,0:T(1,128)}', space=vmem, size = 0x12000, scoped, tag = 'internal scratch']
  %s0 = inlined_call_operand.vmem [shape: f32[4,1024], index: 0, kind: input, shape index: {}]
  %s1 = inlined_call_operand.vmem [shape: f32[32,4], index: 1, kind: input, shape index: {}]
  %s2 = inlined_call_operand.vmem [shape: f32[32,1], index: 2, kind: input, shape index: {}]
  %s3 = inlined_call_operand.vmem [shape: f32[32,32], index: 3, kind: input, shape index: {}]
  %s4 = inlined_call_operand.vmem [shape: f32[32,1], index: 4, kind: input, shape index: {}]
  %s5 = inlined_call_operand.vmem [shape: f32[32,1024], index: 5, kind: output, shape index: {0}]
  %s6 = inlined_call_operand.vmem [shape: bf16[32,1024], index: 6, kind: output, shape index: {1}]
  %7 = xla_tuple %s5, %s6
  %s8 = sld [smem:[#allocation0]]
  $region99: #{message_passing_nn.5} parent=0
    _
  %s10 = ssub.s32 1, %s8
  %s11 = scalar_select 0, %s10, %s8
  $region1: #{message_passing_nn.5} parent=0
    #allocation2 [shape = 'u8[131072]{0}', space=vmem, size = 0x20000, scoped, tag = 'output window, operand 0']
    #allocation3 [shape = 'u8[65536]{0}', space=vmem, size = 0x10000, scoped, tag = 'output window, operand 1']
    loop: start=0, step=1, limit=4
    $region2: #{message_passing_nn.5} parent=1 // loop_pre_header
      _
    $region3: #{message_passing_nn.5} parent=1 // loop_header
      %s13 = sphi 0, %s17
      %p14 = scmp.ge.s32.totalorder %s13, 4
      %s23 = sphi 0, %s25
      %s26 = sphi 0, %s23
      %s27 = sphi 0, %s26
      %s43 = sphi 0, %s27
      %s47 = sphi 0, %s47
      %s49 = sphi 0, %s47
      %s50 = sphi 0, %s49
      %s64 = sphi 0, %s50
      %s68 = sphi 0, %s68
      %s70 = sphi 0, %s68
      %s71 = sphi 0, %s70
      %s85 = sphi 0, %s71
      %s89 = sphi 0, %s89
      %s91 = sphi 0, %s89
      %s92 = sphi 0, %s91
      %s106 = sphi 0, %s92
      %s110 = sphi 0, %s110
      %s112 = sphi 0, %s110
      %s113 = sphi 0, %s112
      %s127 = sphi 0, %s113
      %s133 = sphi 0, %s135
      %s136 = sphi 0, %s133
      %s137 = sphi 0, %s136
      %s153 = sphi 0, %s137
      %s159 = sphi 0, %s161
      %s162 = sphi 0, %s159
      %s163 = sphi 0, %s162
      %s179 = sphi 0, %s163
    $region4: #{message_passing_nn.5} parent=1 // loop_header_branch
      %16 = sbr.rel (%p14) target = $region8
    $region5: #{message_passing_nn.5} parent=1 // loop_body
      %s18 = ssub.s32 %s13, 1
      %s19 = ssub.s32 %s13, 2
      %s20 = sadd.s32 %s13, 1
      %s21 = ssub.s32 %s13, %s20
      %p22 = scmp.eq.s32.totalorder %s21, 0
      %s24 = sadd.s32 %s23, 1
      %s25 = scalar_select %p22, %s23, %s24
      %p28 = pneg %p22
      %p29 = scmp.eq.s32.totalorder %s13, 1
      %p30 = por %p28, %p29
      %p31 = scmp.ne.s32.totalorder %s23, %s26
      %p32 = scmp.eq.s32.totalorder %s13, 0
      %p33 = por %p31, %p32
      %p34 = scmp.ne.s32.totalorder %s23, %s26
      %p35 = scmp.eq.s32.totalorder %s18, 1
      %p36 = por %p34, %p35
      %p37 = scmp.ne.s32.totalorder %s26, %s27
      %p38 = scmp.eq.s32.totalorder %s18, 0
      %p39 = por %p37, %p38
      %p40 = scmp.ne.s32.totalorder %s26, %s27
      %p41 = scmp.eq.s32.totalorder %s19, 1
      %p42 = por %p40, %p41
      %p44 = scmp.ne.s32.totalorder %s27, %s43
      %p45 = scmp.eq.s32.totalorder %s19, 0
      %p46 = por %p44, %p45
      %s48 = sadd.s32 %s47, 1
      %p51 = scmp.eq.s32.totalorder %s13, 1
      %p52 = scmp.ne.s32.totalorder %s47, %s49
      %p53 = scmp.eq.s32.totalorder %s13, 0
      %p54 = por %p52, %p53
      %p55 = scmp.ne.s32.totalorder %s47, %s49
      %p56 = scmp.eq.s32.totalorder %s18, 1
      %p57 = por %p55, %p56
      %p58 = scmp.ne.s32.totalorder %s49, %s50
      %p59 = scmp.eq.s32.totalorder %s18, 0
      %p60 = por %p58, %p59
      %p61 = scmp.ne.s32.totalorder %s49, %s50
      %p62 = scmp.eq.s32.totalorder %s19, 1
      %p63 = por %p61, %p62
      %p65 = scmp.ne.s32.totalorder %s50, %s64
      %p66 = scmp.eq.s32.totalorder %s19, 0
      %p67 = por %p65, %p66
      %s69 = sadd.s32 %s68, 1
      %p72 = scmp.eq.s32.totalorder %s13, 1
      %p73 = scmp.ne.s32.totalorder %s68, %s70
      %p74 = scmp.eq.s32.totalorder %s13, 0
      %p75 = por %p73, %p74
      %p76 = scmp.ne.s32.totalorder %s68, %s70
      %p77 = scmp.eq.s32.totalorder %s18, 1
      %p78 = por %p76, %p77
      %p79 = scmp.ne.s32.totalorder %s70, %s71
      %p80 = scmp.eq.s32.totalorder %s18, 0
      %p81 = por %p79, %p80
      %p82 = scmp.ne.s32.totalorder %s70, %s71
      %p83 = scmp.eq.s32.totalorder %s19, 1
      %p84 = por %p82, %p83
      %p86 = scmp.ne.s32.totalorder %s71, %s85
      %p87 = scmp.eq.s32.totalorder %s19, 0
      %p88 = por %p86, %p87
      %s90 = sadd.s32 %s89, 1
      %p93 = scmp.eq.s32.totalorder %s13, 1
      %p94 = scmp.ne.s32.totalorder %s89, %s91
      %p95 = scmp.eq.s32.totalorder %s13, 0
      %p96 = por %p94, %p95
      %p97 = scmp.ne.s32.totalorder %s89, %s91
      %p98 = scmp.eq.s32.totalorder %s18, 1
      %p99 = por %p97, %p98
      %p100 = scmp.ne.s32.totalorder %s91, %s92
      %p101 = scmp.eq.s32.totalorder %s18, 0
      %p102 = por %p100, %p101
      %p103 = scmp.ne.s32.totalorder %s91, %s92
      %p104 = scmp.eq.s32.totalorder %s19, 1
      %p105 = por %p103, %p104
      %p107 = scmp.ne.s32.totalorder %s92, %s106
      %p108 = scmp.eq.s32.totalorder %s19, 0
      %p109 = por %p107, %p108
      %s111 = sadd.s32 %s110, 1
      %p114 = scmp.eq.s32.totalorder %s13, 1
      %p115 = scmp.ne.s32.totalorder %s110, %s112
      %p116 = scmp.eq.s32.totalorder %s13, 0
      %p117 = por %p115, %p116
      %p118 = scmp.ne.s32.totalorder %s110, %s112
      %p119 = scmp.eq.s32.totalorder %s18, 1
      %p120 = por %p118, %p119
      %p121 = scmp.ne.s32.totalorder %s112, %s113
      %p122 = scmp.eq.s32.totalorder %s18, 0
      %p123 = por %p121, %p122
      %p124 = scmp.ne.s32.totalorder %s112, %s113
      %p125 = scmp.eq.s32.totalorder %s19, 1
      %p126 = por %p124, %p125
      %p128 = scmp.ne.s32.totalorder %s113, %s127
      %p129 = scmp.eq.s32.totalorder %s19, 0
      %p130 = por %p128, %p129
      %s131 = ssub.s32 %s13, %s20
      %p132 = scmp.eq.s32.totalorder %s131, 0
      %s134 = sadd.s32 %s133, 1
      %s135 = scalar_select %p132, %s133, %s134
      %p138 = pneg %p132
      %p139 = scmp.eq.s32.totalorder %s13, 1
      %p140 = por %p138, %p139
      %p141 = scmp.ne.s32.totalorder %s133, %s136
      %p142 = scmp.eq.s32.totalorder %s13, 0
      %p143 = por %p141, %p142
      %p144 = scmp.ne.s32.totalorder %s133, %s136
      %p145 = scmp.eq.s32.totalorder %s18, 1
      %p146 = por %p144, %p145
      %p147 = scmp.ne.s32.totalorder %s136, %s137
      %p148 = scmp.eq.s32.totalorder %s18, 0
      %p149 = por %p147, %p148
      %p150 = scmp.ne.s32.totalorder %s136, %s137
      %p151 = scmp.eq.s32.totalorder %s19, 1
      %p152 = por %p150, %p151
      %p154 = scmp.ne.s32.totalorder %s137, %s153
      %p155 = scmp.eq.s32.totalorder %s19, 0
      %p156 = por %p154, %p155
      %s157 = ssub.s32 %s13, %s20
      %p158 = scmp.eq.s32.totalorder %s157, 0
      %s160 = sadd.s32 %s159, 1
      %s161 = scalar_select %p158, %s159, %s160
      %p164 = pneg %p158
      %p165 = scmp.eq.s32.totalorder %s13, 1
      %p166 = por %p164, %p165
      %p167 = scmp.ne.s32.totalorder %s159, %s162
      %p168 = scmp.eq.s32.totalorder %s13, 0
      %p169 = por %p167, %p168
      %p170 = scmp.ne.s32.totalorder %s159, %s162
      %p171 = scmp.eq.s32.totalorder %s18, 1
      %p172 = por %p170, %p171
      %p173 = scmp.ne.s32.totalorder %s162, %s163
      %p174 = scmp.eq.s32.totalorder %s18, 0
      %p175 = por %p173, %p174
      %p176 = scmp.ne.s32.totalorder %s162, %s163
      %p177 = scmp.eq.s32.totalorder %s19, 1
      %p178 = por %p176, %p177
      %p180 = scmp.ne.s32.totalorder %s163, %s179
      %p181 = scmp.eq.s32.totalorder %s19, 0
      %p182 = por %p180, %p181
      %p183 = scmp.le.s32.totalorder 1, %s13
      %p184 = scmp.lt.s32.totalorder %s13, 3
      %p185 = pnand %p183, %p184
      %p186 = pneg %p185
      // Predicated region
      $region9: #{message_passing_nn.5} parent=5 // pred_check
        _
      $region10: #{message_passing_nn.5} parent=5 // pred_check_branch
        %188 = sbr.rel (%p185) target = $region12
      $region11: #{message_passing_nn.5} parent=5 // pred_region
        %s189 = ssub.s32 %s13, 1
        // Predicated region
        $region13: #{message_passing_nn.5} parent=11 // pred_check
          %p190 = pneg %p60
        $region14: #{message_passing_nn.5} parent=11 // pred_check_branch
          %192 = sbr.rel (%p190) target = $region16
        $region15: #{message_passing_nn.5} parent=11 // pred_region
          _
        $region16: #{message_passing_nn.5} parent=11 // pred_fallthru
          _
        // Predicated region
        $region17: #{message_passing_nn.5} parent=11 // pred_check
          %p193 = pneg %p81
        $region18: #{message_passing_nn.5} parent=11 // pred_check_branch
          %195 = sbr.rel (%p193) target = $region20
        $region19: #{message_passing_nn.5} parent=11 // pred_region
          _
        $region20: #{message_passing_nn.5} parent=11 // pred_fallthru
          _
        // Predicated region
        $region21: #{message_passing_nn.5} parent=11 // pred_check
          %p196 = pneg %p102
        $region22: #{message_passing_nn.5} parent=11 // pred_check_branch
          %198 = sbr.rel (%p196) target = $region24
        $region23: #{message_passing_nn.5} parent=11 // pred_region
          _
        $region24: #{message_passing_nn.5} parent=11 // pred_fallthru
          _
        // Predicated region
        $region25: #{message_passing_nn.5} parent=11 // pred_check
          %p199 = pneg %p123
        $region26: #{message_passing_nn.5} parent=11 // pred_check_branch
          %201 = sbr.rel (%p199) target = $region28
        $region27: #{message_passing_nn.5} parent=11 // pred_region
          _
        $region28: #{message_passing_nn.5} parent=11 // pred_fallthru
          _
      $region12: #{message_passing_nn.5} parent=5 // pred_fallthru
        _
      %p202 = scmp.lt.s32.totalorder %s13, 2
      // Predicated region
      $region29: #{message_passing_nn.5} parent=5 // pred_check
        %p203 = pneg %p202
      $region30: #{message_passing_nn.5} parent=5 // pred_check_branch
        %205 = sbr.rel (%p203) target = $region32
      $region31: #{message_passing_nn.5} parent=5 // pred_region
        // Predicated region
        $region33: #{message_passing_nn.5} parent=31 // pred_check
          %p206 = pneg %p33
        $region34: #{message_passing_nn.5} parent=31 // pred_check_branch
          %208 = sbr.rel (%p206) target = $region36
        $region35: #{message_passing_nn.5} parent=31 // pred_region
          %s209 = smul.u32 4, %s13
          %p210 = scmp.lt.s32.totalorder %s209, 7
          %s211 = scalar_select %p210, %s209, 7
          %s212 = smul.addr %s211, 4
          %s213 = scalar_lea.vmem %s0, %s212
          %s214 = smul.u32 4, %s13
        $region36: #{message_passing_nn.5} parent=31 // pred_fallthru
          _
      $region32: #{message_passing_nn.5} parent=5 // pred_fallthru
        _
      %p215 = scmp.le.s32.totalorder 1, %s13
      %p216 = scmp.lt.s32.totalorder %s13, 3
      %p217 = pnand %p215, %p216
      %p218 = pneg %p217
      // Predicated region
      $region37: #{message_passing_nn.5} parent=5 // pred_check
        _
      $region38: #{message_passing_nn.5} parent=5 // pred_check_branch
        %220 = sbr.rel (%p217) target = $region40
      $region39: #{message_passing_nn.5} parent=5 // pred_region
        %s221 = ssub.s32 %s13, 1
        %s222 = smul.u32 4, %s18
        %p223 = scmp.lt.s32.totalorder %s222, 7
        %s224 = scalar_select %p223, %s222, 7
        %s225 = smul.addr %s224, 4
        %s226 = scalar_lea.vmem %s0, %s225
        %p227 = pneg %p39
        %p228 = pneg %p36
        %p229 = pneg %p60
        %p230 = pneg %p57
        %p231 = pneg %p81
        %p232 = pneg %p78
        %p233 = pneg %p102
        %p234 = pneg %p99
        %p235 = pneg %p123
        %p236 = pneg %p120
        %p237 = pneg %p149
        %p238 = pneg %p146
        %s239 = sand.u32 %s136, 1
        %s240 = sand.u32 %s136, 1
        %s241 = smul.addr %s240, 128
        %s242 = scalar_lea.vmem [#allocation2], %s241
        %p243 = pneg %p175
        %p244 = pneg %p172
        %s245 = sand.u32 %s162, 1
        %s246 = sand.u32 %s162, 1
        %s247 = smul.addr %s246, 64
        %s248 = scalar_lea.vmem [#allocation3], %s247
        %s249 = smul.u32 4, %s18
        %p250 = scmp.lt.s32.totalorder %s249, 7
        %s251 = scalar_select %p250, %s249, 7
        %s252 = smul.addr %s251, 4
        %s253 = scalar_lea.vmem %s0, %s252
        %s254 = smul.u32 4, %s18
        %s255 = smul.u32 4, %s18
        %s256 = smul.u32 4, %s18
        %v257 = vld [vmem:[%s1] sm:$0xff]
        %v258 = vld [vmem:[%s1 + $0x8] sm:$0xff]
        %v259 = vld [vmem:[%s1 + $0x10] sm:$0xff]
        %v260 = vld [vmem:[%s1 + $0x18] sm:$0xff]
        %v261 = vld [vmem:[%s253] sm:$0xff]
        %v262 = vld [vmem:[%s253 + $0x8] sm:$0xff]
        %v263 = vld [vmem:[%s2] sm:$0xff]
        %v264 = vld [vmem:[%s2 + $0x8] sm:$0xff]
        %v265 = vld [vmem:[%s2 + $0x10] sm:$0xff]
        %v266 = vld [vmem:[%s2 + $0x18] sm:$0xff]
        %268 = vset.pattern.permute.xlu0 0
        %269 = vperm.xlu0 %268, %v263
        %v270 = vpop.permute.xlu0 %269
        %273 = vset.pattern.permute.xlu0 0
        %274 = vperm.xlu0 %273, %v264
        %v275 = vpop.permute.xlu0 %274
        %278 = vset.pattern.permute.xlu0 0
        %279 = vperm.xlu0 %278, %v265
        %v280 = vpop.permute.xlu0 %279
        %283 = vset.pattern.permute.xlu0 0
        %284 = vperm.xlu0 %283, %v266
        %v285 = vpop.permute.xlu0 %284
        %v289 = vcombine.high %v261, %v261
        %v290 = vcombine.high %v262, %v262
        %vm291 = vcmask 31744
        %v293 = vsel %vm291, %v257, 0
        %v296 = vsel %vm291, %v258, 0
        %v299 = vsel %vm291, %v259, 0
        %v302 = vsel %vm291, %v260, 0
        %vm304 = vcmask 1043456
        %v305 = vsel %vm304, %v261, 0
        %v307 = vsel %vm304, %v289, 0
        %v309 = vsel %vm304, %v262, 0
        %v311 = vsel %vm304, %v290, 0
        %313 = vmatprep.subr.mxu0 %v307
        %314 = vmatpush1.msra.mxu0 %v305
        %315 = vmatprep.subr.mxu0 0.0
        %316 = vmatpush1.msra.mxu0 0.0
        %317 = vmatprep.subr.mxu0 0.0
        %318 = vmatpush1.msra.mxu0 0.0
        %319 = vmatprep.subr.mxu0 0.0
        %320 = vmatpush1.msra.mxu0 0.0
        %321 = vmatprep.subr.mxu0 0.0
        %322 = vmatpush1.msra.mxu0 0.0
        %323 = vmatprep.subr.mxu0 0.0
        %324 = vmatpush1.msra.mxu0 0.0
        %325 = vmatprep.subr.mxu0 0.0
        %326 = vmatpush1.msra.mxu0 0.0
        %327 = vmatprep.subr.mxu0 0.0
        %328 = vmatpush1.msra.mxu0 0.0
        %329 = vmatprep.subr.mxu0 0.0
        %330 = vmatpush1.msra.mxu0 0.0
        %331 = vmatprep.subr.mxu0 0.0
        %332 = vmatpush1.msra.mxu0 0.0
        %333 = vmatprep.subr.mxu0 0.0
        %334 = vmatpush1.msra.mxu0 0.0
        %335 = vmatprep.subr.mxu0 0.0
        %336 = vmatpush1.msra.mxu0 0.0
        %337 = vmatprep.subr.mxu0 0.0
        %338 = vmatpush1.msra.mxu0 0.0
        %339 = vmatprep.subr.mxu0 0.0
        %340 = vmatpush1.msra.mxu0 0.0
        %341 = vmatprep.subr.mxu0 0.0
        %342 = vmatpush1.msra.mxu0 0.0
        %343 = vmatprep.subr.mxu0 0.0
        %344 = vmatpush1.msra.mxu0 0.0
        %345 = vmatprep.subr.mxu0 0.0
        %346 = vmatpush1.msra.mxu0 0.0
        %347 = vmatprep.subr.mxu0 0.0
        %348 = vmatpush1.msra.mxu0 0.0
        %349 = vmatprep.subr.mxu0 0.0
        %350 = vmatpush1.msra.mxu0 0.0
        %351 = vmatprep.subr.mxu0 0.0
        %352 = vmatpush1.msra.mxu0 0.0
        %353 = vmatprep.subr.mxu0 0.0
        %354 = vmatpush1.msra.mxu0 0.0
        %355 = vmatprep.subr.mxu0 0.0
        %356 = vmatpush1.msra.mxu0 0.0
        %357 = vmatprep.subr.mxu0 0.0
        %358 = vmatpush1.msra.mxu0 0.0
        %359 = vmatprep.subr.mxu0 0.0
        %360 = vmatpush1.msra.mxu0 0.0
        %361 = vmatprep.subr.mxu0 0.0
        %362 = vmatpush1.msra.mxu0 0.0
        %363 = vmatprep.subr.mxu0 0.0
        %364 = vmatpush1.msra.mxu0 0.0
        %365 = vmatprep.subr.mxu0 0.0
        %366 = vmatpush1.msra.mxu0 0.0
        %367 = vmatprep.subr.mxu0 0.0
        %368 = vmatpush1.msra.mxu0 0.0
        %369 = vmatprep.subr.mxu0 0.0
        %370 = vmatpush1.msra.mxu0 0.0
        %371 = vmatprep.subr.mxu0 0.0
        %372 = vmatpush1.msra.mxu0 0.0
        %373 = vmatprep.subr.mxu0 0.0
        %374 = vmatpush1.msra.mxu0 0.0
        %375 = vmatprep.subr.mxu0 0.0
        %376 = vmatpush1.msra.mxu0 0.0
        %377 = vmatprep.mubr.f32.mxu0 0.0
        %378 = vmatmul.mubr.f32.gmra.mrb[0].mxu0 %v293
        %v379 = vpop.f32.mrb[0].mxu0
        %v380 = vadd.f32 %v270, %v379
        %v381 = vpop.f32.mrb[0].mxu0
        %v382 = vadd.f32 %v270, %v381
        %383 = vmatprep.mubr.f32.mxu0 0.0
        %384 = vmatmul.mubr.f32.gmra.mrb[0].mxu0 %v296
        %v385 = vpop.f32.mrb[0].mxu0
        %v386 = vadd.f32 %v275, %v385
        %v387 = vpop.f32.mrb[0].mxu0
        %v388 = vadd.f32 %v275, %v387
        %389 = vmatprep.mubr.f32.mxu0 0.0
        %390 = vmatmul.mubr.f32.gmra.mrb[0].mxu0 %v299
        %v391 = vpop.f32.mrb[0].mxu0
        %v392 = vadd.f32 %v280, %v391
        %v393 = vpop.f32.mrb[0].mxu0
        %v394 = vadd.f32 %v280, %v393
        %395 = vmatprep.mubr.f32.mxu0 0.0
        %396 = vmatmul.mubr.f32.gmra.mrb[0].mxu0 %v302
        %v397 = vpop.f32.mrb[0].mxu0
        %v398 = vadd.f32 %v285, %v397
        %v399 = vpop.f32.mrb[0].mxu0
        %v400 = vadd.f32 %v285, %v399
        %401 = vdwg.mxu0
        %402 = vmatprep.subr.mxu0 %v311
        %403 = vmatpush1.msra.mxu0 %v309
        %404 = vmatprep.subr.mxu0 0.0
        %405 = vmatpush1.msra.mxu0 0.0
        %406 = vmatprep.subr.mxu0 0.0
        %407 = vmatpush1.msra.mxu0 0.0
        %408 = vmatprep.subr.mxu0 0.0
        %409 = vmatpush1.msra.mxu0 0.0
        %410 = vmatprep.subr.mxu0 0.0
        %411 = vmatpush1.msra.mxu0 0.0
        %412 = vmatprep.subr.mxu0 0.0
        %413 = vmatpush1.msra.mxu0 0.0
        %414 = vmatprep.subr.mxu0 0.0
        %415 = vmatpush1.msra.mxu0 0.0
        %416 = vmatprep.subr.mxu0 0.0
        %417 = vmatpush1.msra.mxu0 0.0
        %418 = vmatprep.subr.mxu0 0.0
        %419 = vmatpush1.msra.mxu0 0.0
        %420 = vmatprep.subr.mxu0 0.0
        %421 = vmatpush1.msra.mxu0 0.0
        %422 = vmatprep.subr.mxu0 0.0
        %423 = vmatpush1.msra.mxu0 0.0
        %424 = vmatprep.subr.mxu0 0.0
        %425 = vmatpush1.msra.mxu0 0.0
        %426 = vmatprep.subr.mxu0 0.0
        %427 = vmatpush1.msra.mxu0 0.0
        %428 = vmatprep.subr.mxu0 0.0
        %429 = vmatpush1.msra.mxu0 0.0
        %430 = vmatprep.subr.mxu0 0.0
        %431 = vmatpush1.msra.mxu0 0.0
        %432 = vmatprep.subr.mxu0 0.0
        %433 = vmatpush1.msra.mxu0 0.0
        %434 = vmatprep.subr.mxu0 0.0
        %435 = vmatpush1.msra.mxu0 0.0
        %436 = vmatprep.subr.mxu0 0.0
        %437 = vmatpush1.msra.mxu0 0.0
        %438 = vmatprep.subr.mxu0 0.0
        %439 = vmatpush1.msra.mxu0 0.0
        %440 = vmatprep.subr.mxu0 0.0
        %441 = vmatpush1.msra.mxu0 0.0
        %442 = vmatprep.subr.mxu0 0.0
        %443 = vmatpush1.msra.mxu0 0.0
        %444 = vmatprep.subr.mxu0 0.0
        %445 = vmatpush1.msra.mxu0 0.0
        %446 = vmatprep.subr.mxu0 0.0
        %447 = vmatpush1.msra.mxu0 0.0
        %448 = vmatprep.subr.mxu0 0.0
        %449 = vmatpush1.msra.mxu0 0.0
        %450 = vmatprep.subr.mxu0 0.0
        %451 = vmatpush1.msra.mxu0 0.0
        %452 = vmatprep.subr.mxu0 0.0
        %453 = vmatpush1.msra.mxu0 0.0
        %454 = vmatprep.subr.mxu0 0.0
        %455 = vmatpush1.msra.mxu0 0.0
        %456 = vmatprep.subr.mxu0 0.0
        %457 = vmatpush1.msra.mxu0 0.0
        %458 = vmatprep.subr.mxu0 0.0
        %459 = vmatpush1.msra.mxu0 0.0
        %460 = vmatprep.subr.mxu0 0.0
        %461 = vmatpush1.msra.mxu0 0.0
        %462 = vmatprep.subr.mxu0 0.0
        %463 = vmatpush1.msra.mxu0 0.0
        %464 = vmatprep.subr.mxu0 0.0
        %465 = vmatpush1.msra.mxu0 0.0
        %466 = vmatprep.mubr.f32.mxu0 0.0
        %467 = vmatmul.mubr.f32.gmra.mrb[0].mxu0 %v293
        %v468 = vpop.f32.mrb[0].mxu0
        %v469 = vadd.f32 %v270, %v468
        %v470 = vpop.f32.mrb[0].mxu0
        %v471 = vadd.f32 %v270, %v470
        %472 = vmatprep.mubr.f32.mxu0 0.0
        %473 = vmatmul.mubr.f32.gmra.mrb[0].mxu0 %v296
        %v474 = vpop.f32.mrb[0].mxu0
        %v475 = vadd.f32 %v275, %v474
        %v476 = vpop.f32.mrb[0].mxu0
        %v477 = vadd.f32 %v275, %v476
        %478 = vmatprep.mubr.f32.mxu0 0.0
        %479 = vmatmul.mubr.f32.gmra.mrb[0].mxu0 %v299
        %v480 = vpop.f32.mrb[0].mxu0
        %v481 = vadd.f32 %v280, %v480
        %v482 = vpop.f32.mrb[0].mxu0
        %v483 = vadd.f32 %v280, %v482
        %484 = vmatprep.mubr.f32.mxu0 0.0
        %485 = vmatmul.mubr.f32.gmra.mrb[0].mxu0 %v302
        %v486 = vpop.f32.mrb[0].mxu0
        %v487 = vadd.f32 %v285, %v486
        %v488 = vpop.f32.mrb[0].mxu0
        %v489 = vadd.f32 %v285, %v488
        %490 = vdwg.mxu0
        %v491 = vmax.f32 %v380, 0.0
        %v492 = vmax.f32 %v382, 0.0
        %v493 = vmax.f32 %v469, 0.0
        %v494 = vmax.f32 %v471, 0.0
        %v495 = vmax.f32 %v386, 0.0
        %v496 = vmax.f32 %v388, 0.0
        %v497 = vmax.f32 %v475, 0.0
        %v498 = vmax.f32 %v477, 0.0
        %v499 = vmax.f32 %v392, 0.0
        %v500 = vmax.f32 %v394, 0.0
        %v501 = vmax.f32 %v481, 0.0
        %v502 = vmax.f32 %v483, 0.0
        %v503 = vmax.f32 %v398, 0.0
        %v504 = vmax.f32 %v400, 0.0
        %v505 = vmax.f32 %v487, 0.0
        %v506 = vmax.f32 %v489, 0.0
        %507 = vst [vmem:[%s242] sm:$0xff] %v491
        %508 = vst [vmem:[%s242 + $0x8] sm:$0xff] %v492
        %509 = vst [vmem:[%s242 + $0x10] sm:$0xff] %v493
        %510 = vst [vmem:[%s242 + $0x18] sm:$0xff] %v494
        %511 = vst [vmem:[%s242 + $0x20] sm:$0xff] %v495
        %512 = vst [vmem:[%s242 + $0x28] sm:$0xff] %v496
        %513 = vst [vmem:[%s242 + $0x30] sm:$0xff] %v497
        %514 = vst [vmem:[%s242 + $0x38] sm:$0xff] %v498
        %515 = vst [vmem:[%s242 + $0x40] sm:$0xff] %v499
        %516 = vst [vmem:[%s242 + $0x48] sm:$0xff] %v500
        %517 = vst [vmem:[%s242 + $0x50] sm:$0xff] %v501
        %518 = vst [vmem:[%s242 + $0x58] sm:$0xff] %v502
        %519 = vst [vmem:[%s242 + $0x60] sm:$0xff] %v503
        %520 = vst [vmem:[%s242 + $0x68] sm:$0xff] %v504
        %521 = vst [vmem:[%s242 + $0x70] sm:$0xff] %v505
        %522 = vst [vmem:[%s242 + $0x78] sm:$0xff] %v506
        %v523 = vld [vmem:[%s3] sm:$0xff]
        %v524 = vld [vmem:[%s3 + $0x8] sm:$0xff]
        %v525 = vld [vmem:[%s3 + $0x10] sm:$0xff]
        %v526 = vld [vmem:[%s3 + $0x18] sm:$0xff]
        %v527 = vld [vmem:[%s4] sm:$0xff]
        %v528 = vld [vmem:[%s4 + $0x8] sm:$0xff]
        %v529 = vld [vmem:[%s4 + $0x10] sm:$0xff]
        %v530 = vld [vmem:[%s4 + $0x18] sm:$0xff]
        %532 = vset.pattern.permute.xlu0 0
        %533 = vperm.xlu0 %532, %v527
        %v534 = vpop.permute.xlu0 %533
        %537 = vset.pattern.permute.xlu0 0
        %538 = vperm.xlu0 %537, %v528
        %v539 = vpop.permute.xlu0 %538
        %542 = vset.pattern.permute.xlu0 0
        %543 = vperm.xlu0 %542, %v529
        %v544 = vpop.permute.xlu0 %543
        %547 = vset.pattern.permute.xlu0 0
        %548 = vperm.xlu0 %547, %v530
        %v549 = vpop.permute.xlu0 %548
        %vm551 = vcmask 261120
        %v553 = vsel %vm551, %v523, 0
        %v556 = vsel %vm551, %v524, 0
        %v559 = vsel %vm551, %v525, 0
        %v562 = vsel %vm551, %v526, 0
        %564 = vmatprep.subr.mxu0 %v492
        %565 = vmatpush1.msra.mxu0 %v491
        %566 = vmatprep.subr.mxu0 %v496
        %567 = vmatpush1.msra.mxu0 %v495
        %568 = vmatprep.subr.mxu0 %v500
        %569 = vmatpush1.msra.mxu0 %v499
        %570 = vmatprep.subr.mxu0 %v504
        %571 = vmatpush1.msra.mxu0 %v503
        %572 = vmatprep.subr.mxu0 0.0
        %573 = vmatpush1.msra.mxu0 0.0
        %574 = vmatprep.subr.mxu0 0.0
        %575 = vmatpush1.msra.mxu0 0.0
        %576 = vmatprep.subr.mxu0 0.0
        %577 = vmatpush1.msra.mxu0 0.0
        %578 = vmatprep.subr.mxu0 0.0
        %579 = vmatpush1.msra.mxu0 0.0
        %580 = vmatprep.subr.mxu0 0.0
        %581 = vmatpush1.msra.mxu0 0.0
        %582 = vmatprep.subr.mxu0 0.0
        %583 = vmatpush1.msra.mxu0 0.0
        %584 = vmatprep.subr.mxu0 0.0
        %585 = vmatpush1.msra.mxu0 0.0
        %586 = vmatprep.subr.mxu0 0.0
        %587 = vmatpush1.msra.mxu0 0.0
        %588 = vmatprep.subr.mxu0 0.0
        %589 = vmatpush1.msra.mxu0 0.0
        %590 = vmatprep.subr.mxu0 0.0
        %591 = vmatpush1.msra.mxu0 0.0
        %592 = vmatprep.subr.mxu0 0.0
        %593 = vmatpush1.msra.mxu0 0.0
        %594 = vmatprep.subr.mxu0 0.0
        %595 = vmatpush1.msra.mxu0 0.0
        %596 = vmatprep.subr.mxu0 0.0
        %597 = vmatpush1.msra.mxu0 0.0
        %598 = vmatprep.subr.mxu0 0.0
        %599 = vmatpush1.msra.mxu0 0.0
        %600 = vmatprep.subr.mxu0 0.0
        %601 = vmatpush1.msra.mxu0 0.0
        %602 = vmatprep.subr.mxu0 0.0
        %603 = vmatpush1.msra.mxu0 0.0
        %604 = vmatprep.subr.mxu0 0.0
        %605 = vmatpush1.msra.mxu0 0.0
        %606 = vmatprep.subr.mxu0 0.0
        %607 = vmatpush1.msra.mxu0 0.0
        %608 = vmatprep.subr.mxu0 0.0
        %609 = vmatpush1.msra.mxu0 0.0
        %610 = vmatprep.subr.mxu0 0.0
        %611 = vmatpush1.msra.mxu0 0.0
        %612 = vmatprep.subr.mxu0 0.0
        %613 = vmatpush1.msra.mxu0 0.0
        %614 = vmatprep.subr.mxu0 0.0
        %615 = vmatpush1.msra.mxu0 0.0
        %616 = vmatprep.subr.mxu0 0.0
        %617 = vmatpush1.msra.mxu0 0.0
        %618 = vmatprep.subr.mxu0 0.0
        %619 = vmatpush1.msra.mxu0 0.0
        %620 = vmatprep.subr.mxu0 0.0
        %621 = vmatpush1.msra.mxu0 0.0
        %622 = vmatprep.subr.mxu0 0.0
        %623 = vmatpush1.msra.mxu0 0.0
        %624 = vmatprep.subr.mxu0 0.0
        %625 = vmatpush1.msra.mxu0 0.0
        %626 = vmatprep.subr.mxu0 0.0
        %627 = vmatpush1.msra.mxu0 0.0
        %628 = vmatprep.mubr.f32.mxu0 0.0
        %629 = vmatmul.mubr.f32.gmra.mrb[0].mxu0 %v553
        %v630 = vpop.f32.mrb[0].mxu0
        %v631 = vadd.f32 %v534, %v630
        %v632 = vpop.f32.mrb[0].mxu0
        %v633 = vadd.f32 %v534, %v632
        %634 = vmatprep.mubr.f32.mxu0 0.0
        %635 = vmatmul.mubr.f32.gmra.mrb[0].mxu0 %v556
        %v636 = vpop.f32.mrb[0].mxu0
        %v637 = vadd.f32 %v539, %v636
        %v638 = vpop.f32.mrb[0].mxu0
        %v639 = vadd.f32 %v539, %v638
        %640 = vmatprep.mubr.f32.mxu0 0.0
        %641 = vmatmul.mubr.f32.gmra.mrb[0].mxu0 %v559
        %v642 = vpop.f32.mrb[0].mxu0
        %v643 = vadd.f32 %v544, %v642
        %v644 = vpop.f32.mrb[0].mxu0
        %v645 = vadd.f32 %v544, %v644
        %646 = vmatprep.mubr.f32.mxu0 0.0
        %647 = vmatmul.mubr.f32.gmra.mrb[0].mxu0 %v562
        %v648 = vpop.f32.mrb[0].mxu0
        %v649 = vadd.f32 %v549, %v648
        %v650 = vpop.f32.mrb[0].mxu0
        %v651 = vadd.f32 %v549, %v650
        %652 = vdwg.mxu0
        %653 = vmatprep.subr.mxu0 %v494
        %654 = vmatpush1.msra.mxu0 %v493
        %655 = vmatprep.subr.mxu0 %v498
        %656 = vmatpush1.msra.mxu0 %v497
        %657 = vmatprep.subr.mxu0 %v502
        %658 = vmatpush1.msra.mxu0 %v501
        %659 = vmatprep.subr.mxu0 %v506
        %660 = vmatpush1.msra.mxu0 %v505
        %661 = vmatprep.subr.mxu0 0.0
        %662 = vmatpush1.msra.mxu0 0.0
        %663 = vmatprep.subr.mxu0 0.0
        %664 = vmatpush1.msra.mxu0 0.0
        %665 = vmatprep.subr.mxu0 0.0
        %666 = vmatpush1.msra.mxu0 0.0
        %667 = vmatprep.subr.mxu0 0.0
        %668 = vmatpush1.msra.mxu0 0.0
        %669 = vmatprep.subr.mxu0 0.0
        %670 = vmatpush1.msra.mxu0 0.0
        %671 = vmatprep.subr.mxu0 0.0
        %672 = vmatpush1.msra.mxu0 0.0
        %673 = vmatprep.subr.mxu0 0.0
        %674 = vmatpush1.msra.mxu0 0.0
        %675 = vmatprep.subr.mxu0 0.0
        %676 = vmatpush1.msra.mxu0 0.0
        %677 = vmatprep.subr.mxu0 0.0
        %678 = vmatpush1.msra.mxu0 0.0
        %679 = vmatprep.subr.mxu0 0.0
        %680 = vmatpush1.msra.mxu0 0.0
        %681 = vmatprep.subr.mxu0 0.0
        %682 = vmatpush1.msra.mxu0 0.0
        %683 = vmatprep.subr.mxu0 0.0
        %684 = vmatpush1.msra.mxu0 0.0
        %685 = vmatprep.subr.mxu0 0.0
        %686 = vmatpush1.msra.mxu0 0.0
        %687 = vmatprep.subr.mxu0 0.0
        %688 = vmatpush1.msra.mxu0 0.0
        %689 = vmatprep.subr.mxu0 0.0
        %690 = vmatpush1.msra.mxu0 0.0
        %691 = vmatprep.subr.mxu0 0.0
        %692 = vmatpush1.msra.mxu0 0.0
        %693 = vmatprep.subr.mxu0 0.0
        %694 = vmatpush1.msra.mxu0 0.0
        %695 = vmatprep.subr.mxu0 0.0
        %696 = vmatpush1.msra.mxu0 0.0
        %697 = vmatprep.subr.mxu0 0.0
        %698 = vmatpush1.msra.mxu0 0.0
        %699 = vmatprep.subr.mxu0 0.0
        %700 = vmatpush1.msra.mxu0 0.0
        %701 = vmatprep.subr.mxu0 0.0
        %702 = vmatpush1.msra.mxu0 0.0
        %703 = vmatprep.subr.mxu0 0.0
        %704 = vmatpush1.msra.mxu0 0.0
        %705 = vmatprep.subr.mxu0 0.0
        %706 = vmatpush1.msra.mxu0 0.0
        %707 = vmatprep.subr.mxu0 0.0
        %708 = vmatpush1.msra.mxu0 0.0
        %709 = vmatprep.subr.mxu0 0.0
        %710 = vmatpush1.msra.mxu0 0.0
        %711 = vmatprep.subr.mxu0 0.0
        %712 = vmatpush1.msra.mxu0 0.0
        %713 = vmatprep.subr.mxu0 0.0
        %714 = vmatpush1.msra.mxu0 0.0
        %715 = vmatprep.subr.mxu0 0.0
        %716 = vmatpush1.msra.mxu0 0.0
        %717 = vmatprep.mubr.f32.mxu0 0.0
        %718 = vmatmul.mubr.f32.gmra.mrb[0].mxu0 %v553
        %v719 = vpop.f32.mrb[0].mxu0
        %v720 = vadd.f32 %v534, %v719
        %v721 = vpop.f32.mrb[0].mxu0
        %v722 = vadd.f32 %v534, %v721
        %723 = vmatprep.mubr.f32.mxu0 0.0
        %724 = vmatmul.mubr.f32.gmra.mrb[0].mxu0 %v556
        %v725 = vpop.f32.mrb[0].mxu0
        %v726 = vadd.f32 %v539, %v725
        %v727 = vpop.f32.mrb[0].mxu0
        %v728 = vadd.f32 %v539, %v727
        %729 = vmatprep.mubr.f32.mxu0 0.0
        %730 = vmatmul.mubr.f32.gmra.mrb[0].mxu0 %v559
        %v731 = vpop.f32.mrb[0].mxu0
        %v732 = vadd.f32 %v544, %v731
        %v733 = vpop.f32.mrb[0].mxu0
        %v734 = vadd.f32 %v544, %v733
        %735 = vmatprep.mubr.f32.mxu0 0.0
        %736 = vmatmul.mubr.f32.gmra.mrb[0].mxu0 %v562
        %v737 = vpop.f32.mrb[0].mxu0
        %v738 = vadd.f32 %v549, %v737
        %v739 = vpop.f32.mrb[0].mxu0
        %v740 = vadd.f32 %v549, %v739
        %741 = vdwg.mxu0
        %v742 = vmax.f32 %v631, 0.0
        %v743 = vmax.f32 %v633, 0.0
        %v744 = vmax.f32 %v720, 0.0
        %v745 = vmax.f32 %v722, 0.0
        %v746 = vmax.f32 %v637, 0.0
        %v747 = vmax.f32 %v639, 0.0
        %v748 = vmax.f32 %v726, 0.0
        %v749 = vmax.f32 %v728, 0.0
        %v750 = vmax.f32 %v643, 0.0
        %v751 = vmax.f32 %v645, 0.0
        %v752 = vmax.f32 %v732, 0.0
        %v753 = vmax.f32 %v734, 0.0
        %v754 = vmax.f32 %v649, 0.0
        %v755 = vmax.f32 %v651, 0.0
        %v756 = vmax.f32 %v738, 0.0
        %v757 = vmax.f32 %v740, 0.0
        %v758 = vpack.c.bf16 %v746, %v742
        %v759 = vpack.c.bf16 %v747, %v743
        %v760 = vpack.c.bf16 %v748, %v744
        %v761 = vpack.c.bf16 %v749, %v745
        %v762 = vpack.c.bf16 %v754, %v750
        %v763 = vpack.c.bf16 %v755, %v751
        %v764 = vpack.c.bf16 %v756, %v752
        %v765 = vpack.c.bf16 %v757, %v753
        %v774 = vunpack.c.l.b16 %v758
        %v775 = vunpack.c.l.b16 %v759
        %v776 = vunpack.c.l.b16 %v760
        %v777 = vunpack.c.l.b16 %v761
        %v778 = vunpack.c.h.b16 %v758
        %v779 = vunpack.c.h.b16 %v759
        %v780 = vunpack.c.h.b16 %v760
        %v781 = vunpack.c.h.b16 %v761
        %v782 = vunpack.c.l.b16 %v762
        %v783 = vunpack.c.l.b16 %v763
        %v784 = vunpack.c.l.b16 %v764
        %v785 = vunpack.c.l.b16 %v765
        %v786 = vunpack.c.h.b16 %v762
        %v787 = vunpack.c.h.b16 %v763
        %v788 = vunpack.c.h.b16 %v764
        %v789 = vunpack.c.h.b16 %v765
        %v790 = vpack.c.b16 %v775, %v774
        %v791 = vpack.c.b16 %v777, %v776
        %v792 = vpack.c.b16 %v779, %v778
        %v793 = vpack.c.b16 %v781, %v780
        %v794 = vpack.c.b16 %v783, %v782
        %v795 = vpack.c.b16 %v785, %v784
        %v796 = vpack.c.b16 %v787, %v786
        %v797 = vpack.c.b16 %v789, %v788
        %806 = vst [vmem:[%s248] sm:$0xff] %v790
        %807 = vst [vmem:[%s248 + $0x8] sm:$0xff] %v791
        %808 = vst [vmem:[%s248 + $0x10] sm:$0xff] %v792
        %809 = vst [vmem:[%s248 + $0x18] sm:$0xff] %v793
        %810 = vst [vmem:[%s248 + $0x20] sm:$0xff] %v794
        %811 = vst [vmem:[%s248 + $0x28] sm:$0xff] %v795
        %812 = vst [vmem:[%s248 + $0x30] sm:$0xff] %v796
        %813 = vst [vmem:[%s248 + $0x38] sm:$0xff] %v797
        %s814 = sand.u32 %s136, 1
        %s815 = sand.u32 %s136, 1
        %s816 = smul.addr %s815, 128
        %s817 = scalar_lea.vmem [#allocation2], %s816
        %s818 = sand.u32 %s162, 1
        %s819 = sand.u32 %s162, 1
        %s820 = smul.addr %s819, 64
        %s821 = scalar_lea.vmem [#allocation3], %s820
        // Predicated region
        $region41: #{message_passing_nn.5} parent=39 // pred_check
          %p822 = pneg %p146
        $region42: #{message_passing_nn.5} parent=39 // pred_check_branch
          %824 = sbr.rel (%p822) target = $region44
        $region43: #{message_passing_nn.5} parent=39 // pred_region
          %s825 = smul.u32 4, %s18
          %s826 = smul.addr %s825, 8
          %s827 = scalar_lea.vmem %s5, %s826
          // Predicated region
          $region45: #{message_passing_nn.5} parent=43 // pred_check
            _
          $region46: #{message_passing_nn.5} parent=43 // pred_check_branch
            %829 = sbr.rel (0) target = $region48
          $region47: #{message_passing_nn.5} parent=43 // pred_region
            // Predicated region
            $region49: #{message_passing_nn.5} parent=47 // pred_check
              _
            $region50: #{message_passing_nn.5} parent=47 // pred_check_branch
              %831 = sbr.rel (0) target = $region52
            $region51: #{message_passing_nn.5} parent=47 // pred_region
              loop: start=0, step=1, limit=1
              $region53: #{message_passing_nn.5} parent=51 // loop_pre_header
                _
              $region54: #{message_passing_nn.5} parent=51 // loop_header
                %s833 = sphi 0, %s837
                %p834 = scmp.ge.s32.totalorder %s833, 1
                %s838 = sphi %s817, %s817
                %s839 = sphi %s827, %s827
              $region55: #{message_passing_nn.5} parent=51 // loop_header_branch
                %836 = sbr.rel (%p834) target = $region59
              $region56: #{message_passing_nn.5} parent=51 // loop_body
                %v840 = vld [vmem:[%s838] sm:$0xff]
                %841 = vst [vmem:[%s839] sm:$0xff] %v840
                %v842 = vld [vmem:[%s838 + $0x8] sm:$0xff]
                %843 = vst [vmem:[%s839 + $0x8] sm:$0xff] %v842
                %v844 = vld [vmem:[%s838 + $0x10] sm:$0xff]
                %845 = vst [vmem:[%s839 + $0x10] sm:$0xff] %v844
                %v846 = vld [vmem:[%s838 + $0x18] sm:$0xff]
                %847 = vst [vmem:[%s839 + $0x18] sm:$0xff] %v846
                %v848 = vld [vmem:[%s838 + $0x20] sm:$0xff]
                %849 = vst [vmem:[%s839 + $0x40] sm:$0xff] %v848
                %v850 = vld [vmem:[%s838 + $0x28] sm:$0xff]
                %851 = vst [vmem:[%s839 + $0x48] sm:$0xff] %v850
                %v852 = vld [vmem:[%s838 + $0x30] sm:$0xff]
                %853 = vst [vmem:[%s839 + $0x50] sm:$0xff] %v852
                %v854 = vld [vmem:[%s838 + $0x38] sm:$0xff]
                %855 = vst [vmem:[%s839 + $0x58] sm:$0xff] %v854
                %v856 = vld [vmem:[%s838 + $0x40] sm:$0xff]
                %857 = vst [vmem:[%s839 + $0x80] sm:$0xff] %v856
                %v858 = vld [vmem:[%s838 + $0x48] sm:$0xff]
                %859 = vst [vmem:[%s839 + $0x88] sm:$0xff] %v858
                %v860 = vld [vmem:[%s838 + $0x50] sm:$0xff]
                %861 = vst [vmem:[%s839 + $0x90] sm:$0xff] %v860
                %v862 = vld [vmem:[%s838 + $0x58] sm:$0xff]
                %863 = vst [vmem:[%s839 + $0x98] sm:$0xff] %v862
                %v864 = vld [vmem:[%s838 + $0x60] sm:$0xff]
                %865 = vst [vmem:[%s839 + $0xc0] sm:$0xff] %v864
                %v866 = vld [vmem:[%s838 + $0x68] sm:$0xff]
                %867 = vst [vmem:[%s839 + $0xc8] sm:$0xff] %v866
                %v868 = vld [vmem:[%s838 + $0x70] sm:$0xff]
                %869 = vst [vmem:[%s839 + $0xd0] sm:$0xff] %v868
                %v870 = vld [vmem:[%s838 + $0x78] sm:$0xff]
                %871 = vst [vmem:[%s839 + $0xd8] sm:$0xff] %v870
              $region57: #{message_passing_nn.5} parent=51 // loop_footer
                %s837 = sadd.s32 1, %s833
              $region58: #{message_passing_nn.5} parent=51 // loop_footer_branch
                %832 = sbr.rel target = $region54
              $region59: #{message_passing_nn.5} parent=51 // loop_exit
                _
            $region52: #{message_passing_nn.5} parent=47 // pred_fallthru
              _
            // Predicated region
            $region60: #{message_passing_nn.5} parent=47 // pred_check
              _
            $region61: #{message_passing_nn.5} parent=47 // pred_check_branch
              %873 = sbr.rel target = $region63
            $region62: #{message_passing_nn.5} parent=47 // pred_region
              _
            $region63: #{message_passing_nn.5} parent=47 // pred_fallthru
              _
          $region48: #{message_passing_nn.5} parent=43 // pred_fallthru
            _
          %874 = vnop
        $region44: #{message_passing_nn.5} parent=39 // pred_fallthru
          _
        // Predicated region
        $region64: #{message_passing_nn.5} parent=39 // pred_check
          %p875 = pneg %p172
        $region65: #{message_passing_nn.5} parent=39 // pred_check_branch
          %877 = sbr.rel (%p875) target = $region67
        $region66: #{message_passing_nn.5} parent=39 // pred_region
          %s878 = smul.u32 4, %s18
          %s879 = smul.addr %s878, 4
          %s880 = scalar_lea.vmem %s6, %s879
          // Predicated region
          $region68: #{message_passing_nn.5} parent=66 // pred_check
            _
          $region69: #{message_passing_nn.5} parent=66 // pred_check_branch
            %882 = sbr.rel (0) target = $region71
          $region70: #{message_passing_nn.5} parent=66 // pred_region
            // Predicated region
            $region72: #{message_passing_nn.5} parent=70 // pred_check
              _
            $region73: #{message_passing_nn.5} parent=70 // pred_check_branch
              %884 = sbr.rel (0) target = $region75
            $region74: #{message_passing_nn.5} parent=70 // pred_region
              loop: start=0, step=1, limit=1
              $region76: #{message_passing_nn.5} parent=74 // loop_pre_header
                _
              $region77: #{message_passing_nn.5} parent=74 // loop_header
                %s886 = sphi 0, %s890
                %p887 = scmp.ge.s32.totalorder %s886, 1
                %s891 = sphi %s821, %s821
                %s892 = sphi %s880, %s880
              $region78: #{message_passing_nn.5} parent=74 // loop_header_branch
                %889 = sbr.rel (%p887) target = $region82
              $region79: #{message_passing_nn.5} parent=74 // loop_body
                %v893 = vld [vmem:[%s891] sm:$0xff]
                %894 = vst [vmem:[%s892] sm:$0xff] %v893
                %v895 = vld [vmem:[%s891 + $0x8] sm:$0xff]
                %896 = vst [vmem:[%s892 + $0x8] sm:$0xff] %v895
                %v897 = vld [vmem:[%s891 + $0x10] sm:$0xff]
                %898 = vst [vmem:[%s892 + $0x20] sm:$0xff] %v897
                %v899 = vld [vmem:[%s891 + $0x18] sm:$0xff]
                %900 = vst [vmem:[%s892 + $0x28] sm:$0xff] %v899
                %v901 = vld [vmem:[%s891 + $0x20] sm:$0xff]
                %902 = vst [vmem:[%s892 + $0x40] sm:$0xff] %v901
                %v903 = vld [vmem:[%s891 + $0x28] sm:$0xff]
                %904 = vst [vmem:[%s892 + $0x48] sm:$0xff] %v903
                %v905 = vld [vmem:[%s891 + $0x30] sm:$0xff]
                %906 = vst [vmem:[%s892 + $0x60] sm:$0xff] %v905
                %v907 = vld [vmem:[%s891 + $0x38] sm:$0xff]
                %908 = vst [vmem:[%s892 + $0x68] sm:$0xff] %v907
              $region80: #{message_passing_nn.5} parent=74 // loop_footer
                %s890 = sadd.s32 1, %s886
              $region81: #{message_passing_nn.5} parent=74 // loop_footer_branch
                %885 = sbr.rel target = $region77
              $region82: #{message_passing_nn.5} parent=74 // loop_exit
                _
            $region75: #{message_passing_nn.5} parent=70 // pred_fallthru
              _
            // Predicated region
            $region83: #{message_passing_nn.5} parent=70 // pred_check
              _
            $region84: #{message_passing_nn.5} parent=70 // pred_check_branch
              %910 = sbr.rel target = $region86
            $region85: #{message_passing_nn.5} parent=70 // pred_region
              _
            $region86: #{message_passing_nn.5} parent=70 // pred_fallthru
              _
          $region71: #{message_passing_nn.5} parent=66 // pred_fallthru
            _
          %911 = vnop
        $region67: #{message_passing_nn.5} parent=39 // pred_fallthru
          _
      $region40: #{message_passing_nn.5} parent=5 // pred_fallthru
        _
      %p912 = scmp.le.s32.totalorder 2, %s13
      // Predicated region
      $region87: #{message_passing_nn.5} parent=5 // pred_check
        %p913 = pneg %p912
      $region88: #{message_passing_nn.5} parent=5 // pred_check_branch
        %915 = sbr.rel (%p913) target = $region90
      $region89: #{message_passing_nn.5} parent=5 // pred_region
        %s916 = ssub.s32 %s13, 2
        // Predicated region
        $region91: #{message_passing_nn.5} parent=89 // pred_check
          %p917 = pneg %p152
        $region92: #{message_passing_nn.5} parent=89 // pred_check_branch
          %919 = sbr.rel (%p917) target = $region94
        $region93: #{message_passing_nn.5} parent=89 // pred_region
          %s920 = sand.u32 %s137, 1
          %s921 = sand.u32 %s137, 1
          %s922 = smul.addr %s921, 128
          %s923 = scalar_lea.vmem [#allocation2], %s922
        $region94: #{message_passing_nn.5} parent=89 // pred_fallthru
          _
        // Predicated region
        $region95: #{message_passing_nn.5} parent=89 // pred_check
          %p924 = pneg %p178
        $region96: #{message_passing_nn.5} parent=89 // pred_check_branch
          %926 = sbr.rel (%p924) target = $region98
        $region97: #{message_passing_nn.5} parent=89 // pred_region
          %s927 = sand.u32 %s163, 1
          %s928 = sand.u32 %s163, 1
          %s929 = smul.addr %s928, 64
          %s930 = scalar_lea.vmem [#allocation3], %s929
        $region98: #{message_passing_nn.5} parent=89 // pred_fallthru
          _
      $region90: #{message_passing_nn.5} parent=5 // pred_fallthru
        _
    $region6: #{message_passing_nn.5} parent=1 // loop_footer
      %s17 = sadd.s32 1, %s13
    $region7: #{message_passing_nn.5} parent=1 // loop_footer_branch
      %12 = sbr.rel target = $region3
    $region8: #{message_passing_nn.5} parent=1 // loop_exit
      _

// kernel: message_passing_nn.6
$region0: #{message_passing_nn.6}
  #allocation0 [shape = 'u32[]', space=smem, size = 0x4, offset = 0x4, fixed_abs, tag = 'smem constant byte address 0x4 - core index']
  #allocation1 [shape = 'u32[144,128]{1,0:T(1,128)}', space=vmem, size = 0x12000, scoped, tag = 'internal scratch']
  #allocation2 [shape = 'f32[32,512]{1,0:T(8,128)}', space=vmem, size = 0x10000, scoped, tag = 'scratch operand']
  %s0 = inlined_call_operand.vmem [shape: bf16[32,1024], index: 0, kind: input, shape index: {}]
  %s1 = inlined_call_operand.vmem [shape: f32[32,1024], index: 1, kind: input, shape index: {}]
  %s2 = inlined_call_operand.vmem [shape: s8[1024,1024], index: 2, kind: input, shape index: {}]
  %s3 = inlined_call_operand.vmem [shape: f32[32,32], index: 3, kind: input, shape index: {}]
  %s4 = inlined_call_operand.vmem [shape: f32[32,1], index: 4, kind: input, shape index: {}]
  %s5 = inlined_call_operand.vmem [shape: f32[32,32], index: 5, kind: input, shape index: {}]
  %s6 = inlined_call_operand.vmem [shape: f32[32,1], index: 6, kind: input, shape index: {}]
  %s7 = inlined_call_operand.vmem [shape: f32[32,1024], index: 7, kind: output, shape index: {0}]
  %s8 = inlined_call_operand.vmem [shape: bf16[32,1024], index: 8, kind: output, shape index: {1}]
  %9 = xla_tuple %s7, %s8
  %s10 = sld [smem:[#allocation0]]
  $region184: #{message_passing_nn.6} parent=0
    _
  %s12 = ssub.s32 1, %s10
  %s13 = scalar_select 0, %s12, %s10
  $region1: #{message_passing_nn.6} parent=0
    #allocation3 [shape = 'u8[65536]{0}', space=vmem, size = 0x10000, scoped, tag = 'input window, operand 0']
    #allocation4 [shape = 'u8[131072]{0}', space=vmem, size = 0x20000, scoped, tag = 'input window, operand 1']
    #allocation5 [shape = 'u8[524288]{0}', space=vmem, size = 0x80000, scoped, tag = 'input window, operand 2']
    #allocation6 [shape = 'u8[131072]{0}', space=vmem, size = 0x20000, scoped, tag = 'output window, operand 0']
    #allocation7 [shape = 'u8[65536]{0}', space=vmem, size = 0x10000, scoped, tag = 'output window, operand 1']
    loop: start=0, step=1, limit=6
    $region2: #{message_passing_nn.6} parent=1 // loop_pre_header
      _
    $region3: #{message_passing_nn.6} parent=1 // loop_header
      %s15 = sphi 0, %s19
      %p16 = scmp.ge.s32.totalorder %s15, 6
      %s22 = sphi 0, %s34
      %s23 = sphi 0, %s30
      %s24 = sphi 0, %s22
      %s25 = sphi 0, %s23
      %s26 = sphi 0, %s24
      %s27 = sphi 0, %s25
      %s37 = sphi 0, %s39
      %s40 = sphi 0, %s37
      %s41 = sphi 0, %s40
      %s57 = sphi 0, %s41
      %s63 = sphi 0, %s65
      %s66 = sphi 0, %s63
      %s67 = sphi 0, %s66
      %s83 = sphi 0, %s67
      %s91 = sphi 0, %s93
      %s94 = sphi 0, %s91
      %s95 = sphi 0, %s94
      %s111 = sphi 0, %s95
      %s115 = sphi 0, %s115
      %s117 = sphi 0, %s115
      %s118 = sphi 0, %s117
      %s132 = sphi 0, %s118
      %s136 = sphi 0, %s136
      %s138 = sphi 0, %s136
      %s139 = sphi 0, %s138
      %s153 = sphi 0, %s139
      %s157 = sphi 0, %s157
      %s159 = sphi 0, %s157
      %s160 = sphi 0, %s159
      %s174 = sphi 0, %s160
      %s178 = sphi 0, %s178
      %s180 = sphi 0, %s178
      %s181 = sphi 0, %s180
      %s195 = sphi 0, %s181
      %s201 = sphi 0, %s203
      %s204 = sphi 0, %s201
      %s205 = sphi 0, %s204
      %s221 = sphi 0, %s205
      %s227 = sphi 0, %s229
      %s230 = sphi 0, %s227
      %s231 = sphi 0, %s230
      %s247 = sphi 0, %s231
    $region4: #{message_passing_nn.6} parent=1 // loop_header_branch
      %18 = sbr.rel (%p16) target = $region8
    $region5: #{message_passing_nn.6} parent=1 // loop_body
      %s20 = ssub.s32 %s15, 1
      %s21 = ssub.s32 %s15, 2
      %s28 = sadd.s32 1, %s23
      %p29 = scmp.ge.s32.totalorder %s28, 2
      %s30 = scalar_select %p29, 0, %s28
      %s31 = sadd.s32 1, %s22
      %s32 = scalar_select %p29, %s31, %s22
      %p33 = scmp.ge.s32.totalorder %s32, 2
      %s34 = scalar_select %p33, 0, %s32
      %s35 = ssub.s32 %s23, %s30
      %p36 = scmp.eq.s32.totalorder %s35, 0
      %s38 = sadd.s32 %s37, 1
      %s39 = scalar_select %p36, %s37, %s38
      %p42 = pneg %p36
      %p43 = scmp.eq.s32.totalorder %s15, 3
      %p44 = por %p42, %p43
      %p45 = scmp.ne.s32.totalorder %s37, %s40
      %p46 = scmp.eq.s32.totalorder %s15, 0
      %p47 = por %p45, %p46
      %p48 = scmp.ne.s32.totalorder %s37, %s40
      %p49 = scmp.eq.s32.totalorder %s20, 3
      %p50 = por %p48, %p49
      %p51 = scmp.ne.s32.totalorder %s40, %s41
      %p52 = scmp.eq.s32.totalorder %s20, 0
      %p53 = por %p51, %p52
      %p54 = scmp.ne.s32.totalorder %s40, %s41
      %p55 = scmp.eq.s32.totalorder %s21, 3
      %p56 = por %p54, %p55
      %p58 = scmp.ne.s32.totalorder %s41, %s57
      %p59 = scmp.eq.s32.totalorder %s21, 0
      %p60 = por %p58, %p59
      %s61 = ssub.s32 %s22, %s34
      %p62 = scmp.eq.s32.totalorder %s61, 0
      %s64 = sadd.s32 %s63, 1
      %s65 = scalar_select %p62, %s63, %s64
      %p68 = pneg %p62
      %p69 = scmp.eq.s32.totalorder %s15, 3
      %p70 = por %p68, %p69
      %p71 = scmp.ne.s32.totalorder %s63, %s66
      %p72 = scmp.eq.s32.totalorder %s15, 0
      %p73 = por %p71, %p72
      %p74 = scmp.ne.s32.totalorder %s63, %s66
      %p75 = scmp.eq.s32.totalorder %s20, 3
      %p76 = por %p74, %p75
      %p77 = scmp.ne.s32.totalorder %s66, %s67
      %p78 = scmp.eq.s32.totalorder %s20, 0
      %p79 = por %p77, %p78
      %p80 = scmp.ne.s32.totalorder %s66, %s67
      %p81 = scmp.eq.s32.totalorder %s21, 3
      %p82 = por %p80, %p81
      %p84 = scmp.ne.s32.totalorder %s67, %s83
      %p85 = scmp.eq.s32.totalorder %s21, 0
      %p86 = por %p84, %p85
      %s87 = ssub.s32 %s23, %s30
      %s88 = ssub.s32 %s22, %s34
      %s89 = sor.u32 %s87, %s88
      %p90 = scmp.eq.s32.totalorder %s89, 0
      %s92 = sadd.s32 %s91, 1
      %s93 = scalar_select %p90, %s91, %s92
      %p96 = pneg %p90
      %p97 = scmp.eq.s32.totalorder %s15, 3
      %p98 = por %p96, %p97
      %p99 = scmp.ne.s32.totalorder %s91, %s94
      %p100 = scmp.eq.s32.totalorder %s15, 0
      %p101 = por %p99, %p100
      %p102 = scmp.ne.s32.totalorder %s91, %s94
      %p103 = scmp.eq.s32.totalorder %s20, 3
      %p104 = por %p102, %p103
      %p105 = scmp.ne.s32.totalorder %s94, %s95
      %p106 = scmp.eq.s32.totalorder %s20, 0
      %p107 = por %p105, %p106
      %p108 = scmp.ne.s32.totalorder %s94, %s95
      %p109 = scmp.eq.s32.totalorder %s21, 3
      %p110 = por %p108, %p109
      %p112 = scmp.ne.s32.totalorder %s95, %s111
      %p113 = scmp.eq.s32.totalorder %s21, 0
      %p114 = por %p112, %p113
      %s116 = sadd.s32 %s115, 1
      %p119 = scmp.eq.s32.totalorder %s15, 3
      %p120 = scmp.ne.s32.totalorder %s115, %s117
      %p121 = scmp.eq.s32.totalorder %s15, 0
      %p122 = por %p120, %p121
      %p123 = scmp.ne.s32.totalorder %s115, %s117
      %p124 = scmp.eq.s32.totalorder %s20, 3
      %p125 = por %p123, %p124
      %p126 = scmp.ne.s32.totalorder %s117, %s118
      %p127 = scmp.eq.s32.totalorder %s20, 0
      %p128 = por %p126, %p127
      %p129 = scmp.ne.s32.totalorder %s117, %s118
      %p130 = scmp.eq.s32.totalorder %s21, 3
      %p131 = por %p129, %p130
      %p133 = scmp.ne.s32.totalorder %s118, %s132
      %p134 = scmp.eq.s32.totalorder %s21, 0
      %p135 = por %p133, %p134
      %s137 = sadd.s32 %s136, 1
      %p140 = scmp.eq.s32.totalorder %s15, 3
      %p141 = scmp.ne.s32.totalorder %s136, %s138
      %p142 = scmp.eq.s32.totalorder %s15, 0
      %p143 = por %p141, %p142
      %p144 = scmp.ne.s32.totalorder %s136, %s138
      %p145 = scmp.eq.s32.totalorder %s20, 3
      %p146 = por %p144, %p145
      %p147 = scmp.ne.s32.totalorder %s138, %s139
      %p148 = scmp.eq.s32.totalorder %s20, 0
      %p149 = por %p147, %p148
      %p150 = scmp.ne.s32.totalorder %s138, %s139
      %p151 = scmp.eq.s32.totalorder %s21, 3
      %p152 = por %p150, %p151
      %p154 = scmp.ne.s32.totalorder %s139, %s153
      %p155 = scmp.eq.s32.totalorder %s21, 0
      %p156 = por %p154, %p155
      %s158 = sadd.s32 %s157, 1
      %p161 = scmp.eq.s32.totalorder %s15, 3
      %p162 = scmp.ne.s32.totalorder %s157, %s159
      %p163 = scmp.eq.s32.totalorder %s15, 0
      %p164 = por %p162, %p163
      %p165 = scmp.ne.s32.totalorder %s157, %s159
      %p166 = scmp.eq.s32.totalorder %s20, 3
      %p167 = por %p165, %p166
      %p168 = scmp.ne.s32.totalorder %s159, %s160
      %p169 = scmp.eq.s32.totalorder %s20, 0
      %p170 = por %p168, %p169
      %p171 = scmp.ne.s32.totalorder %s159, %s160
      %p172 = scmp.eq.s32.totalorder %s21, 3
      %p173 = por %p171, %p172
      %p175 = scmp.ne.s32.totalorder %s160, %s174
      %p176 = scmp.eq.s32.totalorder %s21, 0
      %p177 = por %p175, %p176
      %s179 = sadd.s32 %s178, 1
      %p182 = scmp.eq.s32.totalorder %s15, 3
      %p183 = scmp.ne.s32.totalorder %s178, %s180
      %p184 = scmp.eq.s32.totalorder %s15, 0
      %p185 = por %p183, %p184
      %p186 = scmp.ne.s32.totalorder %s178, %s180
      %p187 = scmp.eq.s32.totalorder %s20, 3
      %p188 = por %p186, %p187
      %p189 = scmp.ne.s32.totalorder %s180, %s181
      %p190 = scmp.eq.s32.totalorder %s20, 0
      %p191 = por %p189, %p190
      %p192 = scmp.ne.s32.totalorder %s180, %s181
      %p193 = scmp.eq.s32.totalorder %s21, 3
      %p194 = por %p192, %p193
      %p196 = scmp.ne.s32.totalorder %s181, %s195
      %p197 = scmp.eq.s32.totalorder %s21, 0
      %p198 = por %p196, %p197
      %s199 = ssub.s32 %s22, %s34
      %p200 = scmp.eq.s32.totalorder %s199, 0
      %s202 = sadd.s32 %s201, 1
      %s203 = scalar_select %p200, %s201, %s202
      %p206 = pneg %p200
      %p207 = scmp.eq.s32.totalorder %s15, 3
      %p208 = por %p206, %p207
      %p209 = scmp.ne.s32.totalorder %s201, %s204
      %p210 = scmp.eq.s32.totalorder %s15, 0
      %p211 = por %p209, %p210
      %p212 = scmp.ne.s32.totalorder %s201, %s204
      %p213 = scmp.eq.s32.totalorder %s20, 3
      %p214 = por %p212, %p213
      %p215 = scmp.ne.s32.totalorder %s204, %s205
      %p216 = scmp.eq.s32.totalorder %s20, 0
      %p217 = por %p215, %p216
      %p218 = scmp.ne.s32.totalorder %s204, %s205
      %p219 = scmp.eq.s32.totalorder %s21, 3
      %p220 = por %p218, %p219
      %p222 = scmp.ne.s32.totalorder %s205, %s221
      %p223 = scmp.eq.s32.totalorder %s21, 0
      %p224 = por %p222, %p223
      %s225 = ssub.s32 %s22, %s34
      %p226 = scmp.eq.s32.totalorder %s225, 0
      %s228 = sadd.s32 %s227, 1
      %s229 = scalar_select %p226, %s227, %s228
      %p232 = pneg %p226
      %p233 = scmp.eq.s32.totalorder %s15, 3
      %p234 = por %p232, %p233
      %p235 = scmp.ne.s32.totalorder %s227, %s230
      %p236 = scmp.eq.s32.totalorder %s15, 0
      %p237 = por %p235, %p236
      %p238 = scmp.ne.s32.totalorder %s227, %s230
      %p239 = scmp.eq.s32.totalorder %s20, 3
      %p240 = por %p238, %p239
      %p241 = scmp.ne.s32.totalorder %s230, %s231
      %p242 = scmp.eq.s32.totalorder %s20, 0
      %p243 = por %p241, %p242
      %p244 = scmp.ne.s32.totalorder %s230, %s231
      %p245 = scmp.eq.s32.totalorder %s21, 3
      %p246 = por %p244, %p245
      %p248 = scmp.ne.s32.totalorder %s231, %s247
      %p249 = scmp.eq.s32.totalorder %s21, 0
      %p250 = por %p248, %p249
      %p251 = scmp.le.s32.totalorder 1, %s15
      %p252 = scmp.lt.s32.totalorder %s15, 5
      %p253 = pnand %p251, %p252
      %p254 = pneg %p253
      // Predicated region
      $region9: #{message_passing_nn.6} parent=5 // pred_check
        _
      $region10: #{message_passing_nn.6} parent=5 // pred_check_branch
        %256 = sbr.rel (%p253) target = $region12
      $region11: #{message_passing_nn.6} parent=5 // pred_region
        %s257 = ssub.s32 %s15, 1
        // Predicated region
        $region13: #{message_passing_nn.6} parent=11 // pred_check
          %p258 = pneg %p128
        $region14: #{message_passing_nn.6} parent=11 // pred_check_branch
          %260 = sbr.rel (%p258) target = $region16
        $region15: #{message_passing_nn.6} parent=11 // pred_region
          _
        $region16: #{message_passing_nn.6} parent=11 // pred_fallthru
          _
        // Predicated region
        $region17: #{message_passing_nn.6} parent=11 // pred_check
          %p261 = pneg %p149
        $region18: #{message_passing_nn.6} parent=11 // pred_check_branch
          %263 = sbr.rel (%p261) target = $region20
        $region19: #{message_passing_nn.6} parent=11 // pred_region
          _
        $region20: #{message_passing_nn.6} parent=11 // pred_fallthru
          _
        // Predicated region
        $region21: #{message_passing_nn.6} parent=11 // pred_check
          %p264 = pneg %p170
        $region22: #{message_passing_nn.6} parent=11 // pred_check_branch
          %266 = sbr.rel (%p264) target = $region24
        $region23: #{message_passing_nn.6} parent=11 // pred_region
          _
        $region24: #{message_passing_nn.6} parent=11 // pred_fallthru
          _
        // Predicated region
        $region25: #{message_passing_nn.6} parent=11 // pred_check
          %p267 = pneg %p191
        $region26: #{message_passing_nn.6} parent=11 // pred_check_branch
          %269 = sbr.rel (%p267) target = $region28
        $region27: #{message_passing_nn.6} parent=11 // pred_region
          _
        $region28: #{message_passing_nn.6} parent=11 // pred_fallthru
          _
      $region12: #{message_passing_nn.6} parent=5 // pred_fallthru
        _
      %p270 = scmp.lt.s32.totalorder %s15, 4
      // Predicated region
      $region29: #{message_passing_nn.6} parent=5 // pred_check
        %p271 = pneg %p270
      $region30: #{message_passing_nn.6} parent=5 // pred_check_branch
        %273 = sbr.rel (%p271) target = $region32
      $region31: #{message_passing_nn.6} parent=5 // pred_region
        // Predicated region
        $region33: #{message_passing_nn.6} parent=31 // pred_check
          %p274 = pneg %p47
        $region34: #{message_passing_nn.6} parent=31 // pred_check_branch
          %276 = sbr.rel (%p274) target = $region36
        $region35: #{message_passing_nn.6} parent=31 // pred_region
          %s277 = sand.u32 %s37, 1
          %s278 = sand.u32 %s37, 1
          %s279 = smul.addr %s278, 64
          %s280 = scalar_lea.vmem [#allocation3], %s279
          %s281 = smul.u32 4, %s23
          %s282 = smul.addr %s281, 4
          %s283 = scalar_lea.vmem %s0, %s282
          // Predicated region
          $region37: #{message_passing_nn.6} parent=35 // pred_check
            _
          $region38: #{message_passing_nn.6} parent=35 // pred_check_branch
            %285 = sbr.rel (0) target = $region40
          $region39: #{message_passing_nn.6} parent=35 // pred_region
            // Predicated region
            $region41: #{message_passing_nn.6} parent=39 // pred_check
              _
            $region42: #{message_passing_nn.6} parent=39 // pred_check_branch
              %287 = sbr.rel (0) target = $region44
            $region43: #{message_passing_nn.6} parent=39 // pred_region
              loop: start=0, step=1, limit=1
              $region45: #{message_passing_nn.6} parent=43 // loop_pre_header
                _
              $region46: #{message_passing_nn.6} parent=43 // loop_header
                %s289 = sphi 0, %s293
                %p290 = scmp.ge.s32.totalorder %s289, 1
                %s294 = sphi %s283, %s283
                %s295 = sphi %s280, %s280
              $region47: #{message_passing_nn.6} parent=43 // loop_header_branch
                %292 = sbr.rel (%p290) target = $region51
              $region48: #{message_passing_nn.6} parent=43 // loop_body
                %v296 = vld [vmem:[%s294] sm:$0xff]
                %297 = vst [vmem:[%s295] sm:$0xff] %v296
                %v298 = vld [vmem:[%s294 + $0x8] sm:$0xff]
                %299 = vst [vmem:[%s295 + $0x8] sm:$0xff] %v298
                %v300 = vld [vmem:[%s294 + $0x20] sm:$0xff]
                %301 = vst [vmem:[%s295 + $0x10] sm:$0xff] %v300
                %v302 = vld [vmem:[%s294 + $0x28] sm:$0xff]
                %303 = vst [vmem:[%s295 + $0x18] sm:$0xff] %v302
                %v304 = vld [vmem:[%s294 + $0x40] sm:$0xff]
                %305 = vst [vmem:[%s295 + $0x20] sm:$0xff] %v304
                %v306 = vld [vmem:[%s294 + $0x48] sm:$0xff]
                %307 = vst [vmem:[%s295 + $0x28] sm:$0xff] %v306
                %v308 = vld [vmem:[%s294 + $0x60] sm:$0xff]
                %309 = vst [vmem:[%s295 + $0x30] sm:$0xff] %v308
                %v310 = vld [vmem:[%s294 + $0x68] sm:$0xff]
                %311 = vst [vmem:[%s295 + $0x38] sm:$0xff] %v310
              $region49: #{message_passing_nn.6} parent=43 // loop_footer
                %s293 = sadd.s32 1, %s289
              $region50: #{message_passing_nn.6} parent=43 // loop_footer_branch
                %288 = sbr.rel target = $region46
              $region51: #{message_passing_nn.6} parent=43 // loop_exit
                _
            $region44: #{message_passing_nn.6} parent=39 // pred_fallthru
              _
            // Predicated region
            $region52: #{message_passing_nn.6} parent=39 // pred_check
              _
            $region53: #{message_passing_nn.6} parent=39 // pred_check_branch
              %313 = sbr.rel target = $region55
            $region54: #{message_passing_nn.6} parent=39 // pred_region
              _
            $region55: #{message_passing_nn.6} parent=39 // pred_fallthru
              _
          $region40: #{message_passing_nn.6} parent=35 // pred_fallthru
            _
          %314 = vnop
        $region36: #{message_passing_nn.6} parent=31 // pred_fallthru
          _
        // Predicated region
        $region56: #{message_passing_nn.6} parent=31 // pred_check
          %p315 = pneg %p73
        $region57: #{message_passing_nn.6} parent=31 // pred_check_branch
          %317 = sbr.rel (%p315) target = $region59
        $region58: #{message_passing_nn.6} parent=31 // pred_region
          %s318 = sand.u32 %s63, 1
          %s319 = sand.u32 %s63, 1
          %s320 = smul.addr %s319, 128
          %s321 = scalar_lea.vmem [#allocation4], %s320
          %s322 = smul.u32 4, %s22
          %s323 = smul.addr %s322, 8
          %s324 = scalar_lea.vmem %s1, %s323
          // Predicated region
          $region60: #{message_passing_nn.6} parent=58 // pred_check
            _
          $region61: #{message_passing_nn.6} parent=58 // pred_check_branch
            %326 = sbr.rel (0) target = $region63
          $region62: #{message_passing_nn.6} parent=58 // pred_region
            // Predicated region
            $region64: #{message_passing_nn.6} parent=62 // pred_check
              _
            $region65: #{message_passing_nn.6} parent=62 // pred_check_branch
              %328 = sbr.rel (0) target = $region67
            $region66: #{message_passing_nn.6} parent=62 // pred_region
              loop: start=0, step=1, limit=1
              $region68: #{message_passing_nn.6} parent=66 // loop_pre_header
                _
              $region69: #{message_passing_nn.6} parent=66 // loop_header
                %s330 = sphi 0, %s334
                %p331 = scmp.ge.s32.totalorder %s330, 1
                %s335 = sphi %s324, %s324
                %s336 = sphi %s321, %s321
              $region70: #{message_passing_nn.6} parent=66 // loop_header_branch
                %333 = sbr.rel (%p331) target = $region74
              $region71: #{message_passing_nn.6} parent=66 // loop_body
                %v337 = vld [vmem:[%s335] sm:$0xff]
                %338 = vst [vmem:[%s336] sm:$0xff] %v337
                %v339 = vld [vmem:[%s335 + $0x8] sm:$0xff]
                %340 = vst [vmem:[%s336 + $0x8] sm:$0xff] %v339
                %v341 = vld [vmem:[%s335 + $0x10] sm:$0xff]
                %342 = vst [vmem:[%s336 + $0x10] sm:$0xff] %v341
                %v343 = vld [vmem:[%s335 + $0x18] sm:$0xff]
                %344 = vst [vmem:[%s336 + $0x18] sm:$0xff] %v343
                %v345 = vld [vmem:[%s335 + $0x40] sm:$0xff]
                %346 = vst [vmem:[%s336 + $0x20] sm:$0xff] %v345
                %v347 = vld [vmem:[%s335 + $0x48] sm:$0xff]
                %348 = vst [vmem:[%s336 + $0x28] sm:$0xff] %v347
                %v349 = vld [vmem:[%s335 + $0x50] sm:$0xff]
                %350 = vst [vmem:[%s336 + $0x30] sm:$0xff] %v349
                %v351 = vld [vmem:[%s335 + $0x58] sm:$0xff]
                %352 = vst [vmem:[%s336 + $0x38] sm:$0xff] %v351
                %v353 = vld [vmem:[%s335 + $0x80] sm:$0xff]
                %354 = vst [vmem:[%s336 + $0x40] sm:$0xff] %v353
                %v355 = vld [vmem:[%s335 + $0x88] sm:$0xff]
                %356 = vst [vmem:[%s336 + $0x48] sm:$0xff] %v355
                %v357 = vld [vmem:[%s335 + $0x90] sm:$0xff]
                %358 = vst [vmem:[%s336 + $0x50] sm:$0xff] %v357
                %v359 = vld [vmem:[%s335 + $0x98] sm:$0xff]
                %360 = vst [vmem:[%s336 + $0x58] sm:$0xff] %v359
                %v361 = vld [vmem:[%s335 + $0xc0] sm:$0xff]
                %362 = vst [vmem:[%s336 + $0x60] sm:$0xff] %v361
                %v363 = vld [vmem:[%s335 + $0xc8] sm:$0xff]
                %364 = vst [vmem:[%s336 + $0x68] sm:$0xff] %v363
                %v365 = vld [vmem:[%s335 + $0xd0] sm:$0xff]
                %366 = vst [vmem:[%s336 + $0x70] sm:$0xff] %v365
                %v367 = vld [vmem:[%s335 + $0xd8] sm:$0xff]
                %368 = vst [vmem:[%s336 + $0x78] sm:$0xff] %v367
              $region72: #{message_passing_nn.6} parent=66 // loop_footer
                %s334 = sadd.s32 1, %s330
              $region73: #{message_passing_nn.6} parent=66 // loop_footer_branch
                %329 = sbr.rel target = $region69
              $region74: #{message_passing_nn.6} parent=66 // loop_exit
                _
            $region67: #{message_passing_nn.6} parent=62 // pred_fallthru
              _
            // Predicated region
            $region75: #{message_passing_nn.6} parent=62 // pred_check
              _
            $region76: #{message_passing_nn.6} parent=62 // pred_check_branch
              %370 = sbr.rel target = $region78
            $region77: #{message_passing_nn.6} parent=62 // pred_region
              _
            $region78: #{message_passing_nn.6} parent=62 // pred_fallthru
              _
          $region63: #{message_passing_nn.6} parent=58 // pred_fallthru
            _
          %371 = vnop
        $region59: #{message_passing_nn.6} parent=31 // pred_fallthru
          _
        // Predicated region
        $region79: #{message_passing_nn.6} parent=31 // pred_check
          %p372 = pneg %p101
        $region80: #{message_passing_nn.6} parent=31 // pred_check_branch
          %374 = sbr.rel (%p372) target = $region82
        $region81: #{message_passing_nn.6} parent=31 // pred_region
          %s375 = sand.u32 %s91, 1
          %s376 = sand.u32 %s91, 1
          %s377 = smul.addr %s376, 512
          %s378 = scalar_lea.vmem [#allocation5], %s377
          %s379 = smul.u32 16, %s23
          %s380 = smul.u32 4, %s22
          %s381 = smul.addr %s379, 8
          %s382 = sadd.s32 %s380, %s381
          %s383 = smul.addr %s382, 8
          %s384 = scalar_lea.vmem %s2, %s383
          // Predicated region
          $region83: #{message_passing_nn.6} parent=81 // pred_check
            _
          $region84: #{message_passing_nn.6} parent=81 // pred_check_branch
            %386 = sbr.rel (0) target = $region86
          $region85: #{message_passing_nn.6} parent=81 // pred_region
            // Predicated region
            $region87: #{message_passing_nn.6} parent=85 // pred_check
              _
            $region88: #{message_passing_nn.6} parent=85 // pred_check_branch
              %388 = sbr.rel (0) target = $region90
            $region89: #{message_passing_nn.6} parent=85 // pred_region
              loop: start=0, step=1, limit=1
              $region91: #{message_passing_nn.6} parent=89 // loop_pre_header
                _
              $region92: #{message_passing_nn.6} parent=89 // loop_header
                %s390 = sphi 0, %s394
                %p391 = scmp.ge.s32.totalorder %s390, 1
                %s395 = sphi %s384, %s384
                %s396 = sphi %s378, %s378
              $region93: #{message_passing_nn.6} parent=89 // loop_header_branch
                %393 = sbr.rel (%p391) target = $region97
              $region94: #{message_passing_nn.6} parent=89 // loop_body
                %v397 = vld [vmem:[%s395] sm:$0xff]
                %398 = vst [vmem:[%s396] sm:$0xff] %v397
                %v399 = vld [vmem:[%s395 + $0x8] sm:$0xff]
                %400 = vst [vmem:[%s396 + $0x8] sm:$0xff] %v399
                %v401 = vld [vmem:[%s395 + $0x10] sm:$0xff]
                %402 = vst [vmem:[%s396 + $0x10] sm:$0xff] %v401
                %v403 = vld [vmem:[%s395 + $0x18] sm:$0xff]
                %404 = vst [vmem:[%s396 + $0x18] sm:$0xff] %v403
                %v405 = vld [vmem:[%s395 + $0x40] sm:$0xff]
                %406 = vst [vmem:[%s396 + $0x20] sm:$0xff] %v405
                %v407 = vld [vmem:[%s395 + $0x48] sm:$0xff]
                %408 = vst [vmem:[%s396 + $0x28] sm:$0xff] %v407
                %v409 = vld [vmem:[%s395 + $0x50] sm:$0xff]
                %410 = vst [vmem:[%s396 + $0x30] sm:$0xff] %v409
                %v411 = vld [vmem:[%s395 + $0x58] sm:$0xff]
                %412 = vst [vmem:[%s396 + $0x38] sm:$0xff] %v411
                %v413 = vld [vmem:[%s395 + $0x80] sm:$0xff]
                %414 = vst [vmem:[%s396 + $0x40] sm:$0xff] %v413
                %v415 = vld [vmem:[%s395 + $0x88] sm:$0xff]
                %416 = vst [vmem:[%s396 + $0x48] sm:$0xff] %v415
                %v417 = vld [vmem:[%s395 + $0x90] sm:$0xff]
                %418 = vst [vmem:[%s396 + $0x50] sm:$0xff] %v417
                %v419 = vld [vmem:[%s395 + $0x98] sm:$0xff]
                %420 = vst [vmem:[%s396 + $0x58] sm:$0xff] %v419
                %v421 = vld [vmem:[%s395 + $0xc0] sm:$0xff]
                %422 = vst [vmem:[%s396 + $0x60] sm:$0xff] %v421
                %v423 = vld [vmem:[%s395 + $0xc8] sm:$0xff]
                %424 = vst [vmem:[%s396 + $0x68] sm:$0xff] %v423
                %v425 = vld [vmem:[%s395 + $0xd0] sm:$0xff]
                %426 = vst [vmem:[%s396 + $0x70] sm:$0xff] %v425
                %v427 = vld [vmem:[%s395 + $0xd8] sm:$0xff]
                %428 = vst [vmem:[%s396 + $0x78] sm:$0xff] %v427
                %v429 = vld [vmem:[%s395 + $0x100] sm:$0xff]
                %430 = vst [vmem:[%s396 + $0x80] sm:$0xff] %v429
                %v431 = vld [vmem:[%s395 + $0x108] sm:$0xff]
                %432 = vst [vmem:[%s396 + $0x88] sm:$0xff] %v431
                %v433 = vld [vmem:[%s395 + $0x110] sm:$0xff]
                %434 = vst [vmem:[%s396 + $0x90] sm:$0xff] %v433
                %v435 = vld [vmem:[%s395 + $0x118] sm:$0xff]
                %436 = vst [vmem:[%s396 + $0x98] sm:$0xff] %v435
                %v437 = vld [vmem:[%s395 + $0x140] sm:$0xff]
                %438 = vst [vmem:[%s396 + $0xa0] sm:$0xff] %v437
                %v439 = vld [vmem:[%s395 + $0x148] sm:$0xff]
                %440 = vst [vmem:[%s396 + $0xa8] sm:$0xff] %v439
                %v441 = vld [vmem:[%s395 + $0x150] sm:$0xff]
                %442 = vst [vmem:[%s396 + $0xb0] sm:$0xff] %v441
                %v443 = vld [vmem:[%s395 + $0x158] sm:$0xff]
                %444 = vst [vmem:[%s396 + $0xb8] sm:$0xff] %v443
                %v445 = vld [vmem:[%s395 + $0x180] sm:$0xff]
                %446 = vst [vmem:[%s396 + $0xc0] sm:$0xff] %v445
                %v447 = vld [vmem:[%s395 + $0x188] sm:$0xff]
                %448 = vst [vmem:[%s396 + $0xc8] sm:$0xff] %v447
                %v449 = vld [vmem:[%s395 + $0x190] sm:$0xff]
                %450 = vst [vmem:[%s396 + $0xd0] sm:$0xff] %v449
                %v451 = vld [vmem:[%s395 + $0x198] sm:$0xff]
                %452 = vst [vmem:[%s396 + $0xd8] sm:$0xff] %v451
                %v453 = vld [vmem:[%s395 + $0x1c0] sm:$0xff]
                %454 = vst [vmem:[%s396 + $0xe0] sm:$0xff] %v453
                %v455 = vld [vmem:[%s395 + $0x1c8] sm:$0xff]
                %456 = vst [vmem:[%s396 + $0xe8] sm:$0xff] %v455
                %v457 = vld [vmem:[%s395 + $0x1d0] sm:$0xff]
                %458 = vst [vmem:[%s396 + $0xf0] sm:$0xff] %v457
                %v459 = vld [vmem:[%s395 + $0x1d8] sm:$0xff]
                %460 = vst [vmem:[%s396 + $0xf8] sm:$0xff] %v459
                %v461 = vld [vmem:[%s395 + $0x200] sm:$0xff]
                %462 = vst [vmem:[%s396 + $0x100] sm:$0xff] %v461
                %v463 = vld [vmem:[%s395 + $0x208] sm:$0xff]
                %464 = vst [vmem:[%s396 + $0x108] sm:$0xff] %v463
                %v465 = vld [vmem:[%s395 + $0x210] sm:$0xff]
                %466 = vst [vmem:[%s396 + $0x110] sm:$0xff] %v465
                %v467 = vld [vmem:[%s395 + $0x218] sm:$0xff]
                %468 = vst [vmem:[%s396 + $0x118] sm:$0xff] %v467
                %v469 = vld [vmem:[%s395 + $0x240] sm:$0xff]
                %470 = vst [vmem:[%s396 + $0x120] sm:$0xff] %v469
                %v471 = vld [vmem:[%s395 + $0x248] sm:$0xff]
                %472 = vst [vmem:[%s396 + $0x128] sm:$0xff] %v471
                %v473 = vld [vmem:[%s395 + $0x250] sm:$0xff]
                %474 = vst [vmem:[%s396 + $0x130] sm:$0xff] %v473
                %v475 = vld [vmem:[%s395 + $0x258] sm:$0xff]
                %476 = vst [vmem:[%s396 + $0x138] sm:$0xff] %v475
                %v477 = vld [vmem:[%s395 + $0x280] sm:$0xff]
                %478 = vst [vmem:[%s396 + $0x140] sm:$0xff] %v477
                %v479 = vld [vmem:[%s395 + $0x288] sm:$0xff]
                %480 = vst [vmem:[%s396 + $0x148] sm:$0xff] %v479
                %v481 = vld [vmem:[%s395 + $0x290] sm:$0xff]
                %482 = vst [vmem:[%s396 + $0x150] sm:$0xff] %v481
                %v483 = vld [vmem:[%s395 + $0x298] sm:$0xff]
                %484 = vst [vmem:[%s396 + $0x158] sm:$0xff] %v483
                %v485 = vld [vmem:[%s395 + $0x2c0] sm:$0xff]
                %486 = vst [vmem:[%s396 + $0x160] sm:$0xff] %v485
                %v487 = vld [vmem:[%s395 + $0x2c8] sm:$0xff]
                %488 = vst [vmem:[%s396 + $0x168] sm:$0xff] %v487
                %v489 = vld [vmem:[%s395 + $0x2d0] sm:$0xff]
                %490 = vst [vmem:[%s396 + $0x170] sm:$0xff] %v489
                %v491 = vld [vmem:[%s395 + $0x2d8] sm:$0xff]
                %492 = vst [vmem:[%s396 + $0x178] sm:$0xff] %v491
                %v493 = vld [vmem:[%s395 + $0x300] sm:$0xff]
                %494 = vst [vmem:[%s396 + $0x180] sm:$0xff] %v493
                %v495 = vld [vmem:[%s395 + $0x308] sm:$0xff]
                %496 = vst [vmem:[%s396 + $0x188] sm:$0xff] %v495
                %v497 = vld [vmem:[%s395 + $0x310] sm:$0xff]
                %498 = vst [vmem:[%s396 + $0x190] sm:$0xff] %v497
                %v499 = vld [vmem:[%s395 + $0x318] sm:$0xff]
                %500 = vst [vmem:[%s396 + $0x198] sm:$0xff] %v499
                %v501 = vld [vmem:[%s395 + $0x340] sm:$0xff]
                %502 = vst [vmem:[%s396 + $0x1a0] sm:$0xff] %v501
                %v503 = vld [vmem:[%s395 + $0x348] sm:$0xff]
                %504 = vst [vmem:[%s396 + $0x1a8] sm:$0xff] %v503
                %v505 = vld [vmem:[%s395 + $0x350] sm:$0xff]
                %506 = vst [vmem:[%s396 + $0x1b0] sm:$0xff] %v505
                %v507 = vld [vmem:[%s395 + $0x358] sm:$0xff]
                %508 = vst [vmem:[%s396 + $0x1b8] sm:$0xff] %v507
                %v509 = vld [vmem:[%s395 + $0x380] sm:$0xff]
                %510 = vst [vmem:[%s396 + $0x1c0] sm:$0xff] %v509
                %v511 = vld [vmem:[%s395 + $0x388] sm:$0xff]
                %512 = vst [vmem:[%s396 + $0x1c8] sm:$0xff] %v511
                %v513 = vld [vmem:[%s395 + $0x390] sm:$0xff]
                %514 = vst [vmem:[%s396 + $0x1d0] sm:$0xff] %v513
                %v515 = vld [vmem:[%s395 + $0x398] sm:$0xff]
                %516 = vst [vmem:[%s396 + $0x1d8] sm:$0xff] %v515
                %v517 = vld [vmem:[%s395 + $0x3c0] sm:$0xff]
                %518 = vst [vmem:[%s396 + $0x1e0] sm:$0xff] %v517
                %v519 = vld [vmem:[%s395 + $0x3c8] sm:$0xff]
                %520 = vst [vmem:[%s396 + $0x1e8] sm:$0xff] %v519
                %v521 = vld [vmem:[%s395 + $0x3d0] sm:$0xff]
                %522 = vst [vmem:[%s396 + $0x1f0] sm:$0xff] %v521
                %v523 = vld [vmem:[%s395 + $0x3d8] sm:$0xff]
                %524 = vst [vmem:[%s396 + $0x1f8] sm:$0xff] %v523
              $region95: #{message_passing_nn.6} parent=89 // loop_footer
                %s394 = sadd.s32 1, %s390
              $region96: #{message_passing_nn.6} parent=89 // loop_footer_branch
                %389 = sbr.rel target = $region92
              $region97: #{message_passing_nn.6} parent=89 // loop_exit
                _
            $region90: #{message_passing_nn.6} parent=85 // pred_fallthru
              _
            // Predicated region
            $region98: #{message_passing_nn.6} parent=85 // pred_check
              _
            $region99: #{message_passing_nn.6} parent=85 // pred_check_branch
              %526 = sbr.rel target = $region101
            $region100: #{message_passing_nn.6} parent=85 // pred_region
              _
            $region101: #{message_passing_nn.6} parent=85 // pred_fallthru
              _
          $region86: #{message_passing_nn.6} parent=81 // pred_fallthru
            _
          %527 = vnop
        $region82: #{message_passing_nn.6} parent=31 // pred_fallthru
          _
      $region32: #{message_passing_nn.6} parent=5 // pred_fallthru
        _
      %p528 = scmp.le.s32.totalorder 1, %s15
      %p529 = scmp.lt.s32.totalorder %s15, 5
      %p530 = pnand %p528, %p529
      %p531 = pneg %p530
      // Predicated region
      $region102: #{message_passing_nn.6} parent=5 // pred_check
        _
      $region103: #{message_passing_nn.6} parent=5 // pred_check_branch
        %533 = sbr.rel (%p530) target = $region105
      $region104: #{message_passing_nn.6} parent=5 // pred_region
        %s534 = ssub.s32 %s15, 1
        %s535 = sand.u32 %s40, 1
        %s536 = sand.u32 %s40, 1
        %s537 = smul.addr %s536, 64
        %s538 = scalar_lea.vmem [#allocation3], %s537
        // Predicated region
        $region106: #{message_passing_nn.6} parent=104 // pred_check
          %p539 = pneg %p53
        $region107: #{message_passing_nn.6} parent=104 // pred_check_branch
          %541 = sbr.rel (%p539) target = $region109
        $region108: #{message_passing_nn.6} parent=104 // pred_region
          _
        $region109: #{message_passing_nn.6} parent=104 // pred_fallthru
          _
        %s542 = sand.u32 %s66, 1
        %s543 = sand.u32 %s66, 1
        %s544 = smul.addr %s543, 128
        %s545 = scalar_lea.vmem [#allocation4], %s544
        // Predicated region
        $region110: #{message_passing_nn.6} parent=104 // pred_check
          %p546 = pneg %p79
        $region111: #{message_passing_nn.6} parent=104 // pred_check_branch
          %548 = sbr.rel (%p546) target = $region113
        $region112: #{message_passing_nn.6} parent=104 // pred_region
          _
        $region113: #{message_passing_nn.6} parent=104 // pred_fallthru
          _
        %s549 = sand.u32 %s94, 1
        %s550 = sand.u32 %s94, 1
        %s551 = smul.addr %s550, 512
        %s552 = scalar_lea.vmem [#allocation5], %s551
        // Predicated region
        $region114: #{message_passing_nn.6} parent=104 // pred_check
          %p553 = pneg %p107
        $region115: #{message_passing_nn.6} parent=104 // pred_check_branch
          %555 = sbr.rel (%p553) target = $region117
        $region116: #{message_passing_nn.6} parent=104 // pred_region
          _
        $region117: #{message_passing_nn.6} parent=104 // pred_fallthru
          _
        %s556 = sand.u32 %s40, 1
        %s557 = sand.u32 %s40, 1
        %s558 = smul.addr %s557, 64
        %s559 = scalar_lea.vmem [#allocation3], %s558
        %p560 = pneg %p53
        %p561 = pneg %p50
        %s562 = sand.u32 %s66, 1
        %s563 = sand.u32 %s66, 1
        %s564 = smul.addr %s563, 128
        %s565 = scalar_lea.vmem [#allocation4], %s564
        %p566 = pneg %p79
        %p567 = pneg %p76
        %s568 = sand.u32 %s94, 1
        %s569 = sand.u32 %s94, 1
        %s570 = smul.addr %s569, 512
        %s571 = scalar_lea.vmem [#allocation5], %s570
        %p572 = pneg %p107
        %p573 = pneg %p104
        %p574 = pneg %p128
        %p575 = pneg %p125
        %p576 = pneg %p149
        %p577 = pneg %p146
        %p578 = pneg %p170
        %p579 = pneg %p167
        %p580 = pneg %p191
        %p581 = pneg %p188
        %p582 = pneg %p217
        %p583 = pneg %p214
        %s584 = sand.u32 %s204, 1
        %s585 = sand.u32 %s204, 1
        %s586 = smul.addr %s585, 128
        %s587 = scalar_lea.vmem [#allocation6], %s586
        %p588 = pneg %p243
        %p589 = pneg %p240
        %s590 = sand.u32 %s230, 1
        %s591 = sand.u32 %s230, 1
        %s592 = smul.addr %s591, 64
        %s593 = scalar_lea.vmem [#allocation7], %s592
        %s594 = smul.u32 4, %s25
        %s595 = smul.u32 4, %s24
        %s596 = smul.u32 16, %s25
        %s597 = smul.u32 4, %s24
        %s598 = smul.u32 4, %s24
        %s599 = smul.u32 4, %s24
        %p600 = scmp.eq.s32.totalorder %s25, 0
        // Predicated region
        $region118: #{message_passing_nn.6} parent=104 // pred_check
          %p601 = pneg %p600
        $region119: #{message_passing_nn.6} parent=104 // pred_check_branch
          %603 = sbr.rel (%p601) target = $region121
        $region120: #{message_passing_nn.6} parent=104 // pred_region
          %604 = vst [vmem:[#allocation2] sm:$0xff] 0.0
          %605 = vst [vmem:[#allocation2 + $0x8] sm:$0xff] 0.0
          %606 = vst [vmem:[#allocation2 + $0x10] sm:$0xff] 0.0
          %607 = vst [vmem:[#allocation2 + $0x18] sm:$0xff] 0.0
          %608 = vst [vmem:[#allocation2 + $0x20] sm:$0xff] 0.0
          %609 = vst [vmem:[#allocation2 + $0x28] sm:$0xff] 0.0
          %610 = vst [vmem:[#allocation2 + $0x30] sm:$0xff] 0.0
          %611 = vst [vmem:[#allocation2 + $0x38] sm:$0xff] 0.0
          %612 = vst [vmem:[#allocation2 + $0x40] sm:$0xff] 0.0
          %613 = vst [vmem:[#allocation2 + $0x48] sm:$0xff] 0.0
          %614 = vst [vmem:[#allocation2 + $0x50] sm:$0xff] 0.0
          %615 = vst [vmem:[#allocation2 + $0x58] sm:$0xff] 0.0
          %616 = vst [vmem:[#allocation2 + $0x60] sm:$0xff] 0.0
          %617 = vst [vmem:[#allocation2 + $0x68] sm:$0xff] 0.0
          %618 = vst [vmem:[#allocation2 + $0x70] sm:$0xff] 0.0
          %619 = vst [vmem:[#allocation2 + $0x78] sm:$0xff] 0.0
        $region121: #{message_passing_nn.6} parent=104 // pred_fallthru
          _
        %v620 = vld [vmem:[#allocation2] sm:$0xff]
        %v621 = vld [vmem:[#allocation2 + $0x8] sm:$0xff]
        %v622 = vld [vmem:[#allocation2 + $0x10] sm:$0xff]
        %v623 = vld [vmem:[#allocation2 + $0x18] sm:$0xff]
        %v624 = vld [vmem:[#allocation2 + $0x20] sm:$0xff]
        %v625 = vld [vmem:[#allocation2 + $0x28] sm:$0xff]
        %v626 = vld [vmem:[#allocation2 + $0x30] sm:$0xff]
        %v627 = vld [vmem:[#allocation2 + $0x38] sm:$0xff]
        %v628 = vld [vmem:[#allocation2 + $0x40] sm:$0xff]
        %v629 = vld [vmem:[#allocation2 + $0x48] sm:$0xff]
        %v630 = vld [vmem:[#allocation2 + $0x50] sm:$0xff]
        %v631 = vld [vmem:[#allocation2 + $0x58] sm:$0xff]
        %v632 = vld [vmem:[#allocation2 + $0x60] sm:$0xff]
        %v633 = vld [vmem:[#allocation2 + $0x68] sm:$0xff]
        %v634 = vld [vmem:[#allocation2 + $0x70] sm:$0xff]
        %v635 = vld [vmem:[#allocation2 + $0x78] sm:$0xff]
        %v636 = vld [vmem:[%s538] sm:$0xff]
        %v637 = vld [vmem:[%s538 + $0x8] sm:$0xff]
        %v638 = vld [vmem:[%s538 + $0x10] sm:$0xff]
        %v639 = vld [vmem:[%s538 + $0x18] sm:$0xff]
        %v640 = vld [vmem:[%s538 + $0x20] sm:$0xff]
        %v641 = vld [vmem:[%s538 + $0x28] sm:$0xff]
        %v642 = vld [vmem:[%s538 + $0x30] sm:$0xff]
        %v643 = vld [vmem:[%s538 + $0x38] sm:$0xff]
        %v644 = vld [vmem:[%s552] sm:$0xff]
        %v645 = vld [vmem:[%s552 + $0x8] sm:$0xff]
        %v646 = vld [vmem:[%s552 + $0x10] sm:$0xff]
        %v647 = vld [vmem:[%s552 + $0x18] sm:$0xff]
        %v648 = vld [vmem:[%s552 + $0x20] sm:$0xff]
        %v649 = vld [vmem:[%s552 + $0x28] sm:$0xff]
        %v650 = vld [vmem:[%s552 + $0x30] sm:$0xff]
        %v651 = vld [vmem:[%s552 + $0x38] sm:$0xff]
        %v652 = vld [vmem:[%s552 + $0x40] sm:$0xff]
        %v653 = vld [vmem:[%s552 + $0x48] sm:$0xff]
        %v654 = vld [vmem:[%s552 + $0x50] sm:$0xff]
        %v655 = vld [vmem:[%s552 + $0x58] sm:$0xff]
        %v656 = vld [vmem:[%s552 + $0x60] sm:$0xff]
        %v657 = vld [vmem:[%s552 + $0x68] sm:$0xff]
        %v658 = vld [vmem:[%s552 + $0x70] sm:$0xff]
        %v659 = vld [vmem:[%s552 + $0x78] sm:$0xff]
        %v660 = vld [vmem:[%s552 + $0x80] sm:$0xff]
        %v661 = vld [vmem:[%s552 + $0x88] sm:$0xff]
        %v662 = vld [vmem:[%s552 + $0x90] sm:$0xff]
        %v663 = vld [vmem:[%s552 + $0x98] sm:$0xff]
        %v664 = vld [vmem:[%s552 + $0xa0] sm:$0xff]
        %v665 = vld [vmem:[%s552 + $0xa8] sm:$0xff]
        %v666 = vld [vmem:[%s552 + $0xb0] sm:$0xff]
        %v667 = vld [vmem:[%s552 + $0xb8] sm:$0xff]
        %v668 = vld [vmem:[%s552 + $0xc0] sm:$0xff]
        %v669 = vld [vmem:[%s552 + $0xc8] sm:$0xff]
        %v670 = vld [vmem:[%s552 + $0xd0] sm:$0xff]
        %v671 = vld [vmem:[%s552 + $0xd8] sm:$0xff]
        %v672 = vld [vmem:[%s552 + $0xe0] sm:$0xff]
        %v673 = vld [vmem:[%s552 + $0xe8] sm:$0xff]
        %v674 = vld [vmem:[%s552 + $0xf0] sm:$0xff]
        %v675 = vld [vmem:[%s552 + $0xf8] sm:$0xff]
        %v676 = vld [vmem:[%s552 + $0x100] sm:$0xff]
        %v677 = vld [vmem:[%s552 + $0x108] sm:$0xff]
        %v678 = vld [vmem:[%s552 + $0x110] sm:$0xff]
        %v679 = vld [vmem:[%s552 + $0x118] sm:$0xff]
        %v680 = vld [vmem:[%s552 + $0x120] sm:$0xff]
        %v681 = vld [vmem:[%s552 + $0x128] sm:$0xff]
        %v682 = vld [vmem:[%s552 + $0x130] sm:$0xff]
        %v683 = vld [vmem:[%s552 + $0x138] sm:$0xff]
        %v684 = vld [vmem:[%s552 + $0x140] sm:$0xff]
        %v685 = vld [vmem:[%s552 + $0x148] sm:$0xff]
        %v686 = vld [vmem:[%s552 + $0x150] sm:$0xff]
        %v687 = vld [vmem:[%s552 + $0x158] sm:$0xff]
        %v688 = vld [vmem:[%s552 + $0x160] sm:$0xff]
        %v689 = vld [vmem:[%s552 + $0x168] sm:$0xff]
        %v690 = vld [vmem:[%s552 + $0x170] sm:$0xff]
        %v691 = vld [vmem:[%s552 + $0x178] sm:$0xff]
        %v692 = vld [vmem:[%s552 + $0x180] sm:$0xff]
        %v693 = vld [vmem:[%s552 + $0x188] sm:$0xff]
        %v694 = vld [vmem:[%s552 + $0x190] sm:$0xff]
        %v695 = vld [vmem:[%s552 + $0x198] sm:$0xff]
        %v696 = vld [vmem:[%s552 + $0x1a0] sm:$0xff]
        %v697 = vld [vmem:[%s552 + $0x1a8] sm:$0xff]
        %v698 = vld [vmem:[%s552 + $0x1b0] sm:$0xff]
        %v699 = vld [vmem:[%s552 + $0x1b8] sm:$0xff]
        %v700 = vld [vmem:[%s552 + $0x1c0] sm:$0xff]
        %v701 = vld [vmem:[%s552 + $0x1c8] sm:$0xff]
        %v702 = vld [vmem:[%s552 + $0x1d0] sm:$0xff]
        %v703 = vld [vmem:[%s552 + $0x1d8] sm:$0xff]
        %v704 = vld [vmem:[%s552 + $0x1e0] sm:$0xff]
        %v705 = vld [vmem:[%s552 + $0x1e8] sm:$0xff]
        %v706 = vld [vmem:[%s552 + $0x1f0] sm:$0xff]
        %v707 = vld [vmem:[%s552 + $0x1f8] sm:$0xff]
        %v708 = vunpack.c.l.s8.bf16 %v644
        %v709 = vunpack.c.l.s8.bf16 %v645
        %v710 = vunpack.c.l.s8.bf16 %v646
        %v711 = vunpack.c.l.s8.bf16 %v647
        %v712 = vunpack.c.h.s8.bf16 %v644
        %v713 = vunpack.c.h.s8.bf16 %v645
        %v714 = vunpack.c.h.s8.bf16 %v646
        %v715 = vunpack.c.h.s8.bf16 %v647
        %v716 = vunpack.c.l.s8.bf16 %v648
        %v717 = vunpack.c.l.s8.bf16 %v649
        %v718 = vunpack.c.l.s8.bf16 %v650
        %v719 = vunpack.c.l.s8.bf16 %v651
        %v720 = vunpack.c.h.s8.bf16 %v648
        %v721 = vunpack.c.h.s8.bf16 %v649
        %v722 = vunpack.c.h.s8.bf16 %v650
        %v723 = vunpack.c.h.s8.bf16 %v651
        %v724 = vunpack.c.l.s8.bf16 %v652
        %v725 = vunpack.c.l.s8.bf16 %v653
        %v726 = vunpack.c.l.s8.bf16 %v654
        %v727 = vunpack.c.l.s8.bf16 %v655
        %v728 = vunpack.c.h.s8.bf16 %v652
        %v729 = vunpack.c.h.s8.bf16 %v653
        %v730 = vunpack.c.h.s8.bf16 %v654
        %v731 = vunpack.c.h.s8.bf16 %v655
        %v732 = vunpack.c.l.s8.bf16 %v656
        %v733 = vunpack.c.l.s8.bf16 %v657
        %v734 = vunpack.c.l.s8.bf16 %v658
        %v735 = vunpack.c.l.s8.bf16 %v659
        %v736 = vunpack.c.h.s8.bf16 %v656
        %v737 = vunpack.c.h.s8.bf16 %v657
        %v738 = vunpack.c.h.s8.bf16 %v658
        %v739 = vunpack.c.h.s8.bf16 %v659
        %v740 = vunpack.c.l.s8.bf16 %v660
        %v741 = vunpack.c.l.s8.bf16 %v661
        %v742 = vunpack.c.l.s8.bf16 %v662
        %v743 = vunpack.c.l.s8.bf16 %v663
        %v744 = vunpack.c.h.s8.bf16 %v660
        %v745 = vunpack.c.h.s8.bf16 %v661
        %v746 = vunpack.c.h.s8.bf16 %v662
        %v747 = vunpack.c.h.s8.bf16 %v663
        %v748 = vunpack.c.l.s8.bf16 %v664
        %v749 = vunpack.c.l.s8.bf16 %v665
        %v750 = vunpack.c.l.s8.bf16 %v666
        %v751 = vunpack.c.l.s8.bf16 %v667
        %v752 = vunpack.c.h.s8.bf16 %v664
        %v753 = vunpack.c.h.s8.bf16 %v665
        %v754 = vunpack.c.h.s8.bf16 %v666
        %v755 = vunpack.c.h.s8.bf16 %v667
        %v756 = vunpack.c.l.s8.bf16 %v668
        %v757 = vunpack.c.l.s8.bf16 %v669
        %v758 = vunpack.c.l.s8.bf16 %v670
        %v759 = vunpack.c.l.s8.bf16 %v671
        %v760 = vunpack.c.h.s8.bf16 %v668
        %v761 = vunpack.c.h.s8.bf16 %v669
        %v762 = vunpack.c.h.s8.bf16 %v670
        %v763 = vunpack.c.h.s8.bf16 %v671
        %v764 = vunpack.c.l.s8.bf16 %v672
        %v765 = vunpack.c.l.s8.bf16 %v673
        %v766 = vunpack.c.l.s8.bf16 %v674
        %v767 = vunpack.c.l.s8.bf16 %v675
        %v768 = vunpack.c.h.s8.bf16 %v672
        %v769 = vunpack.c.h.s8.bf16 %v673
        %v770 = vunpack.c.h.s8.bf16 %v674
        %v771 = vunpack.c.h.s8.bf16 %v675
        %v772 = vunpack.c.l.s8.bf16 %v676
        %v773 = vunpack.c.l.s8.bf16 %v677
        %v774 = vunpack.c.l.s8.bf16 %v678
        %v775 = vunpack.c.l.s8.bf16 %v679
        %v776 = vunpack.c.h.s8.bf16 %v676
        %v777 = vunpack.c.h.s8.bf16 %v677
        %v778 = vunpack.c.h.s8.bf16 %v678
        %v779 = vunpack.c.h.s8.bf16 %v679
        %v780 = vunpack.c.l.s8.bf16 %v680
        %v781 = vunpack.c.l.s8.bf16 %v681
        %v782 = vunpack.c.l.s8.bf16 %v682
        %v783 = vunpack.c.l.s8.bf16 %v683
        %v784 = vunpack.c.h.s8.bf16 %v680
        %v785 = vunpack.c.h.s8.bf16 %v681
        %v786 = vunpack.c.h.s8.bf16 %v682
        %v787 = vunpack.c.h.s8.bf16 %v683
        %v788 = vunpack.c.l.s8.bf16 %v684
        %v789 = vunpack.c.l.s8.bf16 %v685
        %v790 = vunpack.c.l.s8.bf16 %v686
        %v791 = vunpack.c.l.s8.bf16 %v687
        %v792 = vunpack.c.h.s8.bf16 %v684
        %v793 = vunpack.c.h.s8.bf16 %v685
        %v794 = vunpack.c.h.s8.bf16 %v686
        %v795 = vunpack.c.h.s8.bf16 %v687
        %v796 = vunpack.c.l.s8.bf16 %v688
        %v797 = vunpack.c.l.s8.bf16 %v689
        %v798 = vunpack.c.l.s8.bf16 %v690
        %v799 = vunpack.c.l.s8.bf16 %v691
        %v800 = vunpack.c.h.s8.bf16 %v688
        %v801 = vunpack.c.h.s8.bf16 %v689
        %v802 = vunpack.c.h.s8.bf16 %v690
        %v803 = vunpack.c.h.s8.bf16 %v691
        %v804 = vunpack.c.l.s8.bf16 %v692
        %v805 = vunpack.c.l.s8.bf16 %v693
        %v806 = vunpack.c.l.s8.bf16 %v694
        %v807 = vunpack.c.l.s8.bf16 %v695
        %v808 = vunpack.c.h.s8.bf16 %v692
        %v809 = vunpack.c.h.s8.bf16 %v693
        %v810 = vunpack.c.h.s8.bf16 %v694
        %v811 = vunpack.c.h.s8.bf16 %v695
        %v812 = vunpack.c.l.s8.bf16 %v696
        %v813 = vunpack.c.l.s8.bf16 %v697
        %v814 = vunpack.c.l.s8.bf16 %v698
        %v815 = vunpack.c.l.s8.bf16 %v699
        %v816 = vunpack.c.h.s8.bf16 %v696
        %v817 = vunpack.c.h.s8.bf16 %v697
        %v818 = vunpack.c.h.s8.bf16 %v698
        %v819 = vunpack.c.h.s8.bf16 %v699
        %v820 = vunpack.c.l.s8.bf16 %v700
        %v821 = vunpack.c.l.s8.bf16 %v701
        %v822 = vunpack.c.l.s8.bf16 %v702
        %v823 = vunpack.c.l.s8.bf16 %v703
        %v824 = vunpack.c.h.s8.bf16 %v700
        %v825 = vunpack.c.h.s8.bf16 %v701
        %v826 = vunpack.c.h.s8.bf16 %v702
        %v827 = vunpack.c.h.s8.bf16 %v703
        %v828 = vunpack.c.l.s8.bf16 %v704
        %v829 = vunpack.c.l.s8.bf16 %v705
        %v830 = vunpack.c.l.s8.bf16 %v706
        %v831 = vunpack.c.l.s8.bf16 %v707
        %v832 = vunpack.c.h.s8.bf16 %v704
        %v833 = vunpack.c.h.s8.bf16 %v705
        %v834 = vunpack.c.h.s8.bf16 %v706
        %v835 = vunpack.c.h.s8.bf16 %v707
        %v844 = vunpack.c.l.b16 %v636
        %v845 = vunpack.c.h.b16 %v636
        %v846 = vunpack.c.l.b16 %v637
        %v847 = vunpack.c.h.b16 %v637
        %v848 = vunpack.c.l.b16 %v638
        %v849 = vunpack.c.h.b16 %v638
        %v850 = vunpack.c.l.b16 %v639
        %v851 = vunpack.c.h.b16 %v639
        %v852 = vunpack.c.l.b16 %v640
        %v853 = vunpack.c.h.b16 %v640
        %v854 = vunpack.c.l.b16 %v641
        %v855 = vunpack.c.h.b16 %v641
        %v856 = vunpack.c.l.b16 %v642
        %v857 = vunpack.c.h.b16 %v642
        %v858 = vunpack.c.l.b16 %v643
        %v859 = vunpack.c.h.b16 %v643
        %v860 = vpack.c.b16 %v848, %v844
        %v861 = vpack.c.b16 %v849, %v845
        %v862 = vpack.c.b16 %v850, %v846
        %v863 = vpack.c.b16 %v851, %v847
        %v864 = vpack.c.b16 %v856, %v852
        %v865 = vpack.c.b16 %v857, %v853
        %v866 = vpack.c.b16 %v858, %v854
        %v867 = vpack.c.b16 %v859, %v855
        %876 = vmatprep.subr.bf16.mxu0 %v709
        %877 = vmatpush1.bf16.msra.mxu0 %v708
        %878 = vmatprep.subr.bf16.mxu0 %v713
        %879 = vmatpush1.bf16.msra.mxu0 %v712
        %880 = vmatprep.subr.bf16.mxu0 %v717
        %881 = vmatpush1.bf16.msra.mxu0 %v716
        %882 = vmatprep.subr.bf16.mxu0 %v721
        %883 = vmatpush1.bf16.msra.mxu0 %v720
        %884 = vmatprep.subr.bf16.mxu0 %v725
        %885 = vmatpush1.bf16.msra.mxu0 %v724
        %886 = vmatprep.subr.bf16.mxu0 %v729
        %887 = vmatpush1.bf16.msra.mxu0 %v728
        %888 = vmatprep.subr.bf16.mxu0 %v733
        %889 = vmatpush1.bf16.msra.mxu0 %v732
        %890 = vmatprep.subr.bf16.mxu0 %v737
        %891 = vmatpush1.bf16.msra.mxu0 %v736
        %892 = vmatprep.subr.bf16.mxu0 %v741
        %893 = vmatpush1.bf16.msra.mxu0 %v740
        %894 = vmatprep.subr.bf16.mxu0 %v745
        %895 = vmatpush1.bf16.msra.mxu0 %v744
        %896 = vmatprep.subr.bf16.mxu0 %v749
        %897 = vmatpush1.bf16.msra.mxu0 %v748
        %898 = vmatprep.subr.bf16.mxu0 %v753
        %899 = vmatpush1.bf16.msra.mxu0 %v752
        %900 = vmatprep.subr.bf16.mxu0 %v757
        %901 = vmatpush1.bf16.msra.mxu0 %v756
        %902 = vmatprep.subr.bf16.mxu0 %v761
        %903 = vmatpush1.bf16.msra.mxu0 %v760
        %904 = vmatprep.subr.bf16.mxu0 %v765
        %905 = vmatpush1.bf16.msra.mxu0 %v764
        %906 = vmatprep.subr.bf16.mxu0 %v769
        %907 = vmatpush1.bf16.msra.mxu0 %v768
        %908 = vmatprep.mubr.bf16.mxu0 %v861
        %909 = vmatmul.mubr.bf16.gmra.mrb[0].mxu0 %v860
        %v910 = vpop.f32.mrb[0].mxu0
        %v911 = vadd.f32 0.0, %v910
        %v912 = vpop.f32.mrb[0].mxu0
        %v913 = vadd.f32 0.0, %v912
        %v914 = vpop.f32.mrb[0].mxu0
        %v915 = vadd.f32 0.0, %v914
        %v916 = vpop.f32.mrb[0].mxu0
        %v917 = vadd.f32 0.0, %v916
        %918 = vmatprep.mubr.bf16.mxu0 %v865
        %919 = vmatmul.mubr.bf16.gmra.mrb[0].mxu0 %v864
        %v920 = vpop.f32.mrb[0].mxu0
        %v921 = vadd.f32 0.0, %v920
        %v922 = vpop.f32.mrb[0].mxu0
        %v923 = vadd.f32 0.0, %v922
        %v924 = vpop.f32.mrb[0].mxu0
        %v925 = vadd.f32 0.0, %v924
        %v926 = vpop.f32.mrb[0].mxu0
        %v927 = vadd.f32 0.0, %v926
        %928 = vdwg.mxu0
        %929 = vmatprep.subr.bf16.mxu0 %v773
        %930 = vmatpush1.bf16.msra.mxu0 %v772
        %931 = vmatprep.subr.bf16.mxu0 %v777
        %932 = vmatpush1.bf16.msra.mxu0 %v776
        %933 = vmatprep.subr.bf16.mxu0 %v781
        %934 = vmatpush1.bf16.msra.mxu0 %v780
        %935 = vmatprep.subr.bf16.mxu0 %v785
        %936 = vmatpush1.bf16.msra.mxu0 %v784
        %937 = vmatprep.subr.bf16.mxu0 %v789
        %938 = vmatpush1.bf16.msra.mxu0 %v788
        %939 = vmatprep.subr.bf16.mxu0 %v793
        %940 = vmatpush1.bf16.msra.mxu0 %v792
        %941 = vmatprep.subr.bf16.mxu0 %v797
        %942 = vmatpush1.bf16.msra.mxu0 %v796
        %943 = vmatprep.subr.bf16.mxu0 %v801
        %944 = vmatpush1.bf16.msra.mxu0 %v800
        %945 = vmatprep.subr.bf16.mxu0 %v805
        %946 = vmatpush1.bf16.msra.mxu0 %v804
        %947 = vmatprep.subr.bf16.mxu0 %v809
        %948 = vmatpush1.bf16.msra.mxu0 %v808
        %949 = vmatprep.subr.bf16.mxu0 %v813
        %950 = vmatpush1.bf16.msra.mxu0 %v812
        %951 = vmatprep.subr.bf16.mxu0 %v817
        %952 = vmatpush1.bf16.msra.mxu0 %v816
        %953 = vmatprep.subr.bf16.mxu0 %v821
        %954 = vmatpush1.bf16.msra.mxu0 %v820
        %955 = vmatprep.subr.bf16.mxu0 %v825
        %956 = vmatpush1.bf16.msra.mxu0 %v824
        %957 = vmatprep.subr.bf16.mxu0 %v829
        %958 = vmatpush1.bf16.msra.mxu0 %v828
        %959 = vmatprep.subr.bf16.mxu0 %v833
        %960 = vmatpush1.bf16.msra.mxu0 %v832
        %961 = vmatprep.mubr.bf16.mxu0 %v863
        %962 = vmatmul.mubr.bf16.gmra.mrb[0].mxu0 %v862
        %v963 = vpop.f32.mrb[0].mxu0
        %v964 = vadd.f32 %v911, %v963
        %v965 = vpop.f32.mrb[0].mxu0
        %v966 = vadd.f32 %v913, %v965
        %v967 = vpop.f32.mrb[0].mxu0
        %v968 = vadd.f32 %v915, %v967
        %v969 = vpop.f32.mrb[0].mxu0
        %v970 = vadd.f32 %v917, %v969
        %971 = vmatprep.mubr.bf16.mxu0 %v867
        %972 = vmatmul.mubr.bf16.gmra.mrb[0].mxu0 %v866
        %v973 = vpop.f32.mrb[0].mxu0
        %v974 = vadd.f32 %v921, %v973
        %v975 = vpop.f32.mrb[0].mxu0
        %v976 = vadd.f32 %v923, %v975
        %v977 = vpop.f32.mrb[0].mxu0
        %v978 = vadd.f32 %v925, %v977
        %v979 = vpop.f32.mrb[0].mxu0
        %v980 = vadd.f32 %v927, %v979
        %981 = vdwg.mxu0
        %982 = vmatprep.subr.bf16.mxu0 %v711
        %983 = vmatpush1.bf16.msra.mxu0 %v710
        %984 = vmatprep.subr.bf16.mxu0 %v715
        %985 = vmatpush1.bf16.msra.mxu0 %v714
        %986 = vmatprep.subr.bf16.mxu0 %v719
        %987 = vmatpush1.bf16.msra.mxu0 %v718
        %988 = vmatprep.subr.bf16.mxu0 %v723
        %989 = vmatpush1.bf16.msra.mxu0 %v722
        %990 = vmatprep.subr.bf16.mxu0 %v727
        %991 = vmatpush1.bf16.msra.mxu0 %v726
        %992 = vmatprep.subr.bf16.mxu0 %v731
        %993 = vmatpush1.bf16.msra.mxu0 %v730
        %994 = vmatprep.subr.bf16.mxu0 %v735
        %995 = vmatpush1.bf16.msra.mxu0 %v734
        %996 = vmatprep.subr.bf16.mxu0 %v739
        %997 = vmatpush1.bf16.msra.mxu0 %v738
        %998 = vmatprep.subr.bf16.mxu0 %v743
        %999 = vmatpush1.bf16.msra.mxu0 %v742
        %1000 = vmatprep.subr.bf16.mxu0 %v747
        %1001 = vmatpush1.bf16.msra.mxu0 %v746
        %1002 = vmatprep.subr.bf16.mxu0 %v751
        %1003 = vmatpush1.bf16.msra.mxu0 %v750
        %1004 = vmatprep.subr.bf16.mxu0 %v755
        %1005 = vmatpush1.bf16.msra.mxu0 %v754
        %1006 = vmatprep.subr.bf16.mxu0 %v759
        %1007 = vmatpush1.bf16.msra.mxu0 %v758
        %1008 = vmatprep.subr.bf16.mxu0 %v763
        %1009 = vmatpush1.bf16.msra.mxu0 %v762
        %1010 = vmatprep.subr.bf16.mxu0 %v767
        %1011 = vmatpush1.bf16.msra.mxu0 %v766
        %1012 = vmatprep.subr.bf16.mxu0 %v771
        %1013 = vmatpush1.bf16.msra.mxu0 %v770
        %1014 = vmatprep.mubr.bf16.mxu0 %v861
        %1015 = vmatmul.mubr.bf16.gmra.mrb[0].mxu0 %v860
        %v1016 = vpop.f32.mrb[0].mxu0
        %v1017 = vadd.f32 0.0, %v1016
        %v1018 = vpop.f32.mrb[0].mxu0
        %v1019 = vadd.f32 0.0, %v1018
        %v1020 = vpop.f32.mrb[0].mxu0
        %v1021 = vadd.f32 0.0, %v1020
        %v1022 = vpop.f32.mrb[0].mxu0
        %v1023 = vadd.f32 0.0, %v1022
        %1024 = vmatprep.mubr.bf16.mxu0 %v865
        %1025 = vmatmul.mubr.bf16.gmra.mrb[0].mxu0 %v864
        %v1026 = vpop.f32.mrb[0].mxu0
        %v1027 = vadd.f32 0.0, %v1026
        %v1028 = vpop.f32.mrb[0].mxu0
        %v1029 = vadd.f32 0.0, %v1028
        %v1030 = vpop.f32.mrb[0].mxu0
        %v1031 = vadd.f32 0.0, %v1030
        %v1032 = vpop.f32.mrb[0].mxu0
        %v1033 = vadd.f32 0.0, %v1032
        %1034 = vdwg.mxu0
        %1035 = vmatprep.subr.bf16.mxu0 %v775
        %1036 = vmatpush1.bf16.msra.mxu0 %v774
        %1037 = vmatprep.subr.bf16.mxu0 %v779
        %1038 = vmatpush1.bf16.msra.mxu0 %v778
        %1039 = vmatprep.subr.bf16.mxu0 %v783
        %1040 = vmatpush1.bf16.msra.mxu0 %v782
        %1041 = vmatprep.subr.bf16.mxu0 %v787
        %1042 = vmatpush1.bf16.msra.mxu0 %v786
        %1043 = vmatprep.subr.bf16.mxu0 %v791
        %1044 = vmatpush1.bf16.msra.mxu0 %v790
        %1045 = vmatprep.subr.bf16.mxu0 %v795
        %1046 = vmatpush1.bf16.msra.mxu0 %v794
        %1047 = vmatprep.subr.bf16.mxu0 %v799
        %1048 = vmatpush1.bf16.msra.mxu0 %v798
        %1049 = vmatprep.subr.bf16.mxu0 %v803
        %1050 = vmatpush1.bf16.msra.mxu0 %v802
        %1051 = vmatprep.subr.bf16.mxu0 %v807
        %1052 = vmatpush1.bf16.msra.mxu0 %v806
        %1053 = vmatprep.subr.bf16.mxu0 %v811
        %1054 = vmatpush1.bf16.msra.mxu0 %v810
        %1055 = vmatprep.subr.bf16.mxu0 %v815
        %1056 = vmatpush1.bf16.msra.mxu0 %v814
        %1057 = vmatprep.subr.bf16.mxu0 %v819
        %1058 = vmatpush1.bf16.msra.mxu0 %v818
        %1059 = vmatprep.subr.bf16.mxu0 %v823
        %1060 = vmatpush1.bf16.msra.mxu0 %v822
        %1061 = vmatprep.subr.bf16.mxu0 %v827
        %1062 = vmatpush1.bf16.msra.mxu0 %v826
        %1063 = vmatprep.subr.bf16.mxu0 %v831
        %1064 = vmatpush1.bf16.msra.mxu0 %v830
        %1065 = vmatprep.subr.bf16.mxu0 %v835
        %1066 = vmatpush1.bf16.msra.mxu0 %v834
        %1067 = vmatprep.mubr.bf16.mxu0 %v863
        %1068 = vmatmul.mubr.bf16.gmra.mrb[0].mxu0 %v862
        %v1069 = vpop.f32.mrb[0].mxu0
        %v1070 = vadd.f32 %v1017, %v1069
        %v1071 = vpop.f32.mrb[0].mxu0
        %v1072 = vadd.f32 %v1019, %v1071
        %v1073 = vpop.f32.mrb[0].mxu0
        %v1074 = vadd.f32 %v1021, %v1073
        %v1075 = vpop.f32.mrb[0].mxu0
        %v1076 = vadd.f32 %v1023, %v1075
        %1077 = vmatprep.mubr.bf16.mxu0 %v867
        %1078 = vmatmul.mubr.bf16.gmra.mrb[0].mxu0 %v866
        %v1079 = vpop.f32.mrb[0].mxu0
        %v1080 = vadd.f32 %v1027, %v1079
        %v1081 = vpop.f32.mrb[0].mxu0
        %v1082 = vadd.f32 %v1029, %v1081
        %v1083 = vpop.f32.mrb[0].mxu0
        %v1084 = vadd.f32 %v1031, %v1083
        %v1085 = vpop.f32.mrb[0].mxu0
        %v1086 = vadd.f32 %v1033, %v1085
        %1087 = vdwg.mxu0
        %v1088 = vadd.f32 %v620, %v964
        %v1089 = vadd.f32 %v621, %v966
        %v1090 = vadd.f32 %v622, %v1070
        %v1091 = vadd.f32 %v623, %v1072
        %v1092 = vadd.f32 %v624, %v968
        %v1093 = vadd.f32 %v625, %v970
        %v1094 = vadd.f32 %v626, %v1074
        %v1095 = vadd.f32 %v627, %v1076
        %v1096 = vadd.f32 %v628, %v974
        %v1097 = vadd.f32 %v629, %v976
        %v1098 = vadd.f32 %v630, %v1080
        %v1099 = vadd.f32 %v631, %v1082
        %v1100 = vadd.f32 %v632, %v978
        %v1101 = vadd.f32 %v633, %v980
        %v1102 = vadd.f32 %v634, %v1084
        %v1103 = vadd.f32 %v635, %v1086
        %1104 = vst [vmem:[#allocation2] sm:$0xff] %v1088
        %1105 = vst [vmem:[#allocation2 + $0x8] sm:$0xff] %v1089
        %1106 = vst [vmem:[#allocation2 + $0x10] sm:$0xff] %v1090
        %1107 = vst [vmem:[#allocation2 + $0x18] sm:$0xff] %v1091
        %1108 = vst [vmem:[#allocation2 + $0x20] sm:$0xff] %v1092
        %1109 = vst [vmem:[#allocation2 + $0x28] sm:$0xff] %v1093
        %1110 = vst [vmem:[#allocation2 + $0x30] sm:$0xff] %v1094
        %1111 = vst [vmem:[#allocation2 + $0x38] sm:$0xff] %v1095
        %1112 = vst [vmem:[#allocation2 + $0x40] sm:$0xff] %v1096
        %1113 = vst [vmem:[#allocation2 + $0x48] sm:$0xff] %v1097
        %1114 = vst [vmem:[#allocation2 + $0x50] sm:$0xff] %v1098
        %1115 = vst [vmem:[#allocation2 + $0x58] sm:$0xff] %v1099
        %1116 = vst [vmem:[#allocation2 + $0x60] sm:$0xff] %v1100
        %1117 = vst [vmem:[#allocation2 + $0x68] sm:$0xff] %v1101
        %1118 = vst [vmem:[#allocation2 + $0x70] sm:$0xff] %v1102
        %1119 = vst [vmem:[#allocation2 + $0x78] sm:$0xff] %v1103
        %p1120 = scmp.eq.s32.totalorder %s25, 1
        // Predicated region
        $region122: #{message_passing_nn.6} parent=104 // pred_check
          %p1121 = pneg %p1120
        $region123: #{message_passing_nn.6} parent=104 // pred_check_branch
          %1123 = sbr.rel (%p1121) target = $region125
        $region124: #{message_passing_nn.6} parent=104 // pred_region
          %v1124 = vld [vmem:[%s3] sm:$0xff]
          %v1125 = vld [vmem:[%s3 + $0x8] sm:$0xff]
          %v1126 = vld [vmem:[%s3 + $0x10] sm:$0xff]
          %v1127 = vld [vmem:[%s3 + $0x18] sm:$0xff]
          %v1128 = vld [vmem:[#allocation2] sm:$0xff]
          %v1129 = vld [vmem:[#allocation2 + $0x8] sm:$0xff]
          %v1130 = vld [vmem:[#allocation2 + $0x10] sm:$0xff]
          %v1131 = vld [vmem:[#allocation2 + $0x18] sm:$0xff]
          %v1132 = vld [vmem:[#allocation2 + $0x20] sm:$0xff]
          %v1133 = vld [vmem:[#allocation2 + $0x28] sm:$0xff]
          %v1134 = vld [vmem:[#allocation2 + $0x30] sm:$0xff]
          %v1135 = vld [vmem:[#allocation2 + $0x38] sm:$0xff]
          %v1136 = vld [vmem:[#allocation2 + $0x40] sm:$0xff]
          %v1137 = vld [vmem:[#allocation2 + $0x48] sm:$0xff]
          %v1138 = vld [vmem:[#allocation2 + $0x50] sm:$0xff]
          %v1139 = vld [vmem:[#allocation2 + $0x58] sm:$0xff]
          %v1140 = vld [vmem:[#allocation2 + $0x60] sm:$0xff]
          %v1141 = vld [vmem:[#allocation2 + $0x68] sm:$0xff]
          %v1142 = vld [vmem:[#allocation2 + $0x70] sm:$0xff]
          %v1143 = vld [vmem:[#allocation2 + $0x78] sm:$0xff]
          %v1144 = vld [vmem:[%s4] sm:$0xff]
          %v1145 = vld [vmem:[%s4 + $0x8] sm:$0xff]
          %v1146 = vld [vmem:[%s4 + $0x10] sm:$0xff]
          %v1147 = vld [vmem:[%s4 + $0x18] sm:$0xff]
          %1149 = vset.pattern.permute.xlu0 0
          %1150 = vperm.xlu0 %1149, %v1144
          %v1151 = vpop.permute.xlu0 %1150
          %1154 = vset.pattern.permute.xlu0 0
          %1155 = vperm.xlu0 %1154, %v1145
          %v1156 = vpop.permute.xlu0 %1155
          %1159 = vset.pattern.permute.xlu0 0
          %1160 = vperm.xlu0 %1159, %v1146
          %v1161 = vpop.permute.xlu0 %1160
          %1164 = vset.pattern.permute.xlu0 0
          %1165 = vperm.xlu0 %1164, %v1147
          %v1166 = vpop.permute.xlu0 %1165
          %vm1168 = vcmask 261120
          %v1170 = vsel %vm1168, %v1124, 0
          %v1173 = vsel %vm1168, %v1125, 0
          %v1176 = vsel %vm1168, %v1126, 0
          %v1179 = vsel %vm1168, %v1127, 0
          %1181 = vmatprep.subr.mxu0 %v1129
          %1182 = vmatpush1.msra.mxu0 %v1128
          %1183 = vmatprep.subr.mxu0 %v1133
          %1184 = vmatpush1.msra.mxu0 %v1132
          %1185 = vmatprep.subr.mxu0 %v1137
          %1186 = vmatpush1.msra.mxu0 %v1136
          %1187 = vmatprep.subr.mxu0 %v1141
          %1188 = vmatpush1.msra.mxu0 %v1140
          %1189 = vmatprep.subr.mxu0 0.0
          %1190 = vmatpush1.msra.mxu0 0.0
          %1191 = vmatprep.subr.mxu0 0.0
          %1192 = vmatpush1.msra.mxu0 0.0
          %1193 = vmatprep.subr.mxu0 0.0
          %1194 = vmatpush1.msra.mxu0 0.0
          %1195 = vmatprep.subr.mxu0 0.0
          %1196 = vmatpush1.msra.mxu0 0.0
          %1197 = vmatprep.subr.mxu0 0.0
          %1198 = vmatpush1.msra.mxu0 0.0
          %1199 = vmatprep.subr.mxu0 0.0
          %1200 = vmatpush1.msra.mxu0 0.0
          %1201 = vmatprep.subr.mxu0 0.0
          %1202 = vmatpush1.msra.mxu0 0.0
          %1203 = vmatprep.subr.mxu0 0.0
          %1204 = vmatpush1.msra.mxu0 0.0
          %1205 = vmatprep.subr.mxu0 0.0
          %1206 = vmatpush1.msra.mxu0 0.0
          %1207 = vmatprep.subr.mxu0 0.0
          %1208 = vmatpush1.msra.mxu0 0.0
          %1209 = vmatprep.subr.mxu0 0.0
          %1210 = vmatpush1.msra.mxu0 0.0
          %1211 = vmatprep.subr.mxu0 0.0
          %1212 = vmatpush1.msra.mxu0 0.0
          %1213 = vmatprep.subr.mxu0 0.0
          %1214 = vmatpush1.msra.mxu0 0.0
          %1215 = vmatprep.subr.mxu0 0.0
          %1216 = vmatpush1.msra.mxu0 0.0
          %1217 = vmatprep.subr.mxu0 0.0
          %1218 = vmatpush1.msra.mxu0 0.0
          %1219 = vmatprep.subr.mxu0 0.0
          %1220 = vmatpush1.msra.mxu0 0.0
          %1221 = vmatprep.subr.mxu0 0.0
          %1222 = vmatpush1.msra.mxu0 0.0
          %1223 = vmatprep.subr.mxu0 0.0
          %1224 = vmatpush1.msra.mxu0 0.0
          %1225 = vmatprep.subr.mxu0 0.0
          %1226 = vmatpush1.msra.mxu0 0.0
          %1227 = vmatprep.subr.mxu0 0.0
          %1228 = vmatpush1.msra.mxu0 0.0
          %1229 = vmatprep.subr.mxu0 0.0
          %1230 = vmatpush1.msra.mxu0 0.0
          %1231 = vmatprep.subr.mxu0 0.0
          %1232 = vmatpush1.msra.mxu0 0.0
          %1233 = vmatprep.subr.mxu0 0.0
          %1234 = vmatpush1.msra.mxu0 0.0
          %1235 = vmatprep.subr.mxu0 0.0
          %1236 = vmatpush1.msra.mxu0 0.0
          %1237 = vmatprep.subr.mxu0 0.0
          %1238 = vmatpush1.msra.mxu0 0.0
          %1239 = vmatprep.subr.mxu0 0.0
          %1240 = vmatpush1.msra.mxu0 0.0
          %1241 = vmatprep.subr.mxu0 0.0
          %1242 = vmatpush1.msra.mxu0 0.0
          %1243 = vmatprep.subr.mxu0 0.0
          %1244 = vmatpush1.msra.mxu0 0.0
          %1245 = vmatprep.mubr.f32.mxu0 0.0
          %1246 = vmatmul.mubr.f32.gmra.mrb[0].mxu0 %v1170
          %v1247 = vpop.f32.mrb[0].mxu0
          %v1248 = vadd.f32 %v1151, %v1247
          %v1249 = vpop.f32.mrb[0].mxu0
          %v1250 = vadd.f32 %v1151, %v1249
          %1251 = vmatprep.mubr.f32.mxu0 0.0
          %1252 = vmatmul.mubr.f32.gmra.mrb[0].mxu0 %v1173
          %v1253 = vpop.f32.mrb[0].mxu0
          %v1254 = vadd.f32 %v1156, %v1253
          %v1255 = vpop.f32.mrb[0].mxu0
          %v1256 = vadd.f32 %v1156, %v1255
          %1257 = vmatprep.mubr.f32.mxu0 0.0
          %1258 = vmatmul.mubr.f32.gmra.mrb[0].mxu0 %v1176
          %v1259 = vpop.f32.mrb[0].mxu0
          %v1260 = vadd.f32 %v1161, %v1259
          %v1261 = vpop.f32.mrb[0].mxu0
          %v1262 = vadd.f32 %v1161, %v1261
          %1263 = vmatprep.mubr.f32.mxu0 0.0
          %1264 = vmatmul.mubr.f32.gmra.mrb[0].mxu0 %v1179
          %v1265 = vpop.f32.mrb[0].mxu0
          %v1266 = vadd.f32 %v1166, %v1265
          %v1267 = vpop.f32.mrb[0].mxu0
          %v1268 = vadd.f32 %v1166, %v1267
          %1269 = vdwg.mxu0
          %1270 = vmatprep.subr.mxu0 %v1131
          %1271 = vmatpush1.msra.mxu0 %v1130
          %1272 = vmatprep.subr.mxu0 %v1135
          %1273 = vmatpush1.msra.mxu0 %v1134
          %1274 = vmatprep.subr.mxu0 %v1139
          %1275 = vmatpush1.msra.mxu0 %v1138
          %1276 = vmatprep.subr.mxu0 %v1143
          %1277 = vmatpush1.msra.mxu0 %v1142
          %1278 = vmatprep.subr.mxu0 0.0
          %1279 = vmatpush1.msra.mxu0 0.0
          %1280 = vmatprep.subr.mxu0 0.0
          %1281 = vmatpush1.msra.mxu0 0.0
          %1282 = vmatprep.subr.mxu0 0.0
          %1283 = vmatpush1.msra.mxu0 0.0
          %1284 = vmatprep.subr.mxu0 0.0
          %1285 = vmatpush1.msra.mxu0 0.0
          %1286 = vmatprep.subr.mxu0 0.0
          %1287 = vmatpush1.msra.mxu0 0.0
          %1288 = vmatprep.subr.mxu0 0.0
          %1289 = vmatpush1.msra.mxu0 0.0
          %1290 = vmatprep.subr.mxu0 0.0
          %1291 = vmatpush1.msra.mxu0 0.0
          %1292 = vmatprep.subr.mxu0 0.0
          %1293 = vmatpush1.msra.mxu0 0.0
          %1294 = vmatprep.subr.mxu0 0.0
          %1295 = vmatpush1.msra.mxu0 0.0
          %1296 = vmatprep.subr.mxu0 0.0
          %1297 = vmatpush1.msra.mxu0 0.0
          %1298 = vmatprep.subr.mxu0 0.0
          %1299 = vmatpush1.msra.mxu0 0.0
          %1300 = vmatprep.subr.mxu0 0.0
          %1301 = vmatpush1.msra.mxu0 0.0
          %1302 = vmatprep.subr.mxu0 0.0
          %1303 = vmatpush1.msra.mxu0 0.0
          %1304 = vmatprep.subr.mxu0 0.0
          %1305 = vmatpush1.msra.mxu0 0.0
          %1306 = vmatprep.subr.mxu0 0.0
          %1307 = vmatpush1.msra.mxu0 0.0
          %1308 = vmatprep.subr.mxu0 0.0
          %1309 = vmatpush1.msra.mxu0 0.0
          %1310 = vmatprep.subr.mxu0 0.0
          %1311 = vmatpush1.msra.mxu0 0.0
          %1312 = vmatprep.subr.mxu0 0.0
          %1313 = vmatpush1.msra.mxu0 0.0
          %1314 = vmatprep.subr.mxu0 0.0
          %1315 = vmatpush1.msra.mxu0 0.0
          %1316 = vmatprep.subr.mxu0 0.0
          %1317 = vmatpush1.msra.mxu0 0.0
          %1318 = vmatprep.subr.mxu0 0.0
          %1319 = vmatpush1.msra.mxu0 0.0
          %1320 = vmatprep.subr.mxu0 0.0
          %1321 = vmatpush1.msra.mxu0 0.0
          %1322 = vmatprep.subr.mxu0 0.0
          %1323 = vmatpush1.msra.mxu0 0.0
          %1324 = vmatprep.subr.mxu0 0.0
          %1325 = vmatpush1.msra.mxu0 0.0
          %1326 = vmatprep.subr.mxu0 0.0
          %1327 = vmatpush1.msra.mxu0 0.0
          %1328 = vmatprep.subr.mxu0 0.0
          %1329 = vmatpush1.msra.mxu0 0.0
          %1330 = vmatprep.subr.mxu0 0.0
          %1331 = vmatpush1.msra.mxu0 0.0
          %1332 = vmatprep.subr.mxu0 0.0
          %1333 = vmatpush1.msra.mxu0 0.0
          %1334 = vmatprep.mubr.f32.mxu0 0.0
          %1335 = vmatmul.mubr.f32.gmra.mrb[0].mxu0 %v1170
          %v1336 = vpop.f32.mrb[0].mxu0
          %v1337 = vadd.f32 %v1151, %v1336
          %v1338 = vpop.f32.mrb[0].mxu0
          %v1339 = vadd.f32 %v1151, %v1338
          %1340 = vmatprep.mubr.f32.mxu0 0.0
          %1341 = vmatmul.mubr.f32.gmra.mrb[0].mxu0 %v1173
          %v1342 = vpop.f32.mrb[0].mxu0
          %v1343 = vadd.f32 %v1156, %v1342
          %v1344 = vpop.f32.mrb[0].mxu0
          %v1345 = vadd.f32 %v1156, %v1344
          %1346 = vmatprep.mubr.f32.mxu0 0.0
          %1347 = vmatmul.mubr.f32.gmra.mrb[0].mxu0 %v1176
          %v1348 = vpop.f32.mrb[0].mxu0
          %v1349 = vadd.f32 %v1161, %v1348
          %v1350 = vpop.f32.mrb[0].mxu0
          %v1351 = vadd.f32 %v1161, %v1350
          %1352 = vmatprep.mubr.f32.mxu0 0.0
          %1353 = vmatmul.mubr.f32.gmra.mrb[0].mxu0 %v1179
          %v1354 = vpop.f32.mrb[0].mxu0
          %v1355 = vadd.f32 %v1166, %v1354
          %v1356 = vpop.f32.mrb[0].mxu0
          %v1357 = vadd.f32 %v1166, %v1356
          %1358 = vdwg.mxu0
          %v1359 = vmax.f32 %v1248, 0.0
          %v1360 = vmax.f32 %v1250, 0.0
          %v1361 = vmax.f32 %v1337, 0.0
          %v1362 = vmax.f32 %v1339, 0.0
          %v1363 = vmax.f32 %v1254, 0.0
          %v1364 = vmax.f32 %v1256, 0.0
          %v1365 = vmax.f32 %v1343, 0.0
          %v1366 = vmax.f32 %v1345, 0.0
          %v1367 = vmax.f32 %v1260, 0.0
          %v1368 = vmax.f32 %v1262, 0.0
          %v1369 = vmax.f32 %v1349, 0.0
          %v1370 = vmax.f32 %v1351, 0.0
          %v1371 = vmax.f32 %v1266, 0.0
          %v1372 = vmax.f32 %v1268, 0.0
          %v1373 = vmax.f32 %v1355, 0.0
          %v1374 = vmax.f32 %v1357, 0.0
          %v1375 = vld [vmem:[%s545] sm:$0xff]
          %v1376 = vld [vmem:[%s545 + $0x8] sm:$0xff]
          %v1377 = vld [vmem:[%s545 + $0x10] sm:$0xff]
          %v1378 = vld [vmem:[%s545 + $0x18] sm:$0xff]
          %v1379 = vld [vmem:[%s545 + $0x20] sm:$0xff]
          %v1380 = vld [vmem:[%s545 + $0x28] sm:$0xff]
          %v1381 = vld [vmem:[%s545 + $0x30] sm:$0xff]
          %v1382 = vld [vmem:[%s545 + $0x38] sm:$0xff]
          %v1383 = vld [vmem:[%s545 + $0x40] sm:$0xff]
          %v1384 = vld [vmem:[%s545 + $0x48] sm:$0xff]
          %v1385 = vld [vmem:[%s545 + $0x50] sm:$0xff]
          %v1386 = vld [vmem:[%s545 + $0x58] sm:$0xff]
          %v1387 = vld [vmem:[%s545 + $0x60] sm:$0xff]
          %v1388 = vld [vmem:[%s545 + $0x68] sm:$0xff]
          %v1389 = vld [vmem:[%s545 + $0x70] sm:$0xff]
          %v1390 = vld [vmem:[%s545 + $0x78] sm:$0xff]
          %v1391 = vadd.f32 %v1375, %v1359
          %v1392 = vadd.f32 %v1376, %v1360
          %v1393 = vadd.f32 %v1377, %v1361
          %v1394 = vadd.f32 %v1378, %v1362
          %v1395 = vadd.f32 %v1379, %v1363
          %v1396 = vadd.f32 %v1380, %v1364
          %v1397 = vadd.f32 %v1381, %v1365
          %v1398 = vadd.f32 %v1382, %v1366
          %v1399 = vadd.f32 %v1383, %v1367
          %v1400 = vadd.f32 %v1384, %v1368
          %v1401 = vadd.f32 %v1385, %v1369
          %v1402 = vadd.f32 %v1386, %v1370
          %v1403 = vadd.f32 %v1387, %v1371
          %v1404 = vadd.f32 %v1388, %v1372
          %v1405 = vadd.f32 %v1389, %v1373
          %v1406 = vadd.f32 %v1390, %v1374
          %1407 = vst [vmem:[%s587] sm:$0xff] %v1391
          %1408 = vst [vmem:[%s587 + $0x8] sm:$0xff] %v1392
          %1409 = vst [vmem:[%s587 + $0x10] sm:$0xff] %v1393
          %1410 = vst [vmem:[%s587 + $0x18] sm:$0xff] %v1394
          %1411 = vst [vmem:[%s587 + $0x20] sm:$0xff] %v1395
          %1412 = vst [vmem:[%s587 + $0x28] sm:$0xff] %v1396
          %1413 = vst [vmem:[%s587 + $0x30] sm:$0xff] %v1397
          %1414 = vst [vmem:[%s587 + $0x38] sm:$0xff] %v1398
          %1415 = vst [vmem:[%s587 + $0x40] sm:$0xff] %v1399
          %1416 = vst [vmem:[%s587 + $0x48] sm:$0xff] %v1400
          %1417 = vst [vmem:[%s587 + $0x50] sm:$0xff] %v1401
          %1418 = vst [vmem:[%s587 + $0x58] sm:$0xff] %v1402
          %1419 = vst [vmem:[%s587 + $0x60] sm:$0xff] %v1403
          %1420 = vst [vmem:[%s587 + $0x68] sm:$0xff] %v1404
          %1421 = vst [vmem:[%s587 + $0x70] sm:$0xff] %v1405
          %1422 = vst [vmem:[%s587 + $0x78] sm:$0xff] %v1406
          %v1423 = vld [vmem:[%s5] sm:$0xff]
          %v1424 = vld [vmem:[%s5 + $0x8] sm:$0xff]
          %v1425 = vld [vmem:[%s5 + $0x10] sm:$0xff]
          %v1426 = vld [vmem:[%s5 + $0x18] sm:$0xff]
          %v1427 = vld [vmem:[%s6] sm:$0xff]
          %v1428 = vld [vmem:[%s6 + $0x8] sm:$0xff]
          %v1429 = vld [vmem:[%s6 + $0x10] sm:$0xff]
          %v1430 = vld [vmem:[%s6 + $0x18] sm:$0xff]
          %1432 = vset.pattern.permute.xlu0 0
          %1433 = vperm.xlu0 %1432, %v1427
          %v1434 = vpop.permute.xlu0 %1433
          %1437 = vset.pattern.permute.xlu0 0
          %1438 = vperm.xlu0 %1437, %v1428
          %v1439 = vpop.permute.xlu0 %1438
          %1442 = vset.pattern.permute.xlu0 0
          %1443 = vperm.xlu0 %1442, %v1429
          %v1444 = vpop.permute.xlu0 %1443
          %1447 = vset.pattern.permute.xlu0 0
          %1448 = vperm.xlu0 %1447, %v1430
          %v1449 = vpop.permute.xlu0 %1448
          %v1452 = vsel %vm1168, %v1423, 0
          %v1455 = vsel %vm1168, %v1424, 0
          %v1458 = vsel %vm1168, %v1425, 0
          %v1461 = vsel %vm1168, %v1426, 0
          %1463 = vmatprep.subr.mxu0 %v1392
          %1464 = vmatpush1.msra.mxu0 %v1391
          %1465 = vmatprep.subr.mxu0 %v1396
          %1466 = vmatpush1.msra.mxu0 %v1395
          %1467 = vmatprep.subr.mxu0 %v1400
          %1468 = vmatpush1.msra.mxu0 %v1399
          %1469 = vmatprep.subr.mxu0 %v1404
          %1470 = vmatpush1.msra.mxu0 %v1403
          %1471 = vmatprep.subr.mxu0 0.0
          %1472 = vmatpush1.msra.mxu0 0.0
          %1473 = vmatprep.subr.mxu0 0.0
          %1474 = vmatpush1.msra.mxu0 0.0
          %1475 = vmatprep.subr.mxu0 0.0
          %1476 = vmatpush1.msra.mxu0 0.0
          %1477 = vmatprep.subr.mxu0 0.0
          %1478 = vmatpush1.msra.mxu0 0.0
          %1479 = vmatprep.subr.mxu0 0.0
          %1480 = vmatpush1.msra.mxu0 0.0
          %1481 = vmatprep.subr.mxu0 0.0
          %1482 = vmatpush1.msra.mxu0 0.0
          %1483 = vmatprep.subr.mxu0 0.0
          %1484 = vmatpush1.msra.mxu0 0.0
          %1485 = vmatprep.subr.mxu0 0.0
          %1486 = vmatpush1.msra.mxu0 0.0
          %1487 = vmatprep.subr.mxu0 0.0
          %1488 = vmatpush1.msra.mxu0 0.0
          %1489 = vmatprep.subr.mxu0 0.0
          %1490 = vmatpush1.msra.mxu0 0.0
          %1491 = vmatprep.subr.mxu0 0.0
          %1492 = vmatpush1.msra.mxu0 0.0
          %1493 = vmatprep.subr.mxu0 0.0
          %1494 = vmatpush1.msra.mxu0 0.0
          %1495 = vmatprep.subr.mxu0 0.0
          %1496 = vmatpush1.msra.mxu0 0.0
          %1497 = vmatprep.subr.mxu0 0.0
          %1498 = vmatpush1.msra.mxu0 0.0
          %1499 = vmatprep.subr.mxu0 0.0
          %1500 = vmatpush1.msra.mxu0 0.0
          %1501 = vmatprep.subr.mxu0 0.0
          %1502 = vmatpush1.msra.mxu0 0.0
          %1503 = vmatprep.subr.mxu0 0.0
          %1504 = vmatpush1.msra.mxu0 0.0
          %1505 = vmatprep.subr.mxu0 0.0
          %1506 = vmatpush1.msra.mxu0 0.0
          %1507 = vmatprep.subr.mxu0 0.0
          %1508 = vmatpush1.msra.mxu0 0.0
          %1509 = vmatprep.subr.mxu0 0.0
          %1510 = vmatpush1.msra.mxu0 0.0
          %1511 = vmatprep.subr.mxu0 0.0
          %1512 = vmatpush1.msra.mxu0 0.0
          %1513 = vmatprep.subr.mxu0 0.0
          %1514 = vmatpush1.msra.mxu0 0.0
          %1515 = vmatprep.subr.mxu0 0.0
          %1516 = vmatpush1.msra.mxu0 0.0
          %1517 = vmatprep.subr.mxu0 0.0
          %1518 = vmatpush1.msra.mxu0 0.0
          %1519 = vmatprep.subr.mxu0 0.0
          %1520 = vmatpush1.msra.mxu0 0.0
          %1521 = vmatprep.subr.mxu0 0.0
          %1522 = vmatpush1.msra.mxu0 0.0
          %1523 = vmatprep.subr.mxu0 0.0
          %1524 = vmatpush1.msra.mxu0 0.0
          %1525 = vmatprep.subr.mxu0 0.0
          %1526 = vmatpush1.msra.mxu0 0.0
          %1527 = vmatprep.mubr.f32.mxu0 0.0
          %1528 = vmatmul.mubr.f32.gmra.mrb[0].mxu0 %v1452
          %v1529 = vpop.f32.mrb[0].mxu0
          %v1530 = vadd.f32 %v1434, %v1529
          %v1531 = vpop.f32.mrb[0].mxu0
          %v1532 = vadd.f32 %v1434, %v1531
          %1533 = vmatprep.mubr.f32.mxu0 0.0
          %1534 = vmatmul.mubr.f32.gmra.mrb[0].mxu0 %v1455
          %v1535 = vpop.f32.mrb[0].mxu0
          %v1536 = vadd.f32 %v1439, %v1535
          %v1537 = vpop.f32.mrb[0].mxu0
          %v1538 = vadd.f32 %v1439, %v1537
          %1539 = vmatprep.mubr.f32.mxu0 0.0
          %1540 = vmatmul.mubr.f32.gmra.mrb[0].mxu0 %v1458
          %v1541 = vpop.f32.mrb[0].mxu0
          %v1542 = vadd.f32 %v1444, %v1541
          %v1543 = vpop.f32.mrb[0].mxu0
          %v1544 = vadd.f32 %v1444, %v1543
          %1545 = vmatprep.mubr.f32.mxu0 0.0
          %1546 = vmatmul.mubr.f32.gmra.mrb[0].mxu0 %v1461
          %v1547 = vpop.f32.mrb[0].mxu0
          %v1548 = vadd.f32 %v1449, %v1547
          %v1549 = vpop.f32.mrb[0].mxu0
          %v1550 = vadd.f32 %v1449, %v1549
          %1551 = vdwg.mxu0
          %1552 = vmatprep.subr.mxu0 %v1394
          %1553 = vmatpush1.msra.mxu0 %v1393
          %1554 = vmatprep.subr.mxu0 %v1398
          %1555 = vmatpush1.msra.mxu0 %v1397
          %1556 = vmatprep.subr.mxu0 %v1402
          %1557 = vmatpush1.msra.mxu0 %v1401
          %1558 = vmatprep.subr.mxu0 %v1406
          %1559 = vmatpush1.msra.mxu0 %v1405
          %1560 = vmatprep.subr.mxu0 0.0
          %1561 = vmatpush1.msra.mxu0 0.0
          %1562 = vmatprep.subr.mxu0 0.0
          %1563 = vmatpush1.msra.mxu0 0.0
          %1564 = vmatprep.subr.mxu0 0.0
          %1565 = vmatpush1.msra.mxu0 0.0
          %1566 = vmatprep.subr.mxu0 0.0
          %1567 = vmatpush1.msra.mxu0 0.0
          %1568 = vmatprep.subr.mxu0 0.0
          %1569 = vmatpush1.msra.mxu0 0.0
          %1570 = vmatprep.subr.mxu0 0.0
          %1571 = vmatpush1.msra.mxu0 0.0
          %1572 = vmatprep.subr.mxu0 0.0
          %1573 = vmatpush1.msra.mxu0 0.0
          %1574 = vmatprep.subr.mxu0 0.0
          %1575 = vmatpush1.msra.mxu0 0.0
          %1576 = vmatprep.subr.mxu0 0.0
          %1577 = vmatpush1.msra.mxu0 0.0
          %1578 = vmatprep.subr.mxu0 0.0
          %1579 = vmatpush1.msra.mxu0 0.0
          %1580 = vmatprep.subr.mxu0 0.0
          %1581 = vmatpush1.msra.mxu0 0.0
          %1582 = vmatprep.subr.mxu0 0.0
          %1583 = vmatpush1.msra.mxu0 0.0
          %1584 = vmatprep.subr.mxu0 0.0
          %1585 = vmatpush1.msra.mxu0 0.0
          %1586 = vmatprep.subr.mxu0 0.0
          %1587 = vmatpush1.msra.mxu0 0.0
          %1588 = vmatprep.subr.mxu0 0.0
          %1589 = vmatpush1.msra.mxu0 0.0
          %1590 = vmatprep.subr.mxu0 0.0
          %1591 = vmatpush1.msra.mxu0 0.0
          %1592 = vmatprep.subr.mxu0 0.0
          %1593 = vmatpush1.msra.mxu0 0.0
          %1594 = vmatprep.subr.mxu0 0.0
          %1595 = vmatpush1.msra.mxu0 0.0
          %1596 = vmatprep.subr.mxu0 0.0
          %1597 = vmatpush1.msra.mxu0 0.0
          %1598 = vmatprep.subr.mxu0 0.0
          %1599 = vmatpush1.msra.mxu0 0.0
          %1600 = vmatprep.subr.mxu0 0.0
          %1601 = vmatpush1.msra.mxu0 0.0
          %1602 = vmatprep.subr.mxu0 0.0
          %1603 = vmatpush1.msra.mxu0 0.0
          %1604 = vmatprep.subr.mxu0 0.0
          %1605 = vmatpush1.msra.mxu0 0.0
          %1606 = vmatprep.subr.mxu0 0.0
          %1607 = vmatpush1.msra.mxu0 0.0
          %1608 = vmatprep.subr.mxu0 0.0
          %1609 = vmatpush1.msra.mxu0 0.0
          %1610 = vmatprep.subr.mxu0 0.0
          %1611 = vmatpush1.msra.mxu0 0.0
          %1612 = vmatprep.subr.mxu0 0.0
          %1613 = vmatpush1.msra.mxu0 0.0
          %1614 = vmatprep.subr.mxu0 0.0
          %1615 = vmatpush1.msra.mxu0 0.0
          %1616 = vmatprep.mubr.f32.mxu0 0.0
          %1617 = vmatmul.mubr.f32.gmra.mrb[0].mxu0 %v1452
          %v1618 = vpop.f32.mrb[0].mxu0
          %v1619 = vadd.f32 %v1434, %v1618
          %v1620 = vpop.f32.mrb[0].mxu0
          %v1621 = vadd.f32 %v1434, %v1620
          %1622 = vmatprep.mubr.f32.mxu0 0.0
          %1623 = vmatmul.mubr.f32.gmra.mrb[0].mxu0 %v1455
          %v1624 = vpop.f32.mrb[0].mxu0
          %v1625 = vadd.f32 %v1439, %v1624
          %v1626 = vpop.f32.mrb[0].mxu0
          %v1627 = vadd.f32 %v1439, %v1626
          %1628 = vmatprep.mubr.f32.mxu0 0.0
          %1629 = vmatmul.mubr.f32.gmra.mrb[0].mxu0 %v1458
          %v1630 = vpop.f32.mrb[0].mxu0
          %v1631 = vadd.f32 %v1444, %v1630
          %v1632 = vpop.f32.mrb[0].mxu0
          %v1633 = vadd.f32 %v1444, %v1632
          %1634 = vmatprep.mubr.f32.mxu0 0.0
          %1635 = vmatmul.mubr.f32.gmra.mrb[0].mxu0 %v1461
          %v1636 = vpop.f32.mrb[0].mxu0
          %v1637 = vadd.f32 %v1449, %v1636
          %v1638 = vpop.f32.mrb[0].mxu0
          %v1639 = vadd.f32 %v1449, %v1638
          %1640 = vdwg.mxu0
          %v1641 = vmax.f32 %v1530, 0.0
          %v1642 = vmax.f32 %v1532, 0.0
          %v1643 = vmax.f32 %v1619, 0.0
          %v1644 = vmax.f32 %v1621, 0.0
          %v1645 = vmax.f32 %v1536, 0.0
          %v1646 = vmax.f32 %v1538, 0.0
          %v1647 = vmax.f32 %v1625, 0.0
          %v1648 = vmax.f32 %v1627, 0.0
          %v1649 = vmax.f32 %v1542, 0.0
          %v1650 = vmax.f32 %v1544, 0.0
          %v1651 = vmax.f32 %v1631, 0.0
          %v1652 = vmax.f32 %v1633, 0.0
          %v1653 = vmax.f32 %v1548, 0.0
          %v1654 = vmax.f32 %v1550, 0.0
          %v1655 = vmax.f32 %v1637, 0.0
          %v1656 = vmax.f32 %v1639, 0.0
          %v1657 = vpack.c.bf16 %v1645, %v1641
          %v1658 = vpack.c.bf16 %v1646, %v1642
          %v1659 = vpack.c.bf16 %v1647, %v1643
          %v1660 = vpack.c.bf16 %v1648, %v1644
          %v1661 = vpack.c.bf16 %v1653, %v1649
          %v1662 = vpack.c.bf16 %v1654, %v1650
          %v1663 = vpack.c.bf16 %v1655, %v1651
          %v1664 = vpack.c.bf16 %v1656, %v1652
          %v1673 = vunpack.c.l.b16 %v1657
          %v1674 = vunpack.c.l.b16 %v1658
          %v1675 = vunpack.c.l.b16 %v1659
          %v1676 = vunpack.c.l.b16 %v1660
          %v1677 = vunpack.c.h.b16 %v1657
          %v1678 = vunpack.c.h.b16 %v1658
          %v1679 = vunpack.c.h.b16 %v1659
          %v1680 = vunpack.c.h.b16 %v1660
          %v1681 = vunpack.c.l.b16 %v1661
          %v1682 = vunpack.c.l.b16 %v1662
          %v1683 = vunpack.c.l.b16 %v1663
          %v1684 = vunpack.c.l.b16 %v1664
          %v1685 = vunpack.c.h.b16 %v1661
          %v1686 = vunpack.c.h.b16 %v1662
          %v1687 = vunpack.c.h.b16 %v1663
          %v1688 = vunpack.c.h.b16 %v1664
          %v1689 = vpack.c.b16 %v1674, %v1673
          %v1690 = vpack.c.b16 %v1676, %v1675
          %v1691 = vpack.c.b16 %v1678, %v1677
          %v1692 = vpack.c.b16 %v1680, %v1679
          %v1693 = vpack.c.b16 %v1682, %v1681
          %v1694 = vpack.c.b16 %v1684, %v1683
          %v1695 = vpack.c.b16 %v1686, %v1685
          %v1696 = vpack.c.b16 %v1688, %v1687
          %1705 = vst [vmem:[%s593] sm:$0xff] %v1689
          %1706 = vst [vmem:[%s593 + $0x8] sm:$0xff] %v1690
          %1707 = vst [vmem:[%s593 + $0x10] sm:$0xff] %v1691
          %1708 = vst [vmem:[%s593 + $0x18] sm:$0xff] %v1692
          %1709 = vst [vmem:[%s593 + $0x20] sm:$0xff] %v1693
          %1710 = vst [vmem:[%s593 + $0x28] sm:$0xff] %v1694
          %1711 = vst [vmem:[%s593 + $0x30] sm:$0xff] %v1695
          %1712 = vst [vmem:[%s593 + $0x38] sm:$0xff] %v1696
        $region125: #{message_passing_nn.6} parent=104 // pred_fallthru
          _
        %s1713 = sand.u32 %s204, 1
        %s1714 = sand.u32 %s204, 1
        %s1715 = smul.addr %s1714, 128
        %s1716 = scalar_lea.vmem [#allocation6], %s1715
        %s1717 = sand.u32 %s230, 1
        %s1718 = sand.u32 %s230, 1
        %s1719 = smul.addr %s1718, 64
        %s1720 = scalar_lea.vmem [#allocation7], %s1719
        // Predicated region
        $region126: #{message_passing_nn.6} parent=104 // pred_check
          %p1721 = pneg %p214
        $region127: #{message_passing_nn.6} parent=104 // pred_check_branch
          %1723 = sbr.rel (%p1721) target = $region129
        $region128: #{message_passing_nn.6} parent=104 // pred_region
          %s1724 = smul.u32 4, %s24
          %s1725 = smul.addr %s1724, 8
          %s1726 = scalar_lea.vmem %s7, %s1725
          // Predicated region
          $region130: #{message_passing_nn.6} parent=128 // pred_check
            _
          $region131: #{message_passing_nn.6} parent=128 // pred_check_branch
            %1728 = sbr.rel (0) target = $region133
          $region132: #{message_passing_nn.6} parent=128 // pred_region
            // Predicated region
            $region134: #{message_passing_nn.6} parent=132 // pred_check
              _
            $region135: #{message_passing_nn.6} parent=132 // pred_check_branch
              %1730 = sbr.rel (0) target = $region137
            $region136: #{message_passing_nn.6} parent=132 // pred_region
              loop: start=0, step=1, limit=1
              $region138: #{message_passing_nn.6} parent=136 // loop_pre_header
                _
              $region139: #{message_passing_nn.6} parent=136 // loop_header
                %s1732 = sphi 0, %s1736
                %p1733 = scmp.ge.s32.totalorder %s1732, 1
                %s1737 = sphi %s1716, %s1716
                %s1738 = sphi %s1726, %s1726
              $region140: #{message_passing_nn.6} parent=136 // loop_header_branch
                %1735 = sbr.rel (%p1733) target = $region144
              $region141: #{message_passing_nn.6} parent=136 // loop_body
                %v1739 = vld [vmem:[%s1737] sm:$0xff]
                %1740 = vst [vmem:[%s1738] sm:$0xff] %v1739
                %v1741 = vld [vmem:[%s1737 + $0x8] sm:$0xff]
                %1742 = vst [vmem:[%s1738 + $0x8] sm:$0xff] %v1741
                %v1743 = vld [vmem:[%s1737 + $0x10] sm:$0xff]
                %1744 = vst [vmem:[%s1738 + $0x10] sm:$0xff] %v1743
                %v1745 = vld [vmem:[%s1737 + $0x18] sm:$0xff]
                %1746 = vst [vmem:[%s1738 + $0x18] sm:$0xff] %v1745
                %v1747 = vld [vmem:[%s1737 + $0x20] sm:$0xff]
                %1748 = vst [vmem:[%s1738 + $0x40] sm:$0xff] %v1747
                %v1749 = vld [vmem:[%s1737 + $0x28] sm:$0xff]
                %1750 = vst [vmem:[%s1738 + $0x48] sm:$0xff] %v1749
                %v1751 = vld [vmem:[%s1737 + $0x30] sm:$0xff]
                %1752 = vst [vmem:[%s1738 + $0x50] sm:$0xff] %v1751
                %v1753 = vld [vmem:[%s1737 + $0x38] sm:$0xff]
                %1754 = vst [vmem:[%s1738 + $0x58] sm:$0xff] %v1753
                %v1755 = vld [vmem:[%s1737 + $0x40] sm:$0xff]
                %1756 = vst [vmem:[%s1738 + $0x80] sm:$0xff] %v1755
                %v1757 = vld [vmem:[%s1737 + $0x48] sm:$0xff]
                %1758 = vst [vmem:[%s1738 + $0x88] sm:$0xff] %v1757
                %v1759 = vld [vmem:[%s1737 + $0x50] sm:$0xff]
                %1760 = vst [vmem:[%s1738 + $0x90] sm:$0xff] %v1759
                %v1761 = vld [vmem:[%s1737 + $0x58] sm:$0xff]
                %1762 = vst [vmem:[%s1738 + $0x98] sm:$0xff] %v1761
                %v1763 = vld [vmem:[%s1737 + $0x60] sm:$0xff]
                %1764 = vst [vmem:[%s1738 + $0xc0] sm:$0xff] %v1763
                %v1765 = vld [vmem:[%s1737 + $0x68] sm:$0xff]
                %1766 = vst [vmem:[%s1738 + $0xc8] sm:$0xff] %v1765
                %v1767 = vld [vmem:[%s1737 + $0x70] sm:$0xff]
                %1768 = vst [vmem:[%s1738 + $0xd0] sm:$0xff] %v1767
                %v1769 = vld [vmem:[%s1737 + $0x78] sm:$0xff]
                %1770 = vst [vmem:[%s1738 + $0xd8] sm:$0xff] %v1769
              $region142: #{message_passing_nn.6} parent=136 // loop_footer
                %s1736 = sadd.s32 1, %s1732
              $region143: #{message_passing_nn.6} parent=136 // loop_footer_branch
                %1731 = sbr.rel target = $region139
              $region144: #{message_passing_nn.6} parent=136 // loop_exit
                _
            $region137: #{message_passing_nn.6} parent=132 // pred_fallthru
              _
            // Predicated region
            $region145: #{message_passing_nn.6} parent=132 // pred_check
              _
            $region146: #{message_passing_nn.6} parent=132 // pred_check_branch
              %1772 = sbr.rel target = $region148
            $region147: #{message_passing_nn.6} parent=132 // pred_region
              _
            $region148: #{message_passing_nn.6} parent=132 // pred_fallthru
              _
          $region133: #{message_passing_nn.6} parent=128 // pred_fallthru
            _
          %1773 = vnop
        $region129: #{message_passing_nn.6} parent=104 // pred_fallthru
          _
        // Predicated region
        $region149: #{message_passing_nn.6} parent=104 // pred_check
          %p1774 = pneg %p240
        $region150: #{message_passing_nn.6} parent=104 // pred_check_branch
          %1776 = sbr.rel (%p1774) target = $region152
        $region151: #{message_passing_nn.6} parent=104 // pred_region
          %s1777 = smul.u32 4, %s24
          %s1778 = smul.addr %s1777, 4
          %s1779 = scalar_lea.vmem %s8, %s1778
          // Predicated region
          $region153: #{message_passing_nn.6} parent=151 // pred_check
            _
          $region154: #{message_passing_nn.6} parent=151 // pred_check_branch
            %1781 = sbr.rel (0) target = $region156
          $region155: #{message_passing_nn.6} parent=151 // pred_region
            // Predicated region
            $region157: #{message_passing_nn.6} parent=155 // pred_check
              _
            $region158: #{message_passing_nn.6} parent=155 // pred_check_branch
              %1783 = sbr.rel (0) target = $region160
            $region159: #{message_passing_nn.6} parent=155 // pred_region
              loop: start=0, step=1, limit=1
              $region161: #{message_passing_nn.6} parent=159 // loop_pre_header
                _
              $region162: #{message_passing_nn.6} parent=159 // loop_header
                %s1785 = sphi 0, %s1789
                %p1786 = scmp.ge.s32.totalorder %s1785, 1
                %s1790 = sphi %s1720, %s1720
                %s1791 = sphi %s1779, %s1779
              $region163: #{message_passing_nn.6} parent=159 // loop_header_branch
                %1788 = sbr.rel (%p1786) target = $region167
              $region164: #{message_passing_nn.6} parent=159 // loop_body
                %v1792 = vld [vmem:[%s1790] sm:$0xff]
                %1793 = vst [vmem:[%s1791] sm:$0xff] %v1792
                %v1794 = vld [vmem:[%s1790 + $0x8] sm:$0xff]
                %1795 = vst [vmem:[%s1791 + $0x8] sm:$0xff] %v1794
                %v1796 = vld [vmem:[%s1790 + $0x10] sm:$0xff]
                %1797 = vst [vmem:[%s1791 + $0x20] sm:$0xff] %v1796
                %v1798 = vld [vmem:[%s1790 + $0x18] sm:$0xff]
                %1799 = vst [vmem:[%s1791 + $0x28] sm:$0xff] %v1798
                %v1800 = vld [vmem:[%s1790 + $0x20] sm:$0xff]
                %1801 = vst [vmem:[%s1791 + $0x40] sm:$0xff] %v1800
                %v1802 = vld [vmem:[%s1790 + $0x28] sm:$0xff]
                %1803 = vst [vmem:[%s1791 + $0x48] sm:$0xff] %v1802
                %v1804 = vld [vmem:[%s1790 + $0x30] sm:$0xff]
                %1805 = vst [vmem:[%s1791 + $0x60] sm:$0xff] %v1804
                %v1806 = vld [vmem:[%s1790 + $0x38] sm:$0xff]
                %1807 = vst [vmem:[%s1791 + $0x68] sm:$0xff] %v1806
              $region165: #{message_passing_nn.6} parent=159 // loop_footer
                %s1789 = sadd.s32 1, %s1785
              $region166: #{message_passing_nn.6} parent=159 // loop_footer_branch
                %1784 = sbr.rel target = $region162
              $region167: #{message_passing_nn.6} parent=159 // loop_exit
                _
            $region160: #{message_passing_nn.6} parent=155 // pred_fallthru
              _
            // Predicated region
            $region168: #{message_passing_nn.6} parent=155 // pred_check
              _
            $region169: #{message_passing_nn.6} parent=155 // pred_check_branch
              %1809 = sbr.rel target = $region171
            $region170: #{message_passing_nn.6} parent=155 // pred_region
              _
            $region171: #{message_passing_nn.6} parent=155 // pred_fallthru
              _
          $region156: #{message_passing_nn.6} parent=151 // pred_fallthru
            _
          %1810 = vnop
        $region152: #{message_passing_nn.6} parent=104 // pred_fallthru
          _
      $region105: #{message_passing_nn.6} parent=5 // pred_fallthru
        _
      %p1811 = scmp.le.s32.totalorder 2, %s15
      // Predicated region
      $region172: #{message_passing_nn.6} parent=5 // pred_check
        %p1812 = pneg %p1811
      $region173: #{message_passing_nn.6} parent=5 // pred_check_branch
        %1814 = sbr.rel (%p1812) target = $region175
      $region174: #{message_passing_nn.6} parent=5 // pred_region
        %s1815 = ssub.s32 %s15, 2
        // Predicated region
        $region176: #{message_passing_nn.6} parent=174 // pred_check
          %p1816 = pneg %p220
        $region177: #{message_passing_nn.6} parent=174 // pred_check_branch
          %1818 = sbr.rel (%p1816) target = $region179
        $region178: #{message_passing_nn.6} parent=174 // pred_region
          %s1819 = sand.u32 %s205, 1
          %s1820 = sand.u32 %s205, 1
          %s1821 = smul.addr %s1820, 128
          %s1822 = scalar_lea.vmem [#allocation6], %s1821
        $region179: #{message_passing_nn.6} parent=174 // pred_fallthru
          _
        // Predicated region
        $region180: #{message_passing_nn.6} parent=174 // pred_check
          %p1823 = pneg %p246
        $region181: #{message_passing_nn.6} parent=174 // pred_check_branch
          %1825 = sbr.rel (%p1823) target = $region183
        $region182: #{message_passing_nn.6} parent=174 // pred_region
          %s1826 = sand.u32 %s231, 1
          %s1827 = sand.u32 %s231, 1
          %s1828 = smul.addr %s1827, 64
          %s1829 = scalar_lea.vmem [#allocation7], %s1828
        $region183: #{message_passing_nn.6} parent=174 // pred_fallthru
          _
      $region175: #{message_passing_nn.6} parent=5 // pred_fallthru
        _
    $region6: #{message_passing_nn.6} parent=1 // loop_footer
      %s19 = sadd.s32 1, %s15
    $region7: #{message_passing_nn.6} parent=1 // loop_footer_branch
      %14 = sbr.rel target = $region3
    $region8: #{message_passing_nn.6} parent=1 // loop_exit
      _

// kernel: message_passing_nn.8
$region0: #{message_passing_nn.8}
  #allocation0 [shape = 'u32[]', space=smem, size = 0x4, offset = 0x4, fixed_abs, tag = 'smem constant byte address 0x4 - core index']
  #allocation1 [shape = 'u32[144,128]{1,0:T(1,128)}', space=vmem, size = 0x12000, scoped, tag = 'internal scratch']
  #allocation2 [shape = 'f32[32,512]{1,0:T(8,128)}', space=vmem, size = 0x10000, scoped, tag = 'scratch operand']
  %s0 = inlined_call_operand.vmem [shape: bf16[32,1024], index: 0, kind: input, shape index: {}]
  %s1 = inlined_call_operand.vmem [shape: f32[32,1024], index: 1, kind: input, shape index: {}]
  %s2 = inlined_call_operand.vmem [shape: s8[1024,1024], index: 2, kind: input, shape index: {}]
  %s3 = inlined_call_operand.vmem [shape: f32[32,32], index: 3, kind: input, shape index: {}]
  %s4 = inlined_call_operand.vmem [shape: f32[32,1], index: 4, kind: input, shape index: {}]
  %s5 = inlined_call_operand.vmem [shape: f32[32,32], index: 5, kind: input, shape index: {}]
  %s6 = inlined_call_operand.vmem [shape: f32[32,1], index: 6, kind: input, shape index: {}]
  %s7 = inlined_call_operand.vmem [shape: f32[32,1024], index: 7, kind: output, shape index: {0}]
  %s8 = inlined_call_operand.hbm [shape: bf16[32,1024], index: 8, kind: output, shape index: {1}]
  %9 = xla_tuple %s7, %s8
  %s10 = sld [smem:[#allocation0]]
  $region165: #{message_passing_nn.8} parent=0
    _
  %s12 = ssub.s32 1, %s10
  %s13 = scalar_select 0, %s12, %s10
  $region1: #{message_passing_nn.8} parent=0
    #allocation3 [shape = 'u8[65536]{0}', space=vmem, size = 0x10000, scoped, tag = 'input window, operand 0']
    #allocation4 [shape = 'u8[131072]{0}', space=vmem, size = 0x20000, scoped, tag = 'input window, operand 1']
    #allocation5 [shape = 'u8[524288]{0}', space=vmem, size = 0x80000, scoped, tag = 'input window, operand 2']
    #allocation6 [shape = 'u8[131072]{0}', space=vmem, size = 0x20000, scoped, tag = 'output window, operand 0']
    #allocation7 [shape = 'u8[65536]{0}', space=vmem, size = 0x10000, scoped, tag = 'output window, operand 1']
    #allocation8 [shape = 's32[2]{0}', space=sflag, size = 0x8, scoped, tag = 'scoped memory for message_passing_nn.8']
    %14 = vsyncpa [#allocation8], 0
    %s15 = scalar_lea.sflag [#allocation8], 1
    %16 = vsyncpa %s15, 0
    loop: start=0, step=1, limit=6
    $region2: #{message_passing_nn.8} parent=1 // loop_pre_header
      _
    $region3: #{message_passing_nn.8} parent=1 // loop_header
      %s18 = sphi 0, %s22
      %p19 = scmp.ge.s32.totalorder %s18, 6
      %s25 = sphi 0, %s37
      %s26 = sphi 0, %s33
      %s27 = sphi 0, %s25
      %s28 = sphi 0, %s26
      %s29 = sphi 0, %s27
      %s30 = sphi 0, %s28
      %s40 = sphi 0, %s42
      %s43 = sphi 0, %s40
      %s44 = sphi 0, %s43
      %s60 = sphi 0, %s44
      %s66 = sphi 0, %s68
      %s69 = sphi 0, %s66
      %s70 = sphi 0, %s69
      %s86 = sphi 0, %s70
      %s94 = sphi 0, %s96
      %s97 = sphi 0, %s94
      %s98 = sphi 0, %s97
      %s114 = sphi 0, %s98
      %s118 = sphi 0, %s118
      %s120 = sphi 0, %s118
      %s121 = sphi 0, %s120
      %s135 = sphi 0, %s121
      %s139 = sphi 0, %s139
      %s141 = sphi 0, %s139
      %s142 = sphi 0, %s141
      %s156 = sphi 0, %s142
      %s160 = sphi 0, %s160
      %s162 = sphi 0, %s160
      %s163 = sphi 0, %s162
      %s177 = sphi 0, %s163
      %s181 = sphi 0, %s181
      %s183 = sphi 0, %s181
      %s184 = sphi 0, %s183
      %s198 = sphi 0, %s184
      %s204 = sphi 0, %s206
      %s207 = sphi 0, %s204
      %s208 = sphi 0, %s207
      %s224 = sphi 0, %s208
      %s230 = sphi 0, %s232
      %s233 = sphi 0, %s230
      %s234 = sphi 0, %s233
      %s250 = sphi 0, %s234
    $region4: #{message_passing_nn.8} parent=1 // loop_header_branch
      %21 = sbr.rel (%p19) target = $region8
    $region5: #{message_passing_nn.8} parent=1 // loop_body
      %s23 = ssub.s32 %s18, 1
      %s24 = ssub.s32 %s18, 2
      %s31 = sadd.s32 1, %s26
      %p32 = scmp.ge.s32.totalorder %s31, 2
      %s33 = scalar_select %p32, 0, %s31
      %s34 = sadd.s32 1, %s25
      %s35 = scalar_select %p32, %s34, %s25
      %p36 = scmp.ge.s32.totalorder %s35, 2
      %s37 = scalar_select %p36, 0, %s35
      %s38 = ssub.s32 %s26, %s33
      %p39 = scmp.eq.s32.totalorder %s38, 0
      %s41 = sadd.s32 %s40, 1
      %s42 = scalar_select %p39, %s40, %s41
      %p45 = pneg %p39
      %p46 = scmp.eq.s32.totalorder %s18, 3
      %p47 = por %p45, %p46
      %p48 = scmp.ne.s32.totalorder %s40, %s43
      %p49 = scmp.eq.s32.totalorder %s18, 0
      %p50 = por %p48, %p49
      %p51 = scmp.ne.s32.totalorder %s40, %s43
      %p52 = scmp.eq.s32.totalorder %s23, 3
      %p53 = por %p51, %p52
      %p54 = scmp.ne.s32.totalorder %s43, %s44
      %p55 = scmp.eq.s32.totalorder %s23, 0
      %p56 = por %p54, %p55
      %p57 = scmp.ne.s32.totalorder %s43, %s44
      %p58 = scmp.eq.s32.totalorder %s24, 3
      %p59 = por %p57, %p58
      %p61 = scmp.ne.s32.totalorder %s44, %s60
      %p62 = scmp.eq.s32.totalorder %s24, 0
      %p63 = por %p61, %p62
      %s64 = ssub.s32 %s25, %s37
      %p65 = scmp.eq.s32.totalorder %s64, 0
      %s67 = sadd.s32 %s66, 1
      %s68 = scalar_select %p65, %s66, %s67
      %p71 = pneg %p65
      %p72 = scmp.eq.s32.totalorder %s18, 3
      %p73 = por %p71, %p72
      %p74 = scmp.ne.s32.totalorder %s66, %s69
      %p75 = scmp.eq.s32.totalorder %s18, 0
      %p76 = por %p74, %p75
      %p77 = scmp.ne.s32.totalorder %s66, %s69
      %p78 = scmp.eq.s32.totalorder %s23, 3
      %p79 = por %p77, %p78
      %p80 = scmp.ne.s32.totalorder %s69, %s70
      %p81 = scmp.eq.s32.totalorder %s23, 0
      %p82 = por %p80, %p81
      %p83 = scmp.ne.s32.totalorder %s69, %s70
      %p84 = scmp.eq.s32.totalorder %s24, 3
      %p85 = por %p83, %p84
      %p87 = scmp.ne.s32.totalorder %s70, %s86
      %p88 = scmp.eq.s32.totalorder %s24, 0
      %p89 = por %p87, %p88
      %s90 = ssub.s32 %s26, %s33
      %s91 = ssub.s32 %s25, %s37
      %s92 = sor.u32 %s90, %s91
      %p93 = scmp.eq.s32.totalorder %s92, 0
      %s95 = sadd.s32 %s94, 1
      %s96 = scalar_select %p93, %s94, %s95
      %p99 = pneg %p93
      %p100 = scmp.eq.s32.totalorder %s18, 3
      %p101 = por %p99, %p100
      %p102 = scmp.ne.s32.totalorder %s94, %s97
      %p103 = scmp.eq.s32.totalorder %s18, 0
      %p104 = por %p102, %p103
      %p105 = scmp.ne.s32.totalorder %s94, %s97
      %p106 = scmp.eq.s32.totalorder %s23, 3
      %p107 = por %p105, %p106
      %p108 = scmp.ne.s32.totalorder %s97, %s98
      %p109 = scmp.eq.s32.totalorder %s23, 0
      %p110 = por %p108, %p109
      %p111 = scmp.ne.s32.totalorder %s97, %s98
      %p112 = scmp.eq.s32.totalorder %s24, 3
      %p113 = por %p111, %p112
      %p115 = scmp.ne.s32.totalorder %s98, %s114
      %p116 = scmp.eq.s32.totalorder %s24, 0
      %p117 = por %p115, %p116
      %s119 = sadd.s32 %s118, 1
      %p122 = scmp.eq.s32.totalorder %s18, 3
      %p123 = scmp.ne.s32.totalorder %s118, %s120
      %p124 = scmp.eq.s32.totalorder %s18, 0
      %p125 = por %p123, %p124
      %p126 = scmp.ne.s32.totalorder %s118, %s120
      %p127 = scmp.eq.s32.totalorder %s23, 3
      %p128 = por %p126, %p127
      %p129 = scmp.ne.s32.totalorder %s120, %s121
      %p130 = scmp.eq.s32.totalorder %s23, 0
      %p131 = por %p129, %p130
      %p132 = scmp.ne.s32.totalorder %s120, %s121
      %p133 = scmp.eq.s32.totalorder %s24, 3
      %p134 = por %p132, %p133
      %p136 = scmp.ne.s32.totalorder %s121, %s135
      %p137 = scmp.eq.s32.totalorder %s24, 0
      %p138 = por %p136, %p137
      %s140 = sadd.s32 %s139, 1
      %p143 = scmp.eq.s32.totalorder %s18, 3
      %p144 = scmp.ne.s32.totalorder %s139, %s141
      %p145 = scmp.eq.s32.totalorder %s18, 0
      %p146 = por %p144, %p145
      %p147 = scmp.ne.s32.totalorder %s139, %s141
      %p148 = scmp.eq.s32.totalorder %s23, 3
      %p149 = por %p147, %p148
      %p150 = scmp.ne.s32.totalorder %s141, %s142
      %p151 = scmp.eq.s32.totalorder %s23, 0
      %p152 = por %p150, %p151
      %p153 = scmp.ne.s32.totalorder %s141, %s142
      %p154 = scmp.eq.s32.totalorder %s24, 3
      %p155 = por %p153, %p154
      %p157 = scmp.ne.s32.totalorder %s142, %s156
      %p158 = scmp.eq.s32.totalorder %s24, 0
      %p159 = por %p157, %p158
      %s161 = sadd.s32 %s160, 1
      %p164 = scmp.eq.s32.totalorder %s18, 3
      %p165 = scmp.ne.s32.totalorder %s160, %s162
      %p166 = scmp.eq.s32.totalorder %s18, 0
      %p167 = por %p165, %p166
      %p168 = scmp.ne.s32.totalorder %s160, %s162
      %p169 = scmp.eq.s32.totalorder %s23, 3
      %p170 = por %p168, %p169
      %p171 = scmp.ne.s32.totalorder %s162, %s163
      %p172 = scmp.eq.s32.totalorder %s23, 0
      %p173 = por %p171, %p172
      %p174 = scmp.ne.s32.totalorder %s162, %s163
      %p175 = scmp.eq.s32.totalorder %s24, 3
      %p176 = por %p174, %p175
      %p178 = scmp.ne.s32.totalorder %s163, %s177
      %p179 = scmp.eq.s32.totalorder %s24, 0
      %p180 = por %p178, %p179
      %s182 = sadd.s32 %s181, 1
      %p185 = scmp.eq.s32.totalorder %s18, 3
      %p186 = scmp.ne.s32.totalorder %s181, %s183
      %p187 = scmp.eq.s32.totalorder %s18, 0
      %p188 = por %p186, %p187
      %p189 = scmp.ne.s32.totalorder %s181, %s183
      %p190 = scmp.eq.s32.totalorder %s23, 3
      %p191 = por %p189, %p190
      %p192 = scmp.ne.s32.totalorder %s183, %s184
      %p193 = scmp.eq.s32.totalorder %s23, 0
      %p194 = por %p192, %p193
      %p195 = scmp.ne.s32.totalorder %s183, %s184
      %p196 = scmp.eq.s32.totalorder %s24, 3
      %p197 = por %p195, %p196
      %p199 = scmp.ne.s32.totalorder %s184, %s198
      %p200 = scmp.eq.s32.totalorder %s24, 0
      %p201 = por %p199, %p200
      %s202 = ssub.s32 %s25, %s37
      %p203 = scmp.eq.s32.totalorder %s202, 0
      %s205 = sadd.s32 %s204, 1
      %s206 = scalar_select %p203, %s204, %s205
      %p209 = pneg %p203
      %p210 = scmp.eq.s32.totalorder %s18, 3
      %p211 = por %p209, %p210
      %p212 = scmp.ne.s32.totalorder %s204, %s207
      %p213 = scmp.eq.s32.totalorder %s18, 0
      %p214 = por %p212, %p213
      %p215 = scmp.ne.s32.totalorder %s204, %s207
      %p216 = scmp.eq.s32.totalorder %s23, 3
      %p217 = por %p215, %p216
      %p218 = scmp.ne.s32.totalorder %s207, %s208
      %p219 = scmp.eq.s32.totalorder %s23, 0
      %p220 = por %p218, %p219
      %p221 = scmp.ne.s32.totalorder %s207, %s208
      %p222 = scmp.eq.s32.totalorder %s24, 3
      %p223 = por %p221, %p222
      %p225 = scmp.ne.s32.totalorder %s208, %s224
      %p226 = scmp.eq.s32.totalorder %s24, 0
      %p227 = por %p225, %p226
      %s228 = ssub.s32 %s25, %s37
      %p229 = scmp.eq.s32.totalorder %s228, 0
      %s231 = sadd.s32 %s230, 1
      %s232 = scalar_select %p229, %s230, %s231
      %p235 = pneg %p229
      %p236 = scmp.eq.s32.totalorder %s18, 3
      %p237 = por %p235, %p236
      %p238 = scmp.ne.s32.totalorder %s230, %s233
      %p239 = scmp.eq.s32.totalorder %s18, 0
      %p240 = por %p238, %p239
      %p241 = scmp.ne.s32.totalorder %s230, %s233
      %p242 = scmp.eq.s32.totalorder %s23, 3
      %p243 = por %p241, %p242
      %p244 = scmp.ne.s32.totalorder %s233, %s234
      %p245 = scmp.eq.s32.totalorder %s23, 0
      %p246 = por %p244, %p245
      %p247 = scmp.ne.s32.totalorder %s233, %s234
      %p248 = scmp.eq.s32.totalorder %s24, 3
      %p249 = por %p247, %p248
      %p251 = scmp.ne.s32.totalorder %s234, %s250
      %p252 = scmp.eq.s32.totalorder %s24, 0
      %p253 = por %p251, %p252
      %p254 = scmp.le.s32.totalorder 1, %s18
      %p255 = scmp.lt.s32.totalorder %s18, 5
      %p256 = pnand %p254, %p255
      %p257 = pneg %p256
      // Predicated region
      $region9: #{message_passing_nn.8} parent=5 // pred_check
        _
      $region10: #{message_passing_nn.8} parent=5 // pred_check_branch
        %259 = sbr.rel (%p256) target = $region12
      $region11: #{message_passing_nn.8} parent=5 // pred_region
        %s260 = ssub.s32 %s18, 1
        // Predicated region
        $region13: #{message_passing_nn.8} parent=11 // pred_check
          %p261 = pneg %p131
        $region14: #{message_passing_nn.8} parent=11 // pred_check_branch
          %263 = sbr.rel (%p261) target = $region16
        $region15: #{message_passing_nn.8} parent=11 // pred_region
          _
        $region16: #{message_passing_nn.8} parent=11 // pred_fallthru
          _
        // Predicated region
        $region17: #{message_passing_nn.8} parent=11 // pred_check
          %p264 = pneg %p152
        $region18: #{message_passing_nn.8} parent=11 // pred_check_branch
          %266 = sbr.rel (%p264) target = $region20
        $region19: #{message_passing_nn.8} parent=11 // pred_region
          _
        $region20: #{message_passing_nn.8} parent=11 // pred_fallthru
          _
        // Predicated region
        $region21: #{message_passing_nn.8} parent=11 // pred_check
          %p267 = pneg %p173
        $region22: #{message_passing_nn.8} parent=11 // pred_check_branch
          %269 = sbr.rel (%p267) target = $region24
        $region23: #{message_passing_nn.8} parent=11 // pred_region
          _
        $region24: #{message_passing_nn.8} parent=11 // pred_fallthru
          _
        // Predicated region
        $region25: #{message_passing_nn.8} parent=11 // pred_check
          %p270 = pneg %p194
        $region26: #{message_passing_nn.8} parent=11 // pred_check_branch
          %272 = sbr.rel (%p270) target = $region28
        $region27: #{message_passing_nn.8} parent=11 // pred_region
          _
        $region28: #{message_passing_nn.8} parent=11 // pred_fallthru
          _
      $region12: #{message_passing_nn.8} parent=5 // pred_fallthru
        _
      %p273 = scmp.lt.s32.totalorder %s18, 4
      // Predicated region
      $region29: #{message_passing_nn.8} parent=5 // pred_check
        %p274 = pneg %p273
      $region30: #{message_passing_nn.8} parent=5 // pred_check_branch
        %276 = sbr.rel (%p274) target = $region32
      $region31: #{message_passing_nn.8} parent=5 // pred_region
        // Predicated region
        $region33: #{message_passing_nn.8} parent=31 // pred_check
          %p277 = pneg %p50
        $region34: #{message_passing_nn.8} parent=31 // pred_check_branch
          %279 = sbr.rel (%p277) target = $region36
        $region35: #{message_passing_nn.8} parent=31 // pred_region
          %s280 = sand.u32 %s40, 1
          %s281 = sand.u32 %s40, 1
          %s282 = smul.addr %s281, 64
          %s283 = scalar_lea.vmem [#allocation3], %s282
          %s284 = smul.u32 4, %s26
          %s285 = smul.addr %s284, 4
          %s286 = scalar_lea.vmem %s0, %s285
          // Predicated region
          $region37: #{message_passing_nn.8} parent=35 // pred_check
            _
          $region38: #{message_passing_nn.8} parent=35 // pred_check_branch
            %288 = sbr.rel (0) target = $region40
          $region39: #{message_passing_nn.8} parent=35 // pred_region
            // Predicated region
            $region41: #{message_passing_nn.8} parent=39 // pred_check
              _
            $region42: #{message_passing_nn.8} parent=39 // pred_check_branch
              %290 = sbr.rel (0) target = $region44
            $region43: #{message_passing_nn.8} parent=39 // pred_region
              loop: start=0, step=1, limit=1
              $region45: #{message_passing_nn.8} parent=43 // loop_pre_header
                _
              $region46: #{message_passing_nn.8} parent=43 // loop_header
                %s292 = sphi 0, %s296
                %p293 = scmp.ge.s32.totalorder %s292, 1
                %s297 = sphi %s286, %s286
                %s298 = sphi %s283, %s283
              $region47: #{message_passing_nn.8} parent=43 // loop_header_branch
                %295 = sbr.rel (%p293) target = $region51
              $region48: #{message_passing_nn.8} parent=43 // loop_body
                %v299 = vld [vmem:[%s297] sm:$0xff]
                %300 = vst [vmem:[%s298] sm:$0xff] %v299
                %v301 = vld [vmem:[%s297 + $0x8] sm:$0xff]
                %302 = vst [vmem:[%s298 + $0x8] sm:$0xff] %v301
                %v303 = vld [vmem:[%s297 + $0x20] sm:$0xff]
                %304 = vst [vmem:[%s298 + $0x10] sm:$0xff] %v303
                %v305 = vld [vmem:[%s297 + $0x28] sm:$0xff]
                %306 = vst [vmem:[%s298 + $0x18] sm:$0xff] %v305
                %v307 = vld [vmem:[%s297 + $0x40] sm:$0xff]
                %308 = vst [vmem:[%s298 + $0x20] sm:$0xff] %v307
                %v309 = vld [vmem:[%s297 + $0x48] sm:$0xff]
                %310 = vst [vmem:[%s298 + $0x28] sm:$0xff] %v309
                %v311 = vld [vmem:[%s297 + $0x60] sm:$0xff]
                %312 = vst [vmem:[%s298 + $0x30] sm:$0xff] %v311
                %v313 = vld [vmem:[%s297 + $0x68] sm:$0xff]
                %314 = vst [vmem:[%s298 + $0x38] sm:$0xff] %v313
              $region49: #{message_passing_nn.8} parent=43 // loop_footer
                %s296 = sadd.s32 1, %s292
              $region50: #{message_passing_nn.8} parent=43 // loop_footer_branch
                %291 = sbr.rel target = $region46
              $region51: #{message_passing_nn.8} parent=43 // loop_exit
                _
            $region44: #{message_passing_nn.8} parent=39 // pred_fallthru
              _
            // Predicated region
            $region52: #{message_passing_nn.8} parent=39 // pred_check
              _
            $region53: #{message_passing_nn.8} parent=39 // pred_check_branch
              %316 = sbr.rel target = $region55
            $region54: #{message_passing_nn.8} parent=39 // pred_region
              _
            $region55: #{message_passing_nn.8} parent=39 // pred_fallthru
              _
          $region40: #{message_passing_nn.8} parent=35 // pred_fallthru
            _
          %317 = vnop
        $region36: #{message_passing_nn.8} parent=31 // pred_fallthru
          _
        // Predicated region
        $region56: #{message_passing_nn.8} parent=31 // pred_check
          %p318 = pneg %p76
        $region57: #{message_passing_nn.8} parent=31 // pred_check_branch
          %320 = sbr.rel (%p318) target = $region59
        $region58: #{message_passing_nn.8} parent=31 // pred_region
          %s321 = sand.u32 %s66, 1
          %s322 = sand.u32 %s66, 1
          %s323 = smul.addr %s322, 128
          %s324 = scalar_lea.vmem [#allocation4], %s323
          %s325 = smul.u32 4, %s25
          %s326 = smul.addr %s325, 8
          %s327 = scalar_lea.vmem %s1, %s326
          // Predicated region
          $region60: #{message_passing_nn.8} parent=58 // pred_check
            _
          $region61: #{message_passing_nn.8} parent=58 // pred_check_branch
            %329 = sbr.rel (0) target = $region63
          $region62: #{message_passing_nn.8} parent=58 // pred_region
            // Predicated region
            $region64: #{message_passing_nn.8} parent=62 // pred_check
              _
            $region65: #{message_passing_nn.8} parent=62 // pred_check_branch
              %331 = sbr.rel (0) target = $region67
            $region66: #{message_passing_nn.8} parent=62 // pred_region
              loop: start=0, step=1, limit=1
              $region68: #{message_passing_nn.8} parent=66 // loop_pre_header
                _
              $region69: #{message_passing_nn.8} parent=66 // loop_header
                %s333 = sphi 0, %s337
                %p334 = scmp.ge.s32.totalorder %s333, 1
                %s338 = sphi %s327, %s327
                %s339 = sphi %s324, %s324
              $region70: #{message_passing_nn.8} parent=66 // loop_header_branch
                %336 = sbr.rel (%p334) target = $region74
              $region71: #{message_passing_nn.8} parent=66 // loop_body
                %v340 = vld [vmem:[%s338] sm:$0xff]
                %341 = vst [vmem:[%s339] sm:$0xff] %v340
                %v342 = vld [vmem:[%s338 + $0x8] sm:$0xff]
                %343 = vst [vmem:[%s339 + $0x8] sm:$0xff] %v342
                %v344 = vld [vmem:[%s338 + $0x10] sm:$0xff]
                %345 = vst [vmem:[%s339 + $0x10] sm:$0xff] %v344
                %v346 = vld [vmem:[%s338 + $0x18] sm:$0xff]
                %347 = vst [vmem:[%s339 + $0x18] sm:$0xff] %v346
                %v348 = vld [vmem:[%s338 + $0x40] sm:$0xff]
                %349 = vst [vmem:[%s339 + $0x20] sm:$0xff] %v348
                %v350 = vld [vmem:[%s338 + $0x48] sm:$0xff]
                %351 = vst [vmem:[%s339 + $0x28] sm:$0xff] %v350
                %v352 = vld [vmem:[%s338 + $0x50] sm:$0xff]
                %353 = vst [vmem:[%s339 + $0x30] sm:$0xff] %v352
                %v354 = vld [vmem:[%s338 + $0x58] sm:$0xff]
                %355 = vst [vmem:[%s339 + $0x38] sm:$0xff] %v354
                %v356 = vld [vmem:[%s338 + $0x80] sm:$0xff]
                %357 = vst [vmem:[%s339 + $0x40] sm:$0xff] %v356
                %v358 = vld [vmem:[%s338 + $0x88] sm:$0xff]
                %359 = vst [vmem:[%s339 + $0x48] sm:$0xff] %v358
                %v360 = vld [vmem:[%s338 + $0x90] sm:$0xff]
                %361 = vst [vmem:[%s339 + $0x50] sm:$0xff] %v360
                %v362 = vld [vmem:[%s338 + $0x98] sm:$0xff]
                %363 = vst [vmem:[%s339 + $0x58] sm:$0xff] %v362
                %v364 = vld [vmem:[%s338 + $0xc0] sm:$0xff]
                %365 = vst [vmem:[%s339 + $0x60] sm:$0xff] %v364
                %v366 = vld [vmem:[%s338 + $0xc8] sm:$0xff]
                %367 = vst [vmem:[%s339 + $0x68] sm:$0xff] %v366
                %v368 = vld [vmem:[%s338 + $0xd0] sm:$0xff]
                %369 = vst [vmem:[%s339 + $0x70] sm:$0xff] %v368
                %v370 = vld [vmem:[%s338 + $0xd8] sm:$0xff]
                %371 = vst [vmem:[%s339 + $0x78] sm:$0xff] %v370
              $region72: #{message_passing_nn.8} parent=66 // loop_footer
                %s337 = sadd.s32 1, %s333
              $region73: #{message_passing_nn.8} parent=66 // loop_footer_branch
                %332 = sbr.rel target = $region69
              $region74: #{message_passing_nn.8} parent=66 // loop_exit
                _
            $region67: #{message_passing_nn.8} parent=62 // pred_fallthru
              _
            // Predicated region
            $region75: #{message_passing_nn.8} parent=62 // pred_check
              _
            $region76: #{message_passing_nn.8} parent=62 // pred_check_branch
              %373 = sbr.rel target = $region78
            $region77: #{message_passing_nn.8} parent=62 // pred_region
              _
            $region78: #{message_passing_nn.8} parent=62 // pred_fallthru
              _
          $region63: #{message_passing_nn.8} parent=58 // pred_fallthru
            _
          %374 = vnop
        $region59: #{message_passing_nn.8} parent=31 // pred_fallthru
          _
        // Predicated region
        $region79: #{message_passing_nn.8} parent=31 // pred_check
          %p375 = pneg %p104
        $region80: #{message_passing_nn.8} parent=31 // pred_check_branch
          %377 = sbr.rel (%p375) target = $region82
        $region81: #{message_passing_nn.8} parent=31 // pred_region
          %s378 = sand.u32 %s94, 1
          %s379 = sand.u32 %s94, 1
          %s380 = smul.addr %s379, 512
          %s381 = scalar_lea.vmem [#allocation5], %s380
          %s382 = smul.u32 16, %s26
          %s383 = smul.u32 4, %s25
          %s384 = smul.addr %s382, 8
          %s385 = sadd.s32 %s383, %s384
          %s386 = smul.addr %s385, 8
          %s387 = scalar_lea.vmem %s2, %s386
          // Predicated region
          $region83: #{message_passing_nn.8} parent=81 // pred_check
            _
          $region84: #{message_passing_nn.8} parent=81 // pred_check_branch
            %389 = sbr.rel (0) target = $region86
          $region85: #{message_passing_nn.8} parent=81 // pred_region
            // Predicated region
            $region87: #{message_passing_nn.8} parent=85 // pred_check
              _
            $region88: #{message_passing_nn.8} parent=85 // pred_check_branch
              %391 = sbr.rel (0) target = $region90
            $region89: #{message_passing_nn.8} parent=85 // pred_region
              loop: start=0, step=1, limit=1
              $region91: #{message_passing_nn.8} parent=89 // loop_pre_header
                _
              $region92: #{message_passing_nn.8} parent=89 // loop_header
                %s393 = sphi 0, %s397
                %p394 = scmp.ge.s32.totalorder %s393, 1
                %s398 = sphi %s387, %s387
                %s399 = sphi %s381, %s381
              $region93: #{message_passing_nn.8} parent=89 // loop_header_branch
                %396 = sbr.rel (%p394) target = $region97
              $region94: #{message_passing_nn.8} parent=89 // loop_body
                %v400 = vld [vmem:[%s398] sm:$0xff]
                %401 = vst [vmem:[%s399] sm:$0xff] %v400
                %v402 = vld [vmem:[%s398 + $0x8] sm:$0xff]
                %403 = vst [vmem:[%s399 + $0x8] sm:$0xff] %v402
                %v404 = vld [vmem:[%s398 + $0x10] sm:$0xff]
                %405 = vst [vmem:[%s399 + $0x10] sm:$0xff] %v404
                %v406 = vld [vmem:[%s398 + $0x18] sm:$0xff]
                %407 = vst [vmem:[%s399 + $0x18] sm:$0xff] %v406
                %v408 = vld [vmem:[%s398 + $0x40] sm:$0xff]
                %409 = vst [vmem:[%s399 + $0x20] sm:$0xff] %v408
                %v410 = vld [vmem:[%s398 + $0x48] sm:$0xff]
                %411 = vst [vmem:[%s399 + $0x28] sm:$0xff] %v410
                %v412 = vld [vmem:[%s398 + $0x50] sm:$0xff]
                %413 = vst [vmem:[%s399 + $0x30] sm:$0xff] %v412
                %v414 = vld [vmem:[%s398 + $0x58] sm:$0xff]
                %415 = vst [vmem:[%s399 + $0x38] sm:$0xff] %v414
                %v416 = vld [vmem:[%s398 + $0x80] sm:$0xff]
                %417 = vst [vmem:[%s399 + $0x40] sm:$0xff] %v416
                %v418 = vld [vmem:[%s398 + $0x88] sm:$0xff]
                %419 = vst [vmem:[%s399 + $0x48] sm:$0xff] %v418
                %v420 = vld [vmem:[%s398 + $0x90] sm:$0xff]
                %421 = vst [vmem:[%s399 + $0x50] sm:$0xff] %v420
                %v422 = vld [vmem:[%s398 + $0x98] sm:$0xff]
                %423 = vst [vmem:[%s399 + $0x58] sm:$0xff] %v422
                %v424 = vld [vmem:[%s398 + $0xc0] sm:$0xff]
                %425 = vst [vmem:[%s399 + $0x60] sm:$0xff] %v424
                %v426 = vld [vmem:[%s398 + $0xc8] sm:$0xff]
                %427 = vst [vmem:[%s399 + $0x68] sm:$0xff] %v426
                %v428 = vld [vmem:[%s398 + $0xd0] sm:$0xff]
                %429 = vst [vmem:[%s399 + $0x70] sm:$0xff] %v428
                %v430 = vld [vmem:[%s398 + $0xd8] sm:$0xff]
                %431 = vst [vmem:[%s399 + $0x78] sm:$0xff] %v430
                %v432 = vld [vmem:[%s398 + $0x100] sm:$0xff]
                %433 = vst [vmem:[%s399 + $0x80] sm:$0xff] %v432
                %v434 = vld [vmem:[%s398 + $0x108] sm:$0xff]
                %435 = vst [vmem:[%s399 + $0x88] sm:$0xff] %v434
                %v436 = vld [vmem:[%s398 + $0x110] sm:$0xff]
                %437 = vst [vmem:[%s399 + $0x90] sm:$0xff] %v436
                %v438 = vld [vmem:[%s398 + $0x118] sm:$0xff]
                %439 = vst [vmem:[%s399 + $0x98] sm:$0xff] %v438
                %v440 = vld [vmem:[%s398 + $0x140] sm:$0xff]
                %441 = vst [vmem:[%s399 + $0xa0] sm:$0xff] %v440
                %v442 = vld [vmem:[%s398 + $0x148] sm:$0xff]
                %443 = vst [vmem:[%s399 + $0xa8] sm:$0xff] %v442
                %v444 = vld [vmem:[%s398 + $0x150] sm:$0xff]
                %445 = vst [vmem:[%s399 + $0xb0] sm:$0xff] %v444
                %v446 = vld [vmem:[%s398 + $0x158] sm:$0xff]
                %447 = vst [vmem:[%s399 + $0xb8] sm:$0xff] %v446
                %v448 = vld [vmem:[%s398 + $0x180] sm:$0xff]
                %449 = vst [vmem:[%s399 + $0xc0] sm:$0xff] %v448
                %v450 = vld [vmem:[%s398 + $0x188] sm:$0xff]
                %451 = vst [vmem:[%s399 + $0xc8] sm:$0xff] %v450
                %v452 = vld [vmem:[%s398 + $0x190] sm:$0xff]
                %453 = vst [vmem:[%s399 + $0xd0] sm:$0xff] %v452
                %v454 = vld [vmem:[%s398 + $0x198] sm:$0xff]
                %455 = vst [vmem:[%s399 + $0xd8] sm:$0xff] %v454
                %v456 = vld [vmem:[%s398 + $0x1c0] sm:$0xff]
                %457 = vst [vmem:[%s399 + $0xe0] sm:$0xff] %v456
                %v458 = vld [vmem:[%s398 + $0x1c8] sm:$0xff]
                %459 = vst [vmem:[%s399 + $0xe8] sm:$0xff] %v458
                %v460 = vld [vmem:[%s398 + $0x1d0] sm:$0xff]
                %461 = vst [vmem:[%s399 + $0xf0] sm:$0xff] %v460
                %v462 = vld [vmem:[%s398 + $0x1d8] sm:$0xff]
                %463 = vst [vmem:[%s399 + $0xf8] sm:$0xff] %v462
                %v464 = vld [vmem:[%s398 + $0x200] sm:$0xff]
                %465 = vst [vmem:[%s399 + $0x100] sm:$0xff] %v464
                %v466 = vld [vmem:[%s398 + $0x208] sm:$0xff]
                %467 = vst [vmem:[%s399 + $0x108] sm:$0xff] %v466
                %v468 = vld [vmem:[%s398 + $0x210] sm:$0xff]
                %469 = vst [vmem:[%s399 + $0x110] sm:$0xff] %v468
                %v470 = vld [vmem:[%s398 + $0x218] sm:$0xff]
                %471 = vst [vmem:[%s399 + $0x118] sm:$0xff] %v470
                %v472 = vld [vmem:[%s398 + $0x240] sm:$0xff]
                %473 = vst [vmem:[%s399 + $0x120] sm:$0xff] %v472
                %v474 = vld [vmem:[%s398 + $0x248] sm:$0xff]
                %475 = vst [vmem:[%s399 + $0x128] sm:$0xff] %v474
                %v476 = vld [vmem:[%s398 + $0x250] sm:$0xff]
                %477 = vst [vmem:[%s399 + $0x130] sm:$0xff] %v476
                %v478 = vld [vmem:[%s398 + $0x258] sm:$0xff]
                %479 = vst [vmem:[%s399 + $0x138] sm:$0xff] %v478
                %v480 = vld [vmem:[%s398 + $0x280] sm:$0xff]
                %481 = vst [vmem:[%s399 + $0x140] sm:$0xff] %v480
                %v482 = vld [vmem:[%s398 + $0x288] sm:$0xff]
                %483 = vst [vmem:[%s399 + $0x148] sm:$0xff] %v482
                %v484 = vld [vmem:[%s398 + $0x290] sm:$0xff]
                %485 = vst [vmem:[%s399 + $0x150] sm:$0xff] %v484
                %v486 = vld [vmem:[%s398 + $0x298] sm:$0xff]
                %487 = vst [vmem:[%s399 + $0x158] sm:$0xff] %v486
                %v488 = vld [vmem:[%s398 + $0x2c0] sm:$0xff]
                %489 = vst [vmem:[%s399 + $0x160] sm:$0xff] %v488
                %v490 = vld [vmem:[%s398 + $0x2c8] sm:$0xff]
                %491 = vst [vmem:[%s399 + $0x168] sm:$0xff] %v490
                %v492 = vld [vmem:[%s398 + $0x2d0] sm:$0xff]
                %493 = vst [vmem:[%s399 + $0x170] sm:$0xff] %v492
                %v494 = vld [vmem:[%s398 + $0x2d8] sm:$0xff]
                %495 = vst [vmem:[%s399 + $0x178] sm:$0xff] %v494
                %v496 = vld [vmem:[%s398 + $0x300] sm:$0xff]
                %497 = vst [vmem:[%s399 + $0x180] sm:$0xff] %v496
                %v498 = vld [vmem:[%s398 + $0x308] sm:$0xff]
                %499 = vst [vmem:[%s399 + $0x188] sm:$0xff] %v498
                %v500 = vld [vmem:[%s398 + $0x310] sm:$0xff]
                %501 = vst [vmem:[%s399 + $0x190] sm:$0xff] %v500
                %v502 = vld [vmem:[%s398 + $0x318] sm:$0xff]
                %503 = vst [vmem:[%s399 + $0x198] sm:$0xff] %v502
                %v504 = vld [vmem:[%s398 + $0x340] sm:$0xff]
                %505 = vst [vmem:[%s399 + $0x1a0] sm:$0xff] %v504
                %v506 = vld [vmem:[%s398 + $0x348] sm:$0xff]
                %507 = vst [vmem:[%s399 + $0x1a8] sm:$0xff] %v506
                %v508 = vld [vmem:[%s398 + $0x350] sm:$0xff]
                %509 = vst [vmem:[%s399 + $0x1b0] sm:$0xff] %v508
                %v510 = vld [vmem:[%s398 + $0x358] sm:$0xff]
                %511 = vst [vmem:[%s399 + $0x1b8] sm:$0xff] %v510
                %v512 = vld [vmem:[%s398 + $0x380] sm:$0xff]
                %513 = vst [vmem:[%s399 + $0x1c0] sm:$0xff] %v512
                %v514 = vld [vmem:[%s398 + $0x388] sm:$0xff]
                %515 = vst [vmem:[%s399 + $0x1c8] sm:$0xff] %v514
                %v516 = vld [vmem:[%s398 + $0x390] sm:$0xff]
                %517 = vst [vmem:[%s399 + $0x1d0] sm:$0xff] %v516
                %v518 = vld [vmem:[%s398 + $0x398] sm:$0xff]
                %519 = vst [vmem:[%s399 + $0x1d8] sm:$0xff] %v518
                %v520 = vld [vmem:[%s398 + $0x3c0] sm:$0xff]
                %521 = vst [vmem:[%s399 + $0x1e0] sm:$0xff] %v520
                %v522 = vld [vmem:[%s398 + $0x3c8] sm:$0xff]
                %523 = vst [vmem:[%s399 + $0x1e8] sm:$0xff] %v522
                %v524 = vld [vmem:[%s398 + $0x3d0] sm:$0xff]
                %525 = vst [vmem:[%s399 + $0x1f0] sm:$0xff] %v524
                %v526 = vld [vmem:[%s398 + $0x3d8] sm:$0xff]
                %527 = vst [vmem:[%s399 + $0x1f8] sm:$0xff] %v526
              $region95: #{message_passing_nn.8} parent=89 // loop_footer
                %s397 = sadd.s32 1, %s393
              $region96: #{message_passing_nn.8} parent=89 // loop_footer_branch
                %392 = sbr.rel target = $region92
              $region97: #{message_passing_nn.8} parent=89 // loop_exit
                _
            $region90: #{message_passing_nn.8} parent=85 // pred_fallthru
              _
            // Predicated region
            $region98: #{message_passing_nn.8} parent=85 // pred_check
              _
            $region99: #{message_passing_nn.8} parent=85 // pred_check_branch
              %529 = sbr.rel target = $region101
            $region100: #{message_passing_nn.8} parent=85 // pred_region
              _
            $region101: #{message_passing_nn.8} parent=85 // pred_fallthru
              _
          $region86: #{message_passing_nn.8} parent=81 // pred_fallthru
            _
          %530 = vnop
        $region82: #{message_passing_nn.8} parent=31 // pred_fallthru
          _
      $region32: #{message_passing_nn.8} parent=5 // pred_fallthru
        _
      %p531 = scmp.le.s32.totalorder 1, %s18
      %p532 = scmp.lt.s32.totalorder %s18, 5
      %p533 = pnand %p531, %p532
      %p534 = pneg %p533
      // Predicated region
      $region102: #{message_passing_nn.8} parent=5 // pred_check
        _
      $region103: #{message_passing_nn.8} parent=5 // pred_check_branch
        %536 = sbr.rel (%p533) target = $region105
      $region104: #{message_passing_nn.8} parent=5 // pred_region
        %s537 = ssub.s32 %s18, 1
        %s538 = sand.u32 %s43, 1
        %s539 = sand.u32 %s43, 1
        %s540 = smul.addr %s539, 64
        %s541 = scalar_lea.vmem [#allocation3], %s540
        // Predicated region
        $region106: #{message_passing_nn.8} parent=104 // pred_check
          %p542 = pneg %p56
        $region107: #{message_passing_nn.8} parent=104 // pred_check_branch
          %544 = sbr.rel (%p542) target = $region109
        $region108: #{message_passing_nn.8} parent=104 // pred_region
          _
        $region109: #{message_passing_nn.8} parent=104 // pred_fallthru
          _
        %s545 = sand.u32 %s69, 1
        %s546 = sand.u32 %s69, 1
        %s547 = smul.addr %s546, 128
        %s548 = scalar_lea.vmem [#allocation4], %s547
        // Predicated region
        $region110: #{message_passing_nn.8} parent=104 // pred_check
          %p549 = pneg %p82
        $region111: #{message_passing_nn.8} parent=104 // pred_check_branch
          %551 = sbr.rel (%p549) target = $region113
        $region112: #{message_passing_nn.8} parent=104 // pred_region
          _
        $region113: #{message_passing_nn.8} parent=104 // pred_fallthru
          _
        %s552 = sand.u32 %s97, 1
        %s553 = sand.u32 %s97, 1
        %s554 = smul.addr %s553, 512
        %s555 = scalar_lea.vmem [#allocation5], %s554
        // Predicated region
        $region114: #{message_passing_nn.8} parent=104 // pred_check
          %p556 = pneg %p110
        $region115: #{message_passing_nn.8} parent=104 // pred_check_branch
          %558 = sbr.rel (%p556) target = $region117
        $region116: #{message_passing_nn.8} parent=104 // pred_region
          _
        $region117: #{message_passing_nn.8} parent=104 // pred_fallthru
          _
        %s559 = sand.u32 %s43, 1
        %s560 = sand.u32 %s43, 1
        %s561 = smul.addr %s560, 64
        %s562 = scalar_lea.vmem [#allocation3], %s561
        %p563 = pneg %p56
        %p564 = pneg %p53
        %s565 = sand.u32 %s69, 1
        %s566 = sand.u32 %s69, 1
        %s567 = smul.addr %s566, 128
        %s568 = scalar_lea.vmem [#allocation4], %s567
        %p569 = pneg %p82
        %p570 = pneg %p79
        %s571 = sand.u32 %s97, 1
        %s572 = sand.u32 %s97, 1
        %s573 = smul.addr %s572, 512
        %s574 = scalar_lea.vmem [#allocation5], %s573
        %p575 = pneg %p110
        %p576 = pneg %p107
        %p577 = pneg %p131
        %p578 = pneg %p128
        %p579 = pneg %p152
        %p580 = pneg %p149
        %p581 = pneg %p173
        %p582 = pneg %p170
        %p583 = pneg %p194
        %p584 = pneg %p191
        %p585 = pneg %p220
        %p586 = pneg %p217
        %s587 = sand.u32 %s207, 1
        %s588 = sand.u32 %s207, 1
        %s589 = smul.addr %s588, 128
        %s590 = scalar_lea.vmem [#allocation6], %s589
        %p591 = pneg %p246
        %p592 = pneg %p243
        %s593 = sand.u32 %s233, 1
        %s594 = scalar_lea.sflag [#allocation8], %s593
        %s595 = sand.u32 %s233, 1
        %s596 = smul.addr %s595, 64
        %s597 = scalar_lea.vmem [#allocation7], %s596
        %s598 = smul.u32 4, %s28
        %s599 = smul.u32 4, %s27
        %s600 = smul.u32 16, %s28
        %s601 = smul.u32 4, %s27
        %s602 = smul.u32 4, %s27
        %s603 = smul.u32 4, %s27
        %p604 = scmp.eq.s32.totalorder %s28, 0
        // Predicated region
        $region118: #{message_passing_nn.8} parent=104 // pred_check
          %p605 = pneg %p604
        $region119: #{message_passing_nn.8} parent=104 // pred_check_branch
          %607 = sbr.rel (%p605) target = $region121
        $region120: #{message_passing_nn.8} parent=104 // pred_region
          %608 = vst [vmem:[#allocation2] sm:$0xff] 0.0
          %609 = vst [vmem:[#allocation2 + $0x8] sm:$0xff] 0.0
          %610 = vst [vmem:[#allocation2 + $0x10] sm:$0xff] 0.0
          %611 = vst [vmem:[#allocation2 + $0x18] sm:$0xff] 0.0
          %612 = vst [vmem:[#allocation2 + $0x20] sm:$0xff] 0.0
          %613 = vst [vmem:[#allocation2 + $0x28] sm:$0xff] 0.0
          %614 = vst [vmem:[#allocation2 + $0x30] sm:$0xff] 0.0
          %615 = vst [vmem:[#allocation2 + $0x38] sm:$0xff] 0.0
          %616 = vst [vmem:[#allocation2 + $0x40] sm:$0xff] 0.0
          %617 = vst [vmem:[#allocation2 + $0x48] sm:$0xff] 0.0
          %618 = vst [vmem:[#allocation2 + $0x50] sm:$0xff] 0.0
          %619 = vst [vmem:[#allocation2 + $0x58] sm:$0xff] 0.0
          %620 = vst [vmem:[#allocation2 + $0x60] sm:$0xff] 0.0
          %621 = vst [vmem:[#allocation2 + $0x68] sm:$0xff] 0.0
          %622 = vst [vmem:[#allocation2 + $0x70] sm:$0xff] 0.0
          %623 = vst [vmem:[#allocation2 + $0x78] sm:$0xff] 0.0
        $region121: #{message_passing_nn.8} parent=104 // pred_fallthru
          _
        %v624 = vld [vmem:[#allocation2] sm:$0xff]
        %v625 = vld [vmem:[#allocation2 + $0x8] sm:$0xff]
        %v626 = vld [vmem:[#allocation2 + $0x10] sm:$0xff]
        %v627 = vld [vmem:[#allocation2 + $0x18] sm:$0xff]
        %v628 = vld [vmem:[#allocation2 + $0x20] sm:$0xff]
        %v629 = vld [vmem:[#allocation2 + $0x28] sm:$0xff]
        %v630 = vld [vmem:[#allocation2 + $0x30] sm:$0xff]
        %v631 = vld [vmem:[#allocation2 + $0x38] sm:$0xff]
        %v632 = vld [vmem:[#allocation2 + $0x40] sm:$0xff]
        %v633 = vld [vmem:[#allocation2 + $0x48] sm:$0xff]
        %v634 = vld [vmem:[#allocation2 + $0x50] sm:$0xff]
        %v635 = vld [vmem:[#allocation2 + $0x58] sm:$0xff]
        %v636 = vld [vmem:[#allocation2 + $0x60] sm:$0xff]
        %v637 = vld [vmem:[#allocation2 + $0x68] sm:$0xff]
        %v638 = vld [vmem:[#allocation2 + $0x70] sm:$0xff]
        %v639 = vld [vmem:[#allocation2 + $0x78] sm:$0xff]
        %v640 = vld [vmem:[%s541] sm:$0xff]
        %v641 = vld [vmem:[%s541 + $0x8] sm:$0xff]
        %v642 = vld [vmem:[%s541 + $0x10] sm:$0xff]
        %v643 = vld [vmem:[%s541 + $0x18] sm:$0xff]
        %v644 = vld [vmem:[%s541 + $0x20] sm:$0xff]
        %v645 = vld [vmem:[%s541 + $0x28] sm:$0xff]
        %v646 = vld [vmem:[%s541 + $0x30] sm:$0xff]
        %v647 = vld [vmem:[%s541 + $0x38] sm:$0xff]
        %v648 = vld [vmem:[%s555] sm:$0xff]
        %v649 = vld [vmem:[%s555 + $0x8] sm:$0xff]
        %v650 = vld [vmem:[%s555 + $0x10] sm:$0xff]
        %v651 = vld [vmem:[%s555 + $0x18] sm:$0xff]
        %v652 = vld [vmem:[%s555 + $0x20] sm:$0xff]
        %v653 = vld [vmem:[%s555 + $0x28] sm:$0xff]
        %v654 = vld [vmem:[%s555 + $0x30] sm:$0xff]
        %v655 = vld [vmem:[%s555 + $0x38] sm:$0xff]
        %v656 = vld [vmem:[%s555 + $0x40] sm:$0xff]
        %v657 = vld [vmem:[%s555 + $0x48] sm:$0xff]
        %v658 = vld [vmem:[%s555 + $0x50] sm:$0xff]
        %v659 = vld [vmem:[%s555 + $0x58] sm:$0xff]
        %v660 = vld [vmem:[%s555 + $0x60] sm:$0xff]
        %v661 = vld [vmem:[%s555 + $0x68] sm:$0xff]
        %v662 = vld [vmem:[%s555 + $0x70] sm:$0xff]
        %v663 = vld [vmem:[%s555 + $0x78] sm:$0xff]
        %v664 = vld [vmem:[%s555 + $0x80] sm:$0xff]
        %v665 = vld [vmem:[%s555 + $0x88] sm:$0xff]
        %v666 = vld [vmem:[%s555 + $0x90] sm:$0xff]
        %v667 = vld [vmem:[%s555 + $0x98] sm:$0xff]
        %v668 = vld [vmem:[%s555 + $0xa0] sm:$0xff]
        %v669 = vld [vmem:[%s555 + $0xa8] sm:$0xff]
        %v670 = vld [vmem:[%s555 + $0xb0] sm:$0xff]
        %v671 = vld [vmem:[%s555 + $0xb8] sm:$0xff]
        %v672 = vld [vmem:[%s555 + $0xc0] sm:$0xff]
        %v673 = vld [vmem:[%s555 + $0xc8] sm:$0xff]
        %v674 = vld [vmem:[%s555 + $0xd0] sm:$0xff]
        %v675 = vld [vmem:[%s555 + $0xd8] sm:$0xff]
        %v676 = vld [vmem:[%s555 + $0xe0] sm:$0xff]
        %v677 = vld [vmem:[%s555 + $0xe8] sm:$0xff]
        %v678 = vld [vmem:[%s555 + $0xf0] sm:$0xff]
        %v679 = vld [vmem:[%s555 + $0xf8] sm:$0xff]
        %v680 = vld [vmem:[%s555 + $0x100] sm:$0xff]
        %v681 = vld [vmem:[%s555 + $0x108] sm:$0xff]
        %v682 = vld [vmem:[%s555 + $0x110] sm:$0xff]
        %v683 = vld [vmem:[%s555 + $0x118] sm:$0xff]
        %v684 = vld [vmem:[%s555 + $0x120] sm:$0xff]
        %v685 = vld [vmem:[%s555 + $0x128] sm:$0xff]
        %v686 = vld [vmem:[%s555 + $0x130] sm:$0xff]
        %v687 = vld [vmem:[%s555 + $0x138] sm:$0xff]
        %v688 = vld [vmem:[%s555 + $0x140] sm:$0xff]
        %v689 = vld [vmem:[%s555 + $0x148] sm:$0xff]
        %v690 = vld [vmem:[%s555 + $0x150] sm:$0xff]
        %v691 = vld [vmem:[%s555 + $0x158] sm:$0xff]
        %v692 = vld [vmem:[%s555 + $0x160] sm:$0xff]
        %v693 = vld [vmem:[%s555 + $0x168] sm:$0xff]
        %v694 = vld [vmem:[%s555 + $0x170] sm:$0xff]
        %v695 = vld [vmem:[%s555 + $0x178] sm:$0xff]
        %v696 = vld [vmem:[%s555 + $0x180] sm:$0xff]
        %v697 = vld [vmem:[%s555 + $0x188] sm:$0xff]
        %v698 = vld [vmem:[%s555 + $0x190] sm:$0xff]
        %v699 = vld [vmem:[%s555 + $0x198] sm:$0xff]
        %v700 = vld [vmem:[%s555 + $0x1a0] sm:$0xff]
        %v701 = vld [vmem:[%s555 + $0x1a8] sm:$0xff]
        %v702 = vld [vmem:[%s555 + $0x1b0] sm:$0xff]
        %v703 = vld [vmem:[%s555 + $0x1b8] sm:$0xff]
        %v704 = vld [vmem:[%s555 + $0x1c0] sm:$0xff]
        %v705 = vld [vmem:[%s555 + $0x1c8] sm:$0xff]
        %v706 = vld [vmem:[%s555 + $0x1d0] sm:$0xff]
        %v707 = vld [vmem:[%s555 + $0x1d8] sm:$0xff]
        %v708 = vld [vmem:[%s555 + $0x1e0] sm:$0xff]
        %v709 = vld [vmem:[%s555 + $0x1e8] sm:$0xff]
        %v710 = vld [vmem:[%s555 + $0x1f0] sm:$0xff]
        %v711 = vld [vmem:[%s555 + $0x1f8] sm:$0xff]
        %v712 = vunpack.c.l.s8.bf16 %v648
        %v713 = vunpack.c.l.s8.bf16 %v649
        %v714 = vunpack.c.l.s8.bf16 %v650
        %v715 = vunpack.c.l.s8.bf16 %v651
        %v716 = vunpack.c.h.s8.bf16 %v648
        %v717 = vunpack.c.h.s8.bf16 %v649
        %v718 = vunpack.c.h.s8.bf16 %v650
        %v719 = vunpack.c.h.s8.bf16 %v651
        %v720 = vunpack.c.l.s8.bf16 %v652
        %v721 = vunpack.c.l.s8.bf16 %v653
        %v722 = vunpack.c.l.s8.bf16 %v654
        %v723 = vunpack.c.l.s8.bf16 %v655
        %v724 = vunpack.c.h.s8.bf16 %v652
        %v725 = vunpack.c.h.s8.bf16 %v653
        %v726 = vunpack.c.h.s8.bf16 %v654
        %v727 = vunpack.c.h.s8.bf16 %v655
        %v728 = vunpack.c.l.s8.bf16 %v656
        %v729 = vunpack.c.l.s8.bf16 %v657
        %v730 = vunpack.c.l.s8.bf16 %v658
        %v731 = vunpack.c.l.s8.bf16 %v659
        %v732 = vunpack.c.h.s8.bf16 %v656
        %v733 = vunpack.c.h.s8.bf16 %v657
        %v734 = vunpack.c.h.s8.bf16 %v658
        %v735 = vunpack.c.h.s8.bf16 %v659
        %v736 = vunpack.c.l.s8.bf16 %v660
        %v737 = vunpack.c.l.s8.bf16 %v661
        %v738 = vunpack.c.l.s8.bf16 %v662
        %v739 = vunpack.c.l.s8.bf16 %v663
        %v740 = vunpack.c.h.s8.bf16 %v660
        %v741 = vunpack.c.h.s8.bf16 %v661
        %v742 = vunpack.c.h.s8.bf16 %v662
        %v743 = vunpack.c.h.s8.bf16 %v663
        %v744 = vunpack.c.l.s8.bf16 %v664
        %v745 = vunpack.c.l.s8.bf16 %v665
        %v746 = vunpack.c.l.s8.bf16 %v666
        %v747 = vunpack.c.l.s8.bf16 %v667
        %v748 = vunpack.c.h.s8.bf16 %v664
        %v749 = vunpack.c.h.s8.bf16 %v665
        %v750 = vunpack.c.h.s8.bf16 %v666
        %v751 = vunpack.c.h.s8.bf16 %v667
        %v752 = vunpack.c.l.s8.bf16 %v668
        %v753 = vunpack.c.l.s8.bf16 %v669
        %v754 = vunpack.c.l.s8.bf16 %v670
        %v755 = vunpack.c.l.s8.bf16 %v671
        %v756 = vunpack.c.h.s8.bf16 %v668
        %v757 = vunpack.c.h.s8.bf16 %v669
        %v758 = vunpack.c.h.s8.bf16 %v670
        %v759 = vunpack.c.h.s8.bf16 %v671
        %v760 = vunpack.c.l.s8.bf16 %v672
        %v761 = vunpack.c.l.s8.bf16 %v673
        %v762 = vunpack.c.l.s8.bf16 %v674
        %v763 = vunpack.c.l.s8.bf16 %v675
        %v764 = vunpack.c.h.s8.bf16 %v672
        %v765 = vunpack.c.h.s8.bf16 %v673
        %v766 = vunpack.c.h.s8.bf16 %v674
        %v767 = vunpack.c.h.s8.bf16 %v675
        %v768 = vunpack.c.l.s8.bf16 %v676
        %v769 = vunpack.c.l.s8.bf16 %v677
        %v770 = vunpack.c.l.s8.bf16 %v678
        %v771 = vunpack.c.l.s8.bf16 %v679
        %v772 = vunpack.c.h.s8.bf16 %v676
        %v773 = vunpack.c.h.s8.bf16 %v677
        %v774 = vunpack.c.h.s8.bf16 %v678
        %v775 = vunpack.c.h.s8.bf16 %v679
        %v776 = vunpack.c.l.s8.bf16 %v680
        %v777 = vunpack.c.l.s8.bf16 %v681
        %v778 = vunpack.c.l.s8.bf16 %v682
        %v779 = vunpack.c.l.s8.bf16 %v683
        %v780 = vunpack.c.h.s8.bf16 %v680
        %v781 = vunpack.c.h.s8.bf16 %v681
        %v782 = vunpack.c.h.s8.bf16 %v682
        %v783 = vunpack.c.h.s8.bf16 %v683
        %v784 = vunpack.c.l.s8.bf16 %v684
        %v785 = vunpack.c.l.s8.bf16 %v685
        %v786 = vunpack.c.l.s8.bf16 %v686
        %v787 = vunpack.c.l.s8.bf16 %v687
        %v788 = vunpack.c.h.s8.bf16 %v684
        %v789 = vunpack.c.h.s8.bf16 %v685
        %v790 = vunpack.c.h.s8.bf16 %v686
        %v791 = vunpack.c.h.s8.bf16 %v687
        %v792 = vunpack.c.l.s8.bf16 %v688
        %v793 = vunpack.c.l.s8.bf16 %v689
        %v794 = vunpack.c.l.s8.bf16 %v690
        %v795 = vunpack.c.l.s8.bf16 %v691
        %v796 = vunpack.c.h.s8.bf16 %v688
        %v797 = vunpack.c.h.s8.bf16 %v689
        %v798 = vunpack.c.h.s8.bf16 %v690
        %v799 = vunpack.c.h.s8.bf16 %v691
        %v800 = vunpack.c.l.s8.bf16 %v692
        %v801 = vunpack.c.l.s8.bf16 %v693
        %v802 = vunpack.c.l.s8.bf16 %v694
        %v803 = vunpack.c.l.s8.bf16 %v695
        %v804 = vunpack.c.h.s8.bf16 %v692
        %v805 = vunpack.c.h.s8.bf16 %v693
        %v806 = vunpack.c.h.s8.bf16 %v694
        %v807 = vunpack.c.h.s8.bf16 %v695
        %v808 = vunpack.c.l.s8.bf16 %v696
        %v809 = vunpack.c.l.s8.bf16 %v697
        %v810 = vunpack.c.l.s8.bf16 %v698
        %v811 = vunpack.c.l.s8.bf16 %v699
        %v812 = vunpack.c.h.s8.bf16 %v696
        %v813 = vunpack.c.h.s8.bf16 %v697
        %v814 = vunpack.c.h.s8.bf16 %v698
        %v815 = vunpack.c.h.s8.bf16 %v699
        %v816 = vunpack.c.l.s8.bf16 %v700
        %v817 = vunpack.c.l.s8.bf16 %v701
        %v818 = vunpack.c.l.s8.bf16 %v702
        %v819 = vunpack.c.l.s8.bf16 %v703
        %v820 = vunpack.c.h.s8.bf16 %v700
        %v821 = vunpack.c.h.s8.bf16 %v701
        %v822 = vunpack.c.h.s8.bf16 %v702
        %v823 = vunpack.c.h.s8.bf16 %v703
        %v824 = vunpack.c.l.s8.bf16 %v704
        %v825 = vunpack.c.l.s8.bf16 %v705
        %v826 = vunpack.c.l.s8.bf16 %v706
        %v827 = vunpack.c.l.s8.bf16 %v707
        %v828 = vunpack.c.h.s8.bf16 %v704
        %v829 = vunpack.c.h.s8.bf16 %v705
        %v830 = vunpack.c.h.s8.bf16 %v706
        %v831 = vunpack.c.h.s8.bf16 %v707
        %v832 = vunpack.c.l.s8.bf16 %v708
        %v833 = vunpack.c.l.s8.bf16 %v709
        %v834 = vunpack.c.l.s8.bf16 %v710
        %v835 = vunpack.c.l.s8.bf16 %v711
        %v836 = vunpack.c.h.s8.bf16 %v708
        %v837 = vunpack.c.h.s8.bf16 %v709
        %v838 = vunpack.c.h.s8.bf16 %v710
        %v839 = vunpack.c.h.s8.bf16 %v711
        %v848 = vunpack.c.l.b16 %v640
        %v849 = vunpack.c.h.b16 %v640
        %v850 = vunpack.c.l.b16 %v641
        %v851 = vunpack.c.h.b16 %v641
        %v852 = vunpack.c.l.b16 %v642
        %v853 = vunpack.c.h.b16 %v642
        %v854 = vunpack.c.l.b16 %v643
        %v855 = vunpack.c.h.b16 %v643
        %v856 = vunpack.c.l.b16 %v644
        %v857 = vunpack.c.h.b16 %v644
        %v858 = vunpack.c.l.b16 %v645
        %v859 = vunpack.c.h.b16 %v645
        %v860 = vunpack.c.l.b16 %v646
        %v861 = vunpack.c.h.b16 %v646
        %v862 = vunpack.c.l.b16 %v647
        %v863 = vunpack.c.h.b16 %v647
        %v864 = vpack.c.b16 %v852, %v848
        %v865 = vpack.c.b16 %v853, %v849
        %v866 = vpack.c.b16 %v854, %v850
        %v867 = vpack.c.b16 %v855, %v851
        %v868 = vpack.c.b16 %v860, %v856
        %v869 = vpack.c.b16 %v861, %v857
        %v870 = vpack.c.b16 %v862, %v858
        %v871 = vpack.c.b16 %v863, %v859
        %880 = vmatprep.subr.bf16.mxu0 %v713
        %881 = vmatpush1.bf16.msra.mxu0 %v712
        %882 = vmatprep.subr.bf16.mxu0 %v717
        %883 = vmatpush1.bf16.msra.mxu0 %v716
        %884 = vmatprep.subr.bf16.mxu0 %v721
        %885 = vmatpush1.bf16.msra.mxu0 %v720
        %886 = vmatprep.subr.bf16.mxu0 %v725
        %887 = vmatpush1.bf16.msra.mxu0 %v724
        %888 = vmatprep.subr.bf16.mxu0 %v729
        %889 = vmatpush1.bf16.msra.mxu0 %v728
        %890 = vmatprep.subr.bf16.mxu0 %v733
        %891 = vmatpush1.bf16.msra.mxu0 %v732
        %892 = vmatprep.subr.bf16.mxu0 %v737
        %893 = vmatpush1.bf16.msra.mxu0 %v736
        %894 = vmatprep.subr.bf16.mxu0 %v741
        %895 = vmatpush1.bf16.msra.mxu0 %v740
        %896 = vmatprep.subr.bf16.mxu0 %v745
        %897 = vmatpush1.bf16.msra.mxu0 %v744
        %898 = vmatprep.subr.bf16.mxu0 %v749
        %899 = vmatpush1.bf16.msra.mxu0 %v748
        %900 = vmatprep.subr.bf16.mxu0 %v753
        %901 = vmatpush1.bf16.msra.mxu0 %v752
        %902 = vmatprep.subr.bf16.mxu0 %v757
        %903 = vmatpush1.bf16.msra.mxu0 %v756
        %904 = vmatprep.subr.bf16.mxu0 %v761
        %905 = vmatpush1.bf16.msra.mxu0 %v760
        %906 = vmatprep.subr.bf16.mxu0 %v765
        %907 = vmatpush1.bf16.msra.mxu0 %v764
        %908 = vmatprep.subr.bf16.mxu0 %v769
        %909 = vmatpush1.bf16.msra.mxu0 %v768
        %910 = vmatprep.subr.bf16.mxu0 %v773
        %911 = vmatpush1.bf16.msra.mxu0 %v772
        %912 = vmatprep.mubr.bf16.mxu0 %v865
        %913 = vmatmul.mubr.bf16.gmra.mrb[0].mxu0 %v864
        %v914 = vpop.f32.mrb[0].mxu0
        %v915 = vadd.f32 0.0, %v914
        %v916 = vpop.f32.mrb[0].mxu0
        %v917 = vadd.f32 0.0, %v916
        %v918 = vpop.f32.mrb[0].mxu0
        %v919 = vadd.f32 0.0, %v918
        %v920 = vpop.f32.mrb[0].mxu0
        %v921 = vadd.f32 0.0, %v920
        %922 = vmatprep.mubr.bf16.mxu0 %v869
        %923 = vmatmul.mubr.bf16.gmra.mrb[0].mxu0 %v868
        %v924 = vpop.f32.mrb[0].mxu0
        %v925 = vadd.f32 0.0, %v924
        %v926 = vpop.f32.mrb[0].mxu0
        %v927 = vadd.f32 0.0, %v926
        %v928 = vpop.f32.mrb[0].mxu0
        %v929 = vadd.f32 0.0, %v928
        %v930 = vpop.f32.mrb[0].mxu0
        %v931 = vadd.f32 0.0, %v930
        %932 = vdwg.mxu0
        %933 = vmatprep.subr.bf16.mxu0 %v777
        %934 = vmatpush1.bf16.msra.mxu0 %v776
        %935 = vmatprep.subr.bf16.mxu0 %v781
        %936 = vmatpush1.bf16.msra.mxu0 %v780
        %937 = vmatprep.subr.bf16.mxu0 %v785
        %938 = vmatpush1.bf16.msra.mxu0 %v784
        %939 = vmatprep.subr.bf16.mxu0 %v789
        %940 = vmatpush1.bf16.msra.mxu0 %v788
        %941 = vmatprep.subr.bf16.mxu0 %v793
        %942 = vmatpush1.bf16.msra.mxu0 %v792
        %943 = vmatprep.subr.bf16.mxu0 %v797
        %944 = vmatpush1.bf16.msra.mxu0 %v796
        %945 = vmatprep.subr.bf16.mxu0 %v801
        %946 = vmatpush1.bf16.msra.mxu0 %v800
        %947 = vmatprep.subr.bf16.mxu0 %v805
        %948 = vmatpush1.bf16.msra.mxu0 %v804
        %949 = vmatprep.subr.bf16.mxu0 %v809
        %950 = vmatpush1.bf16.msra.mxu0 %v808
        %951 = vmatprep.subr.bf16.mxu0 %v813
        %952 = vmatpush1.bf16.msra.mxu0 %v812
        %953 = vmatprep.subr.bf16.mxu0 %v817
        %954 = vmatpush1.bf16.msra.mxu0 %v816
        %955 = vmatprep.subr.bf16.mxu0 %v821
        %956 = vmatpush1.bf16.msra.mxu0 %v820
        %957 = vmatprep.subr.bf16.mxu0 %v825
        %958 = vmatpush1.bf16.msra.mxu0 %v824
        %959 = vmatprep.subr.bf16.mxu0 %v829
        %960 = vmatpush1.bf16.msra.mxu0 %v828
        %961 = vmatprep.subr.bf16.mxu0 %v833
        %962 = vmatpush1.bf16.msra.mxu0 %v832
        %963 = vmatprep.subr.bf16.mxu0 %v837
        %964 = vmatpush1.bf16.msra.mxu0 %v836
        %965 = vmatprep.mubr.bf16.mxu0 %v867
        %966 = vmatmul.mubr.bf16.gmra.mrb[0].mxu0 %v866
        %v967 = vpop.f32.mrb[0].mxu0
        %v968 = vadd.f32 %v915, %v967
        %v969 = vpop.f32.mrb[0].mxu0
        %v970 = vadd.f32 %v917, %v969
        %v971 = vpop.f32.mrb[0].mxu0
        %v972 = vadd.f32 %v919, %v971
        %v973 = vpop.f32.mrb[0].mxu0
        %v974 = vadd.f32 %v921, %v973
        %975 = vmatprep.mubr.bf16.mxu0 %v871
        %976 = vmatmul.mubr.bf16.gmra.mrb[0].mxu0 %v870
        %v977 = vpop.f32.mrb[0].mxu0
        %v978 = vadd.f32 %v925, %v977
        %v979 = vpop.f32.mrb[0].mxu0
        %v980 = vadd.f32 %v927, %v979
        %v981 = vpop.f32.mrb[0].mxu0
        %v982 = vadd.f32 %v929, %v981
        %v983 = vpop.f32.mrb[0].mxu0
        %v984 = vadd.f32 %v931, %v983
        %985 = vdwg.mxu0
        %986 = vmatprep.subr.bf16.mxu0 %v715
        %987 = vmatpush1.bf16.msra.mxu0 %v714
        %988 = vmatprep.subr.bf16.mxu0 %v719
        %989 = vmatpush1.bf16.msra.mxu0 %v718
        %990 = vmatprep.subr.bf16.mxu0 %v723
        %991 = vmatpush1.bf16.msra.mxu0 %v722
        %992 = vmatprep.subr.bf16.mxu0 %v727
        %993 = vmatpush1.bf16.msra.mxu0 %v726
        %994 = vmatprep.subr.bf16.mxu0 %v731
        %995 = vmatpush1.bf16.msra.mxu0 %v730
        %996 = vmatprep.subr.bf16.mxu0 %v735
        %997 = vmatpush1.bf16.msra.mxu0 %v734
        %998 = vmatprep.subr.bf16.mxu0 %v739
        %999 = vmatpush1.bf16.msra.mxu0 %v738
        %1000 = vmatprep.subr.bf16.mxu0 %v743
        %1001 = vmatpush1.bf16.msra.mxu0 %v742
        %1002 = vmatprep.subr.bf16.mxu0 %v747
        %1003 = vmatpush1.bf16.msra.mxu0 %v746
        %1004 = vmatprep.subr.bf16.mxu0 %v751
        %1005 = vmatpush1.bf16.msra.mxu0 %v750
        %1006 = vmatprep.subr.bf16.mxu0 %v755
        %1007 = vmatpush1.bf16.msra.mxu0 %v754
        %1008 = vmatprep.subr.bf16.mxu0 %v759
        %1009 = vmatpush1.bf16.msra.mxu0 %v758
        %1010 = vmatprep.subr.bf16.mxu0 %v763
        %1011 = vmatpush1.bf16.msra.mxu0 %v762
        %1012 = vmatprep.subr.bf16.mxu0 %v767
        %1013 = vmatpush1.bf16.msra.mxu0 %v766
        %1014 = vmatprep.subr.bf16.mxu0 %v771
        %1015 = vmatpush1.bf16.msra.mxu0 %v770
        %1016 = vmatprep.subr.bf16.mxu0 %v775
        %1017 = vmatpush1.bf16.msra.mxu0 %v774
        %1018 = vmatprep.mubr.bf16.mxu0 %v865
        %1019 = vmatmul.mubr.bf16.gmra.mrb[0].mxu0 %v864
        %v1020 = vpop.f32.mrb[0].mxu0
        %v1021 = vadd.f32 0.0, %v1020
        %v1022 = vpop.f32.mrb[0].mxu0
        %v1023 = vadd.f32 0.0, %v1022
        %v1024 = vpop.f32.mrb[0].mxu0
        %v1025 = vadd.f32 0.0, %v1024
        %v1026 = vpop.f32.mrb[0].mxu0
        %v1027 = vadd.f32 0.0, %v1026
        %1028 = vmatprep.mubr.bf16.mxu0 %v869
        %1029 = vmatmul.mubr.bf16.gmra.mrb[0].mxu0 %v868
        %v1030 = vpop.f32.mrb[0].mxu0
        %v1031 = vadd.f32 0.0, %v1030
        %v1032 = vpop.f32.mrb[0].mxu0
        %v1033 = vadd.f32 0.0, %v1032
        %v1034 = vpop.f32.mrb[0].mxu0
        %v1035 = vadd.f32 0.0, %v1034
        %v1036 = vpop.f32.mrb[0].mxu0
        %v1037 = vadd.f32 0.0, %v1036
        %1038 = vdwg.mxu0
        %1039 = vmatprep.subr.bf16.mxu0 %v779
        %1040 = vmatpush1.bf16.msra.mxu0 %v778
        %1041 = vmatprep.subr.bf16.mxu0 %v783
        %1042 = vmatpush1.bf16.msra.mxu0 %v782
        %1043 = vmatprep.subr.bf16.mxu0 %v787
        %1044 = vmatpush1.bf16.msra.mxu0 %v786
        %1045 = vmatprep.subr.bf16.mxu0 %v791
        %1046 = vmatpush1.bf16.msra.mxu0 %v790
        %1047 = vmatprep.subr.bf16.mxu0 %v795
        %1048 = vmatpush1.bf16.msra.mxu0 %v794
        %1049 = vmatprep.subr.bf16.mxu0 %v799
        %1050 = vmatpush1.bf16.msra.mxu0 %v798
        %1051 = vmatprep.subr.bf16.mxu0 %v803
        %1052 = vmatpush1.bf16.msra.mxu0 %v802
        %1053 = vmatprep.subr.bf16.mxu0 %v807
        %1054 = vmatpush1.bf16.msra.mxu0 %v806
        %1055 = vmatprep.subr.bf16.mxu0 %v811
        %1056 = vmatpush1.bf16.msra.mxu0 %v810
        %1057 = vmatprep.subr.bf16.mxu0 %v815
        %1058 = vmatpush1.bf16.msra.mxu0 %v814
        %1059 = vmatprep.subr.bf16.mxu0 %v819
        %1060 = vmatpush1.bf16.msra.mxu0 %v818
        %1061 = vmatprep.subr.bf16.mxu0 %v823
        %1062 = vmatpush1.bf16.msra.mxu0 %v822
        %1063 = vmatprep.subr.bf16.mxu0 %v827
        %1064 = vmatpush1.bf16.msra.mxu0 %v826
        %1065 = vmatprep.subr.bf16.mxu0 %v831
        %1066 = vmatpush1.bf16.msra.mxu0 %v830
        %1067 = vmatprep.subr.bf16.mxu0 %v835
        %1068 = vmatpush1.bf16.msra.mxu0 %v834
        %1069 = vmatprep.subr.bf16.mxu0 %v839
        %1070 = vmatpush1.bf16.msra.mxu0 %v838
        %1071 = vmatprep.mubr.bf16.mxu0 %v867
        %1072 = vmatmul.mubr.bf16.gmra.mrb[0].mxu0 %v866
        %v1073 = vpop.f32.mrb[0].mxu0
        %v1074 = vadd.f32 %v1021, %v1073
        %v1075 = vpop.f32.mrb[0].mxu0
        %v1076 = vadd.f32 %v1023, %v1075
        %v1077 = vpop.f32.mrb[0].mxu0
        %v1078 = vadd.f32 %v1025, %v1077
        %v1079 = vpop.f32.mrb[0].mxu0
        %v1080 = vadd.f32 %v1027, %v1079
        %1081 = vmatprep.mubr.bf16.mxu0 %v871
        %1082 = vmatmul.mubr.bf16.gmra.mrb[0].mxu0 %v870
        %v1083 = vpop.f32.mrb[0].mxu0
        %v1084 = vadd.f32 %v1031, %v1083
        %v1085 = vpop.f32.mrb[0].mxu0
        %v1086 = vadd.f32 %v1033, %v1085
        %v1087 = vpop.f32.mrb[0].mxu0
        %v1088 = vadd.f32 %v1035, %v1087
        %v1089 = vpop.f32.mrb[0].mxu0
        %v1090 = vadd.f32 %v1037, %v1089
        %1091 = vdwg.mxu0
        %v1092 = vadd.f32 %v624, %v968
        %v1093 = vadd.f32 %v625, %v970
        %v1094 = vadd.f32 %v626, %v1074
        %v1095 = vadd.f32 %v627, %v1076
        %v1096 = vadd.f32 %v628, %v972
        %v1097 = vadd.f32 %v629, %v974
        %v1098 = vadd.f32 %v630, %v1078
        %v1099 = vadd.f32 %v631, %v1080
        %v1100 = vadd.f32 %v632, %v978
        %v1101 = vadd.f32 %v633, %v980
        %v1102 = vadd.f32 %v634, %v1084
        %v1103 = vadd.f32 %v635, %v1086
        %v1104 = vadd.f32 %v636, %v982
        %v1105 = vadd.f32 %v637, %v984
        %v1106 = vadd.f32 %v638, %v1088
        %v1107 = vadd.f32 %v639, %v1090
        %1108 = vst [vmem:[#allocation2] sm:$0xff] %v1092
        %1109 = vst [vmem:[#allocation2 + $0x8] sm:$0xff] %v1093
        %1110 = vst [vmem:[#allocation2 + $0x10] sm:$0xff] %v1094
        %1111 = vst [vmem:[#allocation2 + $0x18] sm:$0xff] %v1095
        %1112 = vst [vmem:[#allocation2 + $0x20] sm:$0xff] %v1096
        %1113 = vst [vmem:[#allocation2 + $0x28] sm:$0xff] %v1097
        %1114 = vst [vmem:[#allocation2 + $0x30] sm:$0xff] %v1098
        %1115 = vst [vmem:[#allocation2 + $0x38] sm:$0xff] %v1099
        %1116 = vst [vmem:[#allocation2 + $0x40] sm:$0xff] %v1100
        %1117 = vst [vmem:[#allocation2 + $0x48] sm:$0xff] %v1101
        %1118 = vst [vmem:[#allocation2 + $0x50] sm:$0xff] %v1102
        %1119 = vst [vmem:[#allocation2 + $0x58] sm:$0xff] %v1103
        %1120 = vst [vmem:[#allocation2 + $0x60] sm:$0xff] %v1104
        %1121 = vst [vmem:[#allocation2 + $0x68] sm:$0xff] %v1105
        %1122 = vst [vmem:[#allocation2 + $0x70] sm:$0xff] %v1106
        %1123 = vst [vmem:[#allocation2 + $0x78] sm:$0xff] %v1107
        %p1124 = scmp.eq.s32.totalorder %s28, 1
        // Predicated region
        $region122: #{message_passing_nn.8} parent=104 // pred_check
          %p1125 = pneg %p1124
        $region123: #{message_passing_nn.8} parent=104 // pred_check_branch
          %1127 = sbr.rel (%p1125) target = $region125
        $region124: #{message_passing_nn.8} parent=104 // pred_region
          %v1128 = vld [vmem:[%s3] sm:$0xff]
          %v1129 = vld [vmem:[%s3 + $0x8] sm:$0xff]
          %v1130 = vld [vmem:[%s3 + $0x10] sm:$0xff]
          %v1131 = vld [vmem:[%s3 + $0x18] sm:$0xff]
          %v1132 = vld [vmem:[#allocation2] sm:$0xff]
          %v1133 = vld [vmem:[#allocation2 + $0x8] sm:$0xff]
          %v1134 = vld [vmem:[#allocation2 + $0x10] sm:$0xff]
          %v1135 = vld [vmem:[#allocation2 + $0x18] sm:$0xff]
          %v1136 = vld [vmem:[#allocation2 + $0x20] sm:$0xff]
          %v1137 = vld [vmem:[#allocation2 + $0x28] sm:$0xff]
          %v1138 = vld [vmem:[#allocation2 + $0x30] sm:$0xff]
          %v1139 = vld [vmem:[#allocation2 + $0x38] sm:$0xff]
          %v1140 = vld [vmem:[#allocation2 + $0x40] sm:$0xff]
          %v1141 = vld [vmem:[#allocation2 + $0x48] sm:$0xff]
          %v1142 = vld [vmem:[#allocation2 + $0x50] sm:$0xff]
          %v1143 = vld [vmem:[#allocation2 + $0x58] sm:$0xff]
          %v1144 = vld [vmem:[#allocation2 + $0x60] sm:$0xff]
          %v1145 = vld [vmem:[#allocation2 + $0x68] sm:$0xff]
          %v1146 = vld [vmem:[#allocation2 + $0x70] sm:$0xff]
          %v1147 = vld [vmem:[#allocation2 + $0x78] sm:$0xff]
          %v1148 = vld [vmem:[%s4] sm:$0xff]
          %v1149 = vld [vmem:[%s4 + $0x8] sm:$0xff]
          %v1150 = vld [vmem:[%s4 + $0x10] sm:$0xff]
          %v1151 = vld [vmem:[%s4 + $0x18] sm:$0xff]
          %1153 = vset.pattern.permute.xlu0 0
          %1154 = vperm.xlu0 %1153, %v1148
          %v1155 = vpop.permute.xlu0 %1154
          %1158 = vset.pattern.permute.xlu0 0
          %1159 = vperm.xlu0 %1158, %v1149
          %v1160 = vpop.permute.xlu0 %1159
          %1163 = vset.pattern.permute.xlu0 0
          %1164 = vperm.xlu0 %1163, %v1150
          %v1165 = vpop.permute.xlu0 %1164
          %1168 = vset.pattern.permute.xlu0 0
          %1169 = vperm.xlu0 %1168, %v1151
          %v1170 = vpop.permute.xlu0 %1169
          %vm1172 = vcmask 261120
          %v1174 = vsel %vm1172, %v1128, 0
          %v1177 = vsel %vm1172, %v1129, 0
          %v1180 = vsel %vm1172, %v1130, 0
          %v1183 = vsel %vm1172, %v1131, 0
          %1185 = vmatprep.subr.mxu0 %v1133
          %1186 = vmatpush1.msra.mxu0 %v1132
          %1187 = vmatprep.subr.mxu0 %v1137
          %1188 = vmatpush1.msra.mxu0 %v1136
          %1189 = vmatprep.subr.mxu0 %v1141
          %1190 = vmatpush1.msra.mxu0 %v1140
          %1191 = vmatprep.subr.mxu0 %v1145
          %1192 = vmatpush1.msra.mxu0 %v1144
          %1193 = vmatprep.subr.mxu0 0.0
          %1194 = vmatpush1.msra.mxu0 0.0
          %1195 = vmatprep.subr.mxu0 0.0
          %1196 = vmatpush1.msra.mxu0 0.0
          %1197 = vmatprep.subr.mxu0 0.0
          %1198 = vmatpush1.msra.mxu0 0.0
          %1199 = vmatprep.subr.mxu0 0.0
          %1200 = vmatpush1.msra.mxu0 0.0
          %1201 = vmatprep.subr.mxu0 0.0
          %1202 = vmatpush1.msra.mxu0 0.0
          %1203 = vmatprep.subr.mxu0 0.0
          %1204 = vmatpush1.msra.mxu0 0.0
          %1205 = vmatprep.subr.mxu0 0.0
          %1206 = vmatpush1.msra.mxu0 0.0
          %1207 = vmatprep.subr.mxu0 0.0
          %1208 = vmatpush1.msra.mxu0 0.0
          %1209 = vmatprep.subr.mxu0 0.0
          %1210 = vmatpush1.msra.mxu0 0.0
          %1211 = vmatprep.subr.mxu0 0.0
          %1212 = vmatpush1.msra.mxu0 0.0
          %1213 = vmatprep.subr.mxu0 0.0
          %1214 = vmatpush1.msra.mxu0 0.0
          %1215 = vmatprep.subr.mxu0 0.0
          %1216 = vmatpush1.msra.mxu0 0.0
          %1217 = vmatprep.subr.mxu0 0.0
          %1218 = vmatpush1.msra.mxu0 0.0
          %1219 = vmatprep.subr.mxu0 0.0
          %1220 = vmatpush1.msra.mxu0 0.0
          %1221 = vmatprep.subr.mxu0 0.0
          %1222 = vmatpush1.msra.mxu0 0.0
          %1223 = vmatprep.subr.mxu0 0.0
          %1224 = vmatpush1.msra.mxu0 0.0
          %1225 = vmatprep.subr.mxu0 0.0
          %1226 = vmatpush1.msra.mxu0 0.0
          %1227 = vmatprep.subr.mxu0 0.0
          %1228 = vmatpush1.msra.mxu0 0.0
          %1229 = vmatprep.subr.mxu0 0.0
          %1230 = vmatpush1.msra.mxu0 0.0
          %1231 = vmatprep.subr.mxu0 0.0
          %1232 = vmatpush1.msra.mxu0 0.0
          %1233 = vmatprep.subr.mxu0 0.0
          %1234 = vmatpush1.msra.mxu0 0.0
          %1235 = vmatprep.subr.mxu0 0.0
          %1236 = vmatpush1.msra.mxu0 0.0
          %1237 = vmatprep.subr.mxu0 0.0
          %1238 = vmatpush1.msra.mxu0 0.0
          %1239 = vmatprep.subr.mxu0 0.0
          %1240 = vmatpush1.msra.mxu0 0.0
          %1241 = vmatprep.subr.mxu0 0.0
          %1242 = vmatpush1.msra.mxu0 0.0
          %1243 = vmatprep.subr.mxu0 0.0
          %1244 = vmatpush1.msra.mxu0 0.0
          %1245 = vmatprep.subr.mxu0 0.0
          %1246 = vmatpush1.msra.mxu0 0.0
          %1247 = vmatprep.subr.mxu0 0.0
          %1248 = vmatpush1.msra.mxu0 0.0
          %1249 = vmatprep.mubr.f32.mxu0 0.0
          %1250 = vmatmul.mubr.f32.gmra.mrb[0].mxu0 %v1174
          %v1251 = vpop.f32.mrb[0].mxu0
          %v1252 = vadd.f32 %v1155, %v1251
          %v1253 = vpop.f32.mrb[0].mxu0
          %v1254 = vadd.f32 %v1155, %v1253
          %1255 = vmatprep.mubr.f32.mxu0 0.0
          %1256 = vmatmul.mubr.f32.gmra.mrb[0].mxu0 %v1177
          %v1257 = vpop.f32.mrb[0].mxu0
          %v1258 = vadd.f32 %v1160, %v1257
          %v1259 = vpop.f32.mrb[0].mxu0
          %v1260 = vadd.f32 %v1160, %v1259
          %1261 = vmatprep.mubr.f32.mxu0 0.0
          %1262 = vmatmul.mubr.f32.gmra.mrb[0].mxu0 %v1180
          %v1263 = vpop.f32.mrb[0].mxu0
          %v1264 = vadd.f32 %v1165, %v1263
          %v1265 = vpop.f32.mrb[0].mxu0
          %v1266 = vadd.f32 %v1165, %v1265
          %1267 = vmatprep.mubr.f32.mxu0 0.0
          %1268 = vmatmul.mubr.f32.gmra.mrb[0].mxu0 %v1183
          %v1269 = vpop.f32.mrb[0].mxu0
          %v1270 = vadd.f32 %v1170, %v1269
          %v1271 = vpop.f32.mrb[0].mxu0
          %v1272 = vadd.f32 %v1170, %v1271
          %1273 = vdwg.mxu0
          %1274 = vmatprep.subr.mxu0 %v1135
          %1275 = vmatpush1.msra.mxu0 %v1134
          %1276 = vmatprep.subr.mxu0 %v1139
          %1277 = vmatpush1.msra.mxu0 %v1138
          %1278 = vmatprep.subr.mxu0 %v1143
          %1279 = vmatpush1.msra.mxu0 %v1142
          %1280 = vmatprep.subr.mxu0 %v1147
          %1281 = vmatpush1.msra.mxu0 %v1146
          %1282 = vmatprep.subr.mxu0 0.0
          %1283 = vmatpush1.msra.mxu0 0.0
          %1284 = vmatprep.subr.mxu0 0.0
          %1285 = vmatpush1.msra.mxu0 0.0
          %1286 = vmatprep.subr.mxu0 0.0
          %1287 = vmatpush1.msra.mxu0 0.0
          %1288 = vmatprep.subr.mxu0 0.0
          %1289 = vmatpush1.msra.mxu0 0.0
          %1290 = vmatprep.subr.mxu0 0.0
          %1291 = vmatpush1.msra.mxu0 0.0
          %1292 = vmatprep.subr.mxu0 0.0
          %1293 = vmatpush1.msra.mxu0 0.0
          %1294 = vmatprep.subr.mxu0 0.0
          %1295 = vmatpush1.msra.mxu0 0.0
          %1296 = vmatprep.subr.mxu0 0.0
          %1297 = vmatpush1.msra.mxu0 0.0
          %1298 = vmatprep.subr.mxu0 0.0
          %1299 = vmatpush1.msra.mxu0 0.0
          %1300 = vmatprep.subr.mxu0 0.0
          %1301 = vmatpush1.msra.mxu0 0.0
          %1302 = vmatprep.subr.mxu0 0.0
          %1303 = vmatpush1.msra.mxu0 0.0
          %1304 = vmatprep.subr.mxu0 0.0
          %1305 = vmatpush1.msra.mxu0 0.0
          %1306 = vmatprep.subr.mxu0 0.0
          %1307 = vmatpush1.msra.mxu0 0.0
          %1308 = vmatprep.subr.mxu0 0.0
          %1309 = vmatpush1.msra.mxu0 0.0
          %1310 = vmatprep.subr.mxu0 0.0
          %1311 = vmatpush1.msra.mxu0 0.0
          %1312 = vmatprep.subr.mxu0 0.0
          %1313 = vmatpush1.msra.mxu0 0.0
          %1314 = vmatprep.subr.mxu0 0.0
          %1315 = vmatpush1.msra.mxu0 0.0
          %1316 = vmatprep.subr.mxu0 0.0
          %1317 = vmatpush1.msra.mxu0 0.0
          %1318 = vmatprep.subr.mxu0 0.0
          %1319 = vmatpush1.msra.mxu0 0.0
          %1320 = vmatprep.subr.mxu0 0.0
          %1321 = vmatpush1.msra.mxu0 0.0
          %1322 = vmatprep.subr.mxu0 0.0
          %1323 = vmatpush1.msra.mxu0 0.0
          %1324 = vmatprep.subr.mxu0 0.0
          %1325 = vmatpush1.msra.mxu0 0.0
          %1326 = vmatprep.subr.mxu0 0.0
          %1327 = vmatpush1.msra.mxu0 0.0
          %1328 = vmatprep.subr.mxu0 0.0
          %1329 = vmatpush1.msra.mxu0 0.0
          %1330 = vmatprep.subr.mxu0 0.0
          %1331 = vmatpush1.msra.mxu0 0.0
          %1332 = vmatprep.subr.mxu0 0.0
          %1333 = vmatpush1.msra.mxu0 0.0
          %1334 = vmatprep.subr.mxu0 0.0
          %1335 = vmatpush1.msra.mxu0 0.0
          %1336 = vmatprep.subr.mxu0 0.0
          %1337 = vmatpush1.msra.mxu0 0.0
          %1338 = vmatprep.mubr.f32.mxu0 0.0
          %1339 = vmatmul.mubr.f32.gmra.mrb[0].mxu0 %v1174
          %v1340 = vpop.f32.mrb[0].mxu0
          %v1341 = vadd.f32 %v1155, %v1340
          %v1342 = vpop.f32.mrb[0].mxu0
          %v1343 = vadd.f32 %v1155, %v1342
          %1344 = vmatprep.mubr.f32.mxu0 0.0
          %1345 = vmatmul.mubr.f32.gmra.mrb[0].mxu0 %v1177
          %v1346 = vpop.f32.mrb[0].mxu0
          %v1347 = vadd.f32 %v1160, %v1346
          %v1348 = vpop.f32.mrb[0].mxu0
          %v1349 = vadd.f32 %v1160, %v1348
          %1350 = vmatprep.mubr.f32.mxu0 0.0
          %1351 = vmatmul.mubr.f32.gmra.mrb[0].mxu0 %v1180
          %v1352 = vpop.f32.mrb[0].mxu0
          %v1353 = vadd.f32 %v1165, %v1352
          %v1354 = vpop.f32.mrb[0].mxu0
          %v1355 = vadd.f32 %v1165, %v1354
          %1356 = vmatprep.mubr.f32.mxu0 0.0
          %1357 = vmatmul.mubr.f32.gmra.mrb[0].mxu0 %v1183
          %v1358 = vpop.f32.mrb[0].mxu0
          %v1359 = vadd.f32 %v1170, %v1358
          %v1360 = vpop.f32.mrb[0].mxu0
          %v1361 = vadd.f32 %v1170, %v1360
          %1362 = vdwg.mxu0
          %v1363 = vmax.f32 %v1252, 0.0
          %v1364 = vmax.f32 %v1254, 0.0
          %v1365 = vmax.f32 %v1341, 0.0
          %v1366 = vmax.f32 %v1343, 0.0
          %v1367 = vmax.f32 %v1258, 0.0
          %v1368 = vmax.f32 %v1260, 0.0
          %v1369 = vmax.f32 %v1347, 0.0
          %v1370 = vmax.f32 %v1349, 0.0
          %v1371 = vmax.f32 %v1264, 0.0
          %v1372 = vmax.f32 %v1266, 0.0
          %v1373 = vmax.f32 %v1353, 0.0
          %v1374 = vmax.f32 %v1355, 0.0
          %v1375 = vmax.f32 %v1270, 0.0
          %v1376 = vmax.f32 %v1272, 0.0
          %v1377 = vmax.f32 %v1359, 0.0
          %v1378 = vmax.f32 %v1361, 0.0
          %v1379 = vld [vmem:[%s548] sm:$0xff]
          %v1380 = vld [vmem:[%s548 + $0x8] sm:$0xff]
          %v1381 = vld [vmem:[%s548 + $0x10] sm:$0xff]
          %v1382 = vld [vmem:[%s548 + $0x18] sm:$0xff]
          %v1383 = vld [vmem:[%s548 + $0x20] sm:$0xff]
          %v1384 = vld [vmem:[%s548 + $0x28] sm:$0xff]
          %v1385 = vld [vmem:[%s548 + $0x30] sm:$0xff]
          %v1386 = vld [vmem:[%s548 + $0x38] sm:$0xff]
          %v1387 = vld [vmem:[%s548 + $0x40] sm:$0xff]
          %v1388 = vld [vmem:[%s548 + $0x48] sm:$0xff]
          %v1389 = vld [vmem:[%s548 + $0x50] sm:$0xff]
          %v1390 = vld [vmem:[%s548 + $0x58] sm:$0xff]
          %v1391 = vld [vmem:[%s548 + $0x60] sm:$0xff]
          %v1392 = vld [vmem:[%s548 + $0x68] sm:$0xff]
          %v1393 = vld [vmem:[%s548 + $0x70] sm:$0xff]
          %v1394 = vld [vmem:[%s548 + $0x78] sm:$0xff]
          %v1395 = vadd.f32 %v1379, %v1363
          %v1396 = vadd.f32 %v1380, %v1364
          %v1397 = vadd.f32 %v1381, %v1365
          %v1398 = vadd.f32 %v1382, %v1366
          %v1399 = vadd.f32 %v1383, %v1367
          %v1400 = vadd.f32 %v1384, %v1368
          %v1401 = vadd.f32 %v1385, %v1369
          %v1402 = vadd.f32 %v1386, %v1370
          %v1403 = vadd.f32 %v1387, %v1371
          %v1404 = vadd.f32 %v1388, %v1372
          %v1405 = vadd.f32 %v1389, %v1373
          %v1406 = vadd.f32 %v1390, %v1374
          %v1407 = vadd.f32 %v1391, %v1375
          %v1408 = vadd.f32 %v1392, %v1376
          %v1409 = vadd.f32 %v1393, %v1377
          %v1410 = vadd.f32 %v1394, %v1378
          %1411 = vst [vmem:[%s590] sm:$0xff] %v1395
          %1412 = vst [vmem:[%s590 + $0x8] sm:$0xff] %v1396
          %1413 = vst [vmem:[%s590 + $0x10] sm:$0xff] %v1397
          %1414 = vst [vmem:[%s590 + $0x18] sm:$0xff] %v1398
          %1415 = vst [vmem:[%s590 + $0x20] sm:$0xff] %v1399
          %1416 = vst [vmem:[%s590 + $0x28] sm:$0xff] %v1400
          %1417 = vst [vmem:[%s590 + $0x30] sm:$0xff] %v1401
          %1418 = vst [vmem:[%s590 + $0x38] sm:$0xff] %v1402
          %1419 = vst [vmem:[%s590 + $0x40] sm:$0xff] %v1403
          %1420 = vst [vmem:[%s590 + $0x48] sm:$0xff] %v1404
          %1421 = vst [vmem:[%s590 + $0x50] sm:$0xff] %v1405
          %1422 = vst [vmem:[%s590 + $0x58] sm:$0xff] %v1406
          %1423 = vst [vmem:[%s590 + $0x60] sm:$0xff] %v1407
          %1424 = vst [vmem:[%s590 + $0x68] sm:$0xff] %v1408
          %1425 = vst [vmem:[%s590 + $0x70] sm:$0xff] %v1409
          %1426 = vst [vmem:[%s590 + $0x78] sm:$0xff] %v1410
          %v1427 = vld [vmem:[%s5] sm:$0xff]
          %v1428 = vld [vmem:[%s5 + $0x8] sm:$0xff]
          %v1429 = vld [vmem:[%s5 + $0x10] sm:$0xff]
          %v1430 = vld [vmem:[%s5 + $0x18] sm:$0xff]
          %v1431 = vld [vmem:[%s6] sm:$0xff]
          %v1432 = vld [vmem:[%s6 + $0x8] sm:$0xff]
          %v1433 = vld [vmem:[%s6 + $0x10] sm:$0xff]
          %v1434 = vld [vmem:[%s6 + $0x18] sm:$0xff]
          %1436 = vset.pattern.permute.xlu0 0
          %1437 = vperm.xlu0 %1436, %v1431
          %v1438 = vpop.permute.xlu0 %1437
          %1441 = vset.pattern.permute.xlu0 0
          %1442 = vperm.xlu0 %1441, %v1432
          %v1443 = vpop.permute.xlu0 %1442
          %1446 = vset.pattern.permute.xlu0 0
          %1447 = vperm.xlu0 %1446, %v1433
          %v1448 = vpop.permute.xlu0 %1447
          %1451 = vset.pattern.permute.xlu0 0
          %1452 = vperm.xlu0 %1451, %v1434
          %v1453 = vpop.permute.xlu0 %1452
          %v1456 = vsel %vm1172, %v1427, 0
          %v1459 = vsel %vm1172, %v1428, 0
          %v1462 = vsel %vm1172, %v1429, 0
          %v1465 = vsel %vm1172, %v1430, 0
          %1467 = vmatprep.subr.mxu0 %v1396
          %1468 = vmatpush1.msra.mxu0 %v1395
          %1469 = vmatprep.subr.mxu0 %v1400
          %1470 = vmatpush1.msra.mxu0 %v1399
          %1471 = vmatprep.subr.mxu0 %v1404
          %1472 = vmatpush1.msra.mxu0 %v1403
          %1473 = vmatprep.subr.mxu0 %v1408
          %1474 = vmatpush1.msra.mxu0 %v1407
          %1475 = vmatprep.subr.mxu0 0.0
          %1476 = vmatpush1.msra.mxu0 0.0
          %1477 = vmatprep.subr.mxu0 0.0
          %1478 = vmatpush1.msra.mxu0 0.0
          %1479 = vmatprep.subr.mxu0 0.0
          %1480 = vmatpush1.msra.mxu0 0.0
          %1481 = vmatprep.subr.mxu0 0.0
          %1482 = vmatpush1.msra.mxu0 0.0
          %1483 = vmatprep.subr.mxu0 0.0
          %1484 = vmatpush1.msra.mxu0 0.0
          %1485 = vmatprep.subr.mxu0 0.0
          %1486 = vmatpush1.msra.mxu0 0.0
          %1487 = vmatprep.subr.mxu0 0.0
          %1488 = vmatpush1.msra.mxu0 0.0
          %1489 = vmatprep.subr.mxu0 0.0
          %1490 = vmatpush1.msra.mxu0 0.0
          %1491 = vmatprep.subr.mxu0 0.0
          %1492 = vmatpush1.msra.mxu0 0.0
          %1493 = vmatprep.subr.mxu0 0.0
          %1494 = vmatpush1.msra.mxu0 0.0
          %1495 = vmatprep.subr.mxu0 0.0
          %1496 = vmatpush1.msra.mxu0 0.0
          %1497 = vmatprep.subr.mxu0 0.0
          %1498 = vmatpush1.msra.mxu0 0.0
          %1499 = vmatprep.subr.mxu0 0.0
          %1500 = vmatpush1.msra.mxu0 0.0
          %1501 = vmatprep.subr.mxu0 0.0
          %1502 = vmatpush1.msra.mxu0 0.0
          %1503 = vmatprep.subr.mxu0 0.0
          %1504 = vmatpush1.msra.mxu0 0.0
          %1505 = vmatprep.subr.mxu0 0.0
          %1506 = vmatpush1.msra.mxu0 0.0
          %1507 = vmatprep.subr.mxu0 0.0
          %1508 = vmatpush1.msra.mxu0 0.0
          %1509 = vmatprep.subr.mxu0 0.0
          %1510 = vmatpush1.msra.mxu0 0.0
          %1511 = vmatprep.subr.mxu0 0.0
          %1512 = vmatpush1.msra.mxu0 0.0
          %1513 = vmatprep.subr.mxu0 0.0
          %1514 = vmatpush1.msra.mxu0 0.0
          %1515 = vmatprep.subr.mxu0 0.0
          %1516 = vmatpush1.msra.mxu0 0.0
          %1517 = vmatprep.subr.mxu0 0.0
          %1518 = vmatpush1.msra.mxu0 0.0
          %1519 = vmatprep.subr.mxu0 0.0
          %1520 = vmatpush1.msra.mxu0 0.0
          %1521 = vmatprep.subr.mxu0 0.0
          %1522 = vmatpush1.msra.mxu0 0.0
          %1523 = vmatprep.subr.mxu0 0.0
          %1524 = vmatpush1.msra.mxu0 0.0
          %1525 = vmatprep.subr.mxu0 0.0
          %1526 = vmatpush1.msra.mxu0 0.0
          %1527 = vmatprep.subr.mxu0 0.0
          %1528 = vmatpush1.msra.mxu0 0.0
          %1529 = vmatprep.subr.mxu0 0.0
          %1530 = vmatpush1.msra.mxu0 0.0
          %1531 = vmatprep.mubr.f32.mxu0 0.0
          %1532 = vmatmul.mubr.f32.gmra.mrb[0].mxu0 %v1456
          %v1533 = vpop.f32.mrb[0].mxu0
          %v1534 = vadd.f32 %v1438, %v1533
          %v1535 = vpop.f32.mrb[0].mxu0
          %v1536 = vadd.f32 %v1438, %v1535
          %1537 = vmatprep.mubr.f32.mxu0 0.0
          %1538 = vmatmul.mubr.f32.gmra.mrb[0].mxu0 %v1459
          %v1539 = vpop.f32.mrb[0].mxu0
          %v1540 = vadd.f32 %v1443, %v1539
          %v1541 = vpop.f32.mrb[0].mxu0
          %v1542 = vadd.f32 %v1443, %v1541
          %1543 = vmatprep.mubr.f32.mxu0 0.0
          %1544 = vmatmul.mubr.f32.gmra.mrb[0].mxu0 %v1462
          %v1545 = vpop.f32.mrb[0].mxu0
          %v1546 = vadd.f32 %v1448, %v1545
          %v1547 = vpop.f32.mrb[0].mxu0
          %v1548 = vadd.f32 %v1448, %v1547
          %1549 = vmatprep.mubr.f32.mxu0 0.0
          %1550 = vmatmul.mubr.f32.gmra.mrb[0].mxu0 %v1465
          %v1551 = vpop.f32.mrb[0].mxu0
          %v1552 = vadd.f32 %v1453, %v1551
          %v1553 = vpop.f32.mrb[0].mxu0
          %v1554 = vadd.f32 %v1453, %v1553
          %1555 = vdwg.mxu0
          %1556 = vmatprep.subr.mxu0 %v1398
          %1557 = vmatpush1.msra.mxu0 %v1397
          %1558 = vmatprep.subr.mxu0 %v1402
          %1559 = vmatpush1.msra.mxu0 %v1401
          %1560 = vmatprep.subr.mxu0 %v1406
          %1561 = vmatpush1.msra.mxu0 %v1405
          %1562 = vmatprep.subr.mxu0 %v1410
          %1563 = vmatpush1.msra.mxu0 %v1409
          %1564 = vmatprep.subr.mxu0 0.0
          %1565 = vmatpush1.msra.mxu0 0.0
          %1566 = vmatprep.subr.mxu0 0.0
          %1567 = vmatpush1.msra.mxu0 0.0
          %1568 = vmatprep.subr.mxu0 0.0
          %1569 = vmatpush1.msra.mxu0 0.0
          %1570 = vmatprep.subr.mxu0 0.0
          %1571 = vmatpush1.msra.mxu0 0.0
          %1572 = vmatprep.subr.mxu0 0.0
          %1573 = vmatpush1.msra.mxu0 0.0
          %1574 = vmatprep.subr.mxu0 0.0
          %1575 = vmatpush1.msra.mxu0 0.0
          %1576 = vmatprep.subr.mxu0 0.0
          %1577 = vmatpush1.msra.mxu0 0.0
          %1578 = vmatprep.subr.mxu0 0.0
          %1579 = vmatpush1.msra.mxu0 0.0
          %1580 = vmatprep.subr.mxu0 0.0
          %1581 = vmatpush1.msra.mxu0 0.0
          %1582 = vmatprep.subr.mxu0 0.0
          %1583 = vmatpush1.msra.mxu0 0.0
          %1584 = vmatprep.subr.mxu0 0.0
          %1585 = vmatpush1.msra.mxu0 0.0
          %1586 = vmatprep.subr.mxu0 0.0
          %1587 = vmatpush1.msra.mxu0 0.0
          %1588 = vmatprep.subr.mxu0 0.0
          %1589 = vmatpush1.msra.mxu0 0.0
          %1590 = vmatprep.subr.mxu0 0.0
          %1591 = vmatpush1.msra.mxu0 0.0
          %1592 = vmatprep.subr.mxu0 0.0
          %1593 = vmatpush1.msra.mxu0 0.0
          %1594 = vmatprep.subr.mxu0 0.0
          %1595 = vmatpush1.msra.mxu0 0.0
          %1596 = vmatprep.subr.mxu0 0.0
          %1597 = vmatpush1.msra.mxu0 0.0
          %1598 = vmatprep.subr.mxu0 0.0
          %1599 = vmatpush1.msra.mxu0 0.0
          %1600 = vmatprep.subr.mxu0 0.0
          %1601 = vmatpush1.msra.mxu0 0.0
          %1602 = vmatprep.subr.mxu0 0.0
          %1603 = vmatpush1.msra.mxu0 0.0
          %1604 = vmatprep.subr.mxu0 0.0
          %1605 = vmatpush1.msra.mxu0 0.0
          %1606 = vmatprep.subr.mxu0 0.0
          %1607 = vmatpush1.msra.mxu0 0.0
          %1608 = vmatprep.subr.mxu0 0.0
          %1609 = vmatpush1.msra.mxu0 0.0
          %1610 = vmatprep.subr.mxu0 0.0
          %1611 = vmatpush1.msra.mxu0 0.0
          %1612 = vmatprep.subr.mxu0 0.0
          %1613 = vmatpush1.msra.mxu0 0.0
          %1614 = vmatprep.subr.mxu0 0.0
          %1615 = vmatpush1.msra.mxu0 0.0
          %1616 = vmatprep.subr.mxu0 0.0
          %1617 = vmatpush1.msra.mxu0 0.0
          %1618 = vmatprep.subr.mxu0 0.0
          %1619 = vmatpush1.msra.mxu0 0.0
          %1620 = vmatprep.mubr.f32.mxu0 0.0
          %1621 = vmatmul.mubr.f32.gmra.mrb[0].mxu0 %v1456
          %v1622 = vpop.f32.mrb[0].mxu0
          %v1623 = vadd.f32 %v1438, %v1622
          %v1624 = vpop.f32.mrb[0].mxu0
          %v1625 = vadd.f32 %v1438, %v1624
          %1626 = vmatprep.mubr.f32.mxu0 0.0
          %1627 = vmatmul.mubr.f32.gmra.mrb[0].mxu0 %v1459
          %v1628 = vpop.f32.mrb[0].mxu0
          %v1629 = vadd.f32 %v1443, %v1628
          %v1630 = vpop.f32.mrb[0].mxu0
          %v1631 = vadd.f32 %v1443, %v1630
          %1632 = vmatprep.mubr.f32.mxu0 0.0
          %1633 = vmatmul.mubr.f32.gmra.mrb[0].mxu0 %v1462
          %v1634 = vpop.f32.mrb[0].mxu0
          %v1635 = vadd.f32 %v1448, %v1634
          %v1636 = vpop.f32.mrb[0].mxu0
          %v1637 = vadd.f32 %v1448, %v1636
          %1638 = vmatprep.mubr.f32.mxu0 0.0
          %1639 = vmatmul.mubr.f32.gmra.mrb[0].mxu0 %v1465
          %v1640 = vpop.f32.mrb[0].mxu0
          %v1641 = vadd.f32 %v1453, %v1640
          %v1642 = vpop.f32.mrb[0].mxu0
          %v1643 = vadd.f32 %v1453, %v1642
          %1644 = vdwg.mxu0
          %v1645 = vmax.f32 %v1534, 0.0
          %v1646 = vmax.f32 %v1536, 0.0
          %v1647 = vmax.f32 %v1623, 0.0
          %v1648 = vmax.f32 %v1625, 0.0
          %v1649 = vmax.f32 %v1540, 0.0
          %v1650 = vmax.f32 %v1542, 0.0
          %v1651 = vmax.f32 %v1629, 0.0
          %v1652 = vmax.f32 %v1631, 0.0
          %v1653 = vmax.f32 %v1546, 0.0
          %v1654 = vmax.f32 %v1548, 0.0
          %v1655 = vmax.f32 %v1635, 0.0
          %v1656 = vmax.f32 %v1637, 0.0
          %v1657 = vmax.f32 %v1552, 0.0
          %v1658 = vmax.f32 %v1554, 0.0
          %v1659 = vmax.f32 %v1641, 0.0
          %v1660 = vmax.f32 %v1643, 0.0
          %v1661 = vpack.c.bf16 %v1649, %v1645
          %v1662 = vpack.c.bf16 %v1650, %v1646
          %v1663 = vpack.c.bf16 %v1651, %v1647
          %v1664 = vpack.c.bf16 %v1652, %v1648
          %v1665 = vpack.c.bf16 %v1657, %v1653
          %v1666 = vpack.c.bf16 %v1658, %v1654
          %v1667 = vpack.c.bf16 %v1659, %v1655
          %v1668 = vpack.c.bf16 %v1660, %v1656
          %v1677 = vunpack.c.l.b16 %v1661
          %v1678 = vunpack.c.l.b16 %v1662
          %v1679 = vunpack.c.l.b16 %v1663
          %v1680 = vunpack.c.l.b16 %v1664
          %v1681 = vunpack.c.h.b16 %v1661
          %v1682 = vunpack.c.h.b16 %v1662
          %v1683 = vunpack.c.h.b16 %v1663
          %v1684 = vunpack.c.h.b16 %v1664
          %v1685 = vunpack.c.l.b16 %v1665
          %v1686 = vunpack.c.l.b16 %v1666
          %v1687 = vunpack.c.l.b16 %v1667
          %v1688 = vunpack.c.l.b16 %v1668
          %v1689 = vunpack.c.h.b16 %v1665
          %v1690 = vunpack.c.h.b16 %v1666
          %v1691 = vunpack.c.h.b16 %v1667
          %v1692 = vunpack.c.h.b16 %v1668
          %v1693 = vpack.c.b16 %v1678, %v1677
          %v1694 = vpack.c.b16 %v1680, %v1679
          %v1695 = vpack.c.b16 %v1682, %v1681
          %v1696 = vpack.c.b16 %v1684, %v1683
          %v1697 = vpack.c.b16 %v1686, %v1685
          %v1698 = vpack.c.b16 %v1688, %v1687
          %v1699 = vpack.c.b16 %v1690, %v1689
          %v1700 = vpack.c.b16 %v1692, %v1691
          %1709 = vst [vmem:[%s597] sm:$0xff] %v1693
          %1710 = vst [vmem:[%s597 + $0x8] sm:$0xff] %v1694
          %1711 = vst [vmem:[%s597 + $0x10] sm:$0xff] %v1695
          %1712 = vst [vmem:[%s597 + $0x18] sm:$0xff] %v1696
          %1713 = vst [vmem:[%s597 + $0x20] sm:$0xff] %v1697
          %1714 = vst [vmem:[%s597 + $0x28] sm:$0xff] %v1698
          %1715 = vst [vmem:[%s597 + $0x30] sm:$0xff] %v1699
          %1716 = vst [vmem:[%s597 + $0x38] sm:$0xff] %v1700
        $region125: #{message_passing_nn.8} parent=104 // pred_fallthru
          _
        %s1717 = sand.u32 %s207, 1
        %s1718 = sand.u32 %s207, 1
        %s1719 = smul.addr %s1718, 128
        %s1720 = scalar_lea.vmem [#allocation6], %s1719
        %s1721 = sand.u32 %s233, 1
        %s1722 = scalar_lea.sflag [#allocation8], %s1721
        %s1723 = sand.u32 %s233, 1
        %s1724 = smul.addr %s1723, 64
        %s1725 = scalar_lea.vmem [#allocation7], %s1724
        // Predicated region
        $region126: #{message_passing_nn.8} parent=104 // pred_check
          %p1726 = pneg %p217
        $region127: #{message_passing_nn.8} parent=104 // pred_check_branch
          %1728 = sbr.rel (%p1726) target = $region129
        $region128: #{message_passing_nn.8} parent=104 // pred_region
          %s1729 = smul.u32 4, %s27
          %s1730 = smul.addr %s1729, 8
          %s1731 = scalar_lea.vmem %s7, %s1730
          // Predicated region
          $region130: #{message_passing_nn.8} parent=128 // pred_check
            _
          $region131: #{message_passing_nn.8} parent=128 // pred_check_branch
            %1733 = sbr.rel (0) target = $region133
          $region132: #{message_passing_nn.8} parent=128 // pred_region
            // Predicated region
            $region134: #{message_passing_nn.8} parent=132 // pred_check
              _
            $region135: #{message_passing_nn.8} parent=132 // pred_check_branch
              %1735 = sbr.rel (0) target = $region137
            $region136: #{message_passing_nn.8} parent=132 // pred_region
              loop: start=0, step=1, limit=1
              $region138: #{message_passing_nn.8} parent=136 // loop_pre_header
                _
              $region139: #{message_passing_nn.8} parent=136 // loop_header
                %s1737 = sphi 0, %s1741
                %p1738 = scmp.ge.s32.totalorder %s1737, 1
                %s1742 = sphi %s1720, %s1720
                %s1743 = sphi %s1731, %s1731
              $region140: #{message_passing_nn.8} parent=136 // loop_header_branch
                %1740 = sbr.rel (%p1738) target = $region144
              $region141: #{message_passing_nn.8} parent=136 // loop_body
                %v1744 = vld [vmem:[%s1742] sm:$0xff]
                %1745 = vst [vmem:[%s1743] sm:$0xff] %v1744
                %v1746 = vld [vmem:[%s1742 + $0x8] sm:$0xff]
                %1747 = vst [vmem:[%s1743 + $0x8] sm:$0xff] %v1746
                %v1748 = vld [vmem:[%s1742 + $0x10] sm:$0xff]
                %1749 = vst [vmem:[%s1743 + $0x10] sm:$0xff] %v1748
                %v1750 = vld [vmem:[%s1742 + $0x18] sm:$0xff]
                %1751 = vst [vmem:[%s1743 + $0x18] sm:$0xff] %v1750
                %v1752 = vld [vmem:[%s1742 + $0x20] sm:$0xff]
                %1753 = vst [vmem:[%s1743 + $0x40] sm:$0xff] %v1752
                %v1754 = vld [vmem:[%s1742 + $0x28] sm:$0xff]
                %1755 = vst [vmem:[%s1743 + $0x48] sm:$0xff] %v1754
                %v1756 = vld [vmem:[%s1742 + $0x30] sm:$0xff]
                %1757 = vst [vmem:[%s1743 + $0x50] sm:$0xff] %v1756
                %v1758 = vld [vmem:[%s1742 + $0x38] sm:$0xff]
                %1759 = vst [vmem:[%s1743 + $0x58] sm:$0xff] %v1758
                %v1760 = vld [vmem:[%s1742 + $0x40] sm:$0xff]
                %1761 = vst [vmem:[%s1743 + $0x80] sm:$0xff] %v1760
                %v1762 = vld [vmem:[%s1742 + $0x48] sm:$0xff]
                %1763 = vst [vmem:[%s1743 + $0x88] sm:$0xff] %v1762
                %v1764 = vld [vmem:[%s1742 + $0x50] sm:$0xff]
                %1765 = vst [vmem:[%s1743 + $0x90] sm:$0xff] %v1764
                %v1766 = vld [vmem:[%s1742 + $0x58] sm:$0xff]
                %1767 = vst [vmem:[%s1743 + $0x98] sm:$0xff] %v1766
                %v1768 = vld [vmem:[%s1742 + $0x60] sm:$0xff]
                %1769 = vst [vmem:[%s1743 + $0xc0] sm:$0xff] %v1768
                %v1770 = vld [vmem:[%s1742 + $0x68] sm:$0xff]
                %1771 = vst [vmem:[%s1743 + $0xc8] sm:$0xff] %v1770
                %v1772 = vld [vmem:[%s1742 + $0x70] sm:$0xff]
                %1773 = vst [vmem:[%s1743 + $0xd0] sm:$0xff] %v1772
                %v1774 = vld [vmem:[%s1742 + $0x78] sm:$0xff]
                %1775 = vst [vmem:[%s1743 + $0xd8] sm:$0xff] %v1774
              $region142: #{message_passing_nn.8} parent=136 // loop_footer
                %s1741 = sadd.s32 1, %s1737
              $region143: #{message_passing_nn.8} parent=136 // loop_footer_branch
                %1736 = sbr.rel target = $region139
              $region144: #{message_passing_nn.8} parent=136 // loop_exit
                _
            $region137: #{message_passing_nn.8} parent=132 // pred_fallthru
              _
            // Predicated region
            $region145: #{message_passing_nn.8} parent=132 // pred_check
              _
            $region146: #{message_passing_nn.8} parent=132 // pred_check_branch
              %1777 = sbr.rel target = $region148
            $region147: #{message_passing_nn.8} parent=132 // pred_region
              _
            $region148: #{message_passing_nn.8} parent=132 // pred_fallthru
              _
          $region133: #{message_passing_nn.8} parent=128 // pred_fallthru
            _
          %1778 = vnop
        $region129: #{message_passing_nn.8} parent=104 // pred_fallthru
          _
        // Predicated region
        $region149: #{message_passing_nn.8} parent=104 // pred_check
          %p1779 = pneg %p243
        $region150: #{message_passing_nn.8} parent=104 // pred_check_branch
          %1781 = sbr.rel (%p1779) target = $region152
        $region151: #{message_passing_nn.8} parent=104 // pred_region
          %s1782 = smul.u32 4, %s27
          %s1784 = ssub.s32 1024, 1024
          %1785 = vsyncadd %s1722, %s1784
          %s1786 = smul.addr %s1782, 64
          %s1787 = scalar_lea.hbm %s8, %s1786
          %s1788 = sshll.u32 %s1725, 4
          %s1789 = int_to_ptr.vmem [resolvable:$true] %s1788
          %1794 = dma.vmem_to_hbm [thread:$0]  %s1789, 1024, %s1787, %s1722, 256, 512, 16
        $region152: #{message_passing_nn.8} parent=104 // pred_fallthru
          _
      $region105: #{message_passing_nn.8} parent=5 // pred_fallthru
        _
      %p1795 = scmp.le.s32.totalorder 2, %s18
      // Predicated region
      $region153: #{message_passing_nn.8} parent=5 // pred_check
        %p1796 = pneg %p1795
      $region154: #{message_passing_nn.8} parent=5 // pred_check_branch
        %1798 = sbr.rel (%p1796) target = $region156
      $region155: #{message_passing_nn.8} parent=5 // pred_region
        %s1799 = ssub.s32 %s18, 2
        // Predicated region
        $region157: #{message_passing_nn.8} parent=155 // pred_check
          %p1800 = pneg %p223
        $region158: #{message_passing_nn.8} parent=155 // pred_check_branch
          %1802 = sbr.rel (%p1800) target = $region160
        $region159: #{message_passing_nn.8} parent=155 // pred_region
          %s1803 = sand.u32 %s208, 1
          %s1804 = sand.u32 %s208, 1
          %s1805 = smul.addr %s1804, 128
          %s1806 = scalar_lea.vmem [#allocation6], %s1805
        $region160: #{message_passing_nn.8} parent=155 // pred_fallthru
          _
        // Predicated region
        $region161: #{message_passing_nn.8} parent=155 // pred_check
          %p1807 = pneg %p249
        $region162: #{message_passing_nn.8} parent=155 // pred_check_branch
          %1809 = sbr.rel (%p1807) target = $region164
        $region163: #{message_passing_nn.8} parent=155 // pred_region
          %s1810 = sand.u32 %s234, 1
          %s1811 = scalar_lea.sflag [#allocation8], %s1810
          %s1812 = sand.u32 %s234, 1
          %s1813 = smul.addr %s1812, 64
          %s1814 = scalar_lea.vmem [#allocation7], %s1813
          %1815 = dma.done %s1811, 1024
        $region164: #{message_passing_nn.8} parent=155 // pred_fallthru
          _
      $region156: #{message_passing_nn.8} parent=5 // pred_fallthru
        _
    $region6: #{message_passing_nn.8} parent=1 // loop_footer
      %s22 = sadd.s32 1, %s18
    $region7: #{message_passing_nn.8} parent=1 // loop_footer_branch
      %17 = sbr.rel target = $region3
    $region8: #{message_passing_nn.8} parent=1 // loop_exit
      _
    %1816 = vsyncpa [#allocation8], 1
    %s1817 = scalar_lea.sflag [#allocation8], 1
    %1818 = vsyncpa %s1817, 1

// kernel: message_passing_nn.9
$region0: #{message_passing_nn.9}
  #allocation0 [shape = 'u32[]', space=smem, size = 0x4, offset = 0x4, fixed_abs, tag = 'smem constant byte address 0x4 - core index']
  #allocation1 [shape = 'u32[144,128]{1,0:T(1,128)}', space=vmem, size = 0x12000, scoped, tag = 'internal scratch']
  #allocation2 [shape = 'f32[32,128]{1,0:T(8,128)}', space=vmem, size = 0x4000, scoped, tag = 'scratch operand']
  #allocation3 [shape = 'f32[1,1]{1,0:T(1,128)S(1)}', space=vmem, size = 0x200, scoped, tag = 'scoped memory for message_passing_nn.9']
  %s0 = inlined_call_operand.vmem [shape: f32[32,1024], index: 0, kind: input, shape index: {}]
  %s1 = inlined_call_operand.vmem [shape: bf16[1024,128], index: 1, kind: input, shape index: {}]
  %s2 = inlined_call_operand.vmem [shape: f32[1,32], index: 2, kind: input, shape index: {}]
  %s3 = inlined_call_operand.<no memory space> [shape: f32[1,1], index: 3, kind: input, shape index: {}]
  %s4 = inlined_call_operand.vmem [shape: f32[1,128], index: 4, kind: output, shape index: {}]
  %s5 = sld [smem:[#allocation0]]
  $region80: #{message_passing_nn.9} parent=0
    _
  %s7 = ssub.s32 1, %s5
  %s8 = scalar_select 0, %s7, %s5
  %v9 = vstv %s3
  %10 = vst [vmem:[#allocation3] sm:$0x1] %v9
  $region1: #{message_passing_nn.9} parent=0
    #allocation4 [shape = 'u8[131072]{0}', space=vmem, size = 0x20000, scoped, tag = 'input window, operand 0']
    loop: start=0, step=1, limit=4
    $region2: #{message_passing_nn.9} parent=1 // loop_pre_header
      _
    $region3: #{message_passing_nn.9} parent=1 // loop_header
      %s12 = sphi 0, %s16
      %p13 = scmp.ge.s32.totalorder %s12, 4
      %s22 = sphi 0, %s24
      %s25 = sphi 0, %s22
      %s26 = sphi 0, %s25
      %s42 = sphi 0, %s26
      %s48 = sphi 0, %s50
      %s51 = sphi 0, %s48
      %s52 = sphi 0, %s51
      %s68 = sphi 0, %s52
      %s72 = sphi 0, %s72
      %s74 = sphi 0, %s72
      %s75 = sphi 0, %s74
      %s89 = sphi 0, %s75
      %s93 = sphi 0, %s93
      %s95 = sphi 0, %s93
      %s96 = sphi 0, %s95
      %s110 = sphi 0, %s96
      %s114 = sphi 0, %s114
      %s116 = sphi 0, %s114
      %s117 = sphi 0, %s116
      %s131 = sphi 0, %s117
    $region4: #{message_passing_nn.9} parent=1 // loop_header_branch
      %15 = sbr.rel (%p13) target = $region8
    $region5: #{message_passing_nn.9} parent=1 // loop_body
      %s17 = ssub.s32 %s12, 1
      %s18 = ssub.s32 %s12, 2
      %s19 = sadd.s32 %s12, 1
      %s20 = ssub.s32 %s12, %s19
      %p21 = scmp.eq.s32.totalorder %s20, 0
      %s23 = sadd.s32 %s22, 1
      %s24 = scalar_select %p21, %s22, %s23
      %p27 = pneg %p21
      %p28 = scmp.eq.s32.totalorder %s12, 1
      %p29 = por %p27, %p28
      %p30 = scmp.ne.s32.totalorder %s22, %s25
      %p31 = scmp.eq.s32.totalorder %s12, 0
      %p32 = por %p30, %p31
      %p33 = scmp.ne.s32.totalorder %s22, %s25
      %p34 = scmp.eq.s32.totalorder %s17, 1
      %p35 = por %p33, %p34
      %p36 = scmp.ne.s32.totalorder %s25, %s26
      %p37 = scmp.eq.s32.totalorder %s17, 0
      %p38 = por %p36, %p37
      %p39 = scmp.ne.s32.totalorder %s25, %s26
      %p40 = scmp.eq.s32.totalorder %s18, 1
      %p41 = por %p39, %p40
      %p43 = scmp.ne.s32.totalorder %s26, %s42
      %p44 = scmp.eq.s32.totalorder %s18, 0
      %p45 = por %p43, %p44
      %s46 = ssub.s32 %s12, %s19
      %p47 = scmp.eq.s32.totalorder %s46, 0
      %s49 = sadd.s32 %s48, 1
      %s50 = scalar_select %p47, %s48, %s49
      %p53 = pneg %p47
      %p54 = scmp.eq.s32.totalorder %s12, 1
      %p55 = por %p53, %p54
      %p56 = scmp.ne.s32.totalorder %s48, %s51
      %p57 = scmp.eq.s32.totalorder %s12, 0
      %p58 = por %p56, %p57
      %p59 = scmp.ne.s32.totalorder %s48, %s51
      %p60 = scmp.eq.s32.totalorder %s17, 1
      %p61 = por %p59, %p60
      %p62 = scmp.ne.s32.totalorder %s51, %s52
      %p63 = scmp.eq.s32.totalorder %s17, 0
      %p64 = por %p62, %p63
      %p65 = scmp.ne.s32.totalorder %s51, %s52
      %p66 = scmp.eq.s32.totalorder %s18, 1
      %p67 = por %p65, %p66
      %p69 = scmp.ne.s32.totalorder %s52, %s68
      %p70 = scmp.eq.s32.totalorder %s18, 0
      %p71 = por %p69, %p70
      %s73 = sadd.s32 %s72, 1
      %p76 = scmp.eq.s32.totalorder %s12, 1
      %p77 = scmp.ne.s32.totalorder %s72, %s74
      %p78 = scmp.eq.s32.totalorder %s12, 0
      %p79 = por %p77, %p78
      %p80 = scmp.ne.s32.totalorder %s72, %s74
      %p81 = scmp.eq.s32.totalorder %s17, 1
      %p82 = por %p80, %p81
      %p83 = scmp.ne.s32.totalorder %s74, %s75
      %p84 = scmp.eq.s32.totalorder %s17, 0
      %p85 = por %p83, %p84
      %p86 = scmp.ne.s32.totalorder %s74, %s75
      %p87 = scmp.eq.s32.totalorder %s18, 1
      %p88 = por %p86, %p87
      %p90 = scmp.ne.s32.totalorder %s75, %s89
      %p91 = scmp.eq.s32.totalorder %s18, 0
      %p92 = por %p90, %p91
      %s94 = sadd.s32 %s93, 1
      %p97 = scmp.eq.s32.totalorder %s12, 1
      %p98 = scmp.ne.s32.totalorder %s93, %s95
      %p99 = scmp.eq.s32.totalorder %s12, 0
      %p100 = por %p98, %p99
      %p101 = scmp.ne.s32.totalorder %s93, %s95
      %p102 = scmp.eq.s32.totalorder %s17, 1
      %p103 = por %p101, %p102
      %p104 = scmp.ne.s32.totalorder %s95, %s96
      %p105 = scmp.eq.s32.totalorder %s17, 0
      %p106 = por %p104, %p105
      %p107 = scmp.ne.s32.totalorder %s95, %s96
      %p108 = scmp.eq.s32.totalorder %s18, 1
      %p109 = por %p107, %p108
      %p111 = scmp.ne.s32.totalorder %s96, %s110
      %p112 = scmp.eq.s32.totalorder %s18, 0
      %p113 = por %p111, %p112
      %s115 = sadd.s32 %s114, 1
      %p118 = scmp.eq.s32.totalorder %s12, 1
      %p119 = scmp.ne.s32.totalorder %s114, %s116
      %p120 = scmp.eq.s32.totalorder %s12, 0
      %p121 = por %p119, %p120
      %p122 = scmp.ne.s32.totalorder %s114, %s116
      %p123 = scmp.eq.s32.totalorder %s17, 1
      %p124 = por %p122, %p123
      %p125 = scmp.ne.s32.totalorder %s116, %s117
      %p126 = scmp.eq.s32.totalorder %s17, 0
      %p127 = por %p125, %p126
      %p128 = scmp.ne.s32.totalorder %s116, %s117
      %p129 = scmp.eq.s32.totalorder %s18, 1
      %p130 = por %p128, %p129
      %p132 = scmp.ne.s32.totalorder %s117, %s131
      %p133 = scmp.eq.s32.totalorder %s18, 0
      %p134 = por %p132, %p133
      %p135 = scmp.le.s32.totalorder 1, %s12
      %p136 = scmp.lt.s32.totalorder %s12, 3
      %p137 = pnand %p135, %p136
      %p138 = pneg %p137
      // Predicated region
      $region9: #{message_passing_nn.9} parent=5 // pred_check
        _
      $region10: #{message_passing_nn.9} parent=5 // pred_check_branch
        %140 = sbr.rel (%p137) target = $region12
      $region11: #{message_passing_nn.9} parent=5 // pred_region
        %s141 = ssub.s32 %s12, 1
        // Predicated region
        $region13: #{message_passing_nn.9} parent=11 // pred_check
          %p142 = pneg %p85
        $region14: #{message_passing_nn.9} parent=11 // pred_check_branch
          %144 = sbr.rel (%p142) target = $region16
        $region15: #{message_passing_nn.9} parent=11 // pred_region
          _
        $region16: #{message_passing_nn.9} parent=11 // pred_fallthru
          _
        // Predicated region
        $region17: #{message_passing_nn.9} parent=11 // pred_check
          %p145 = pneg %p106
        $region18: #{message_passing_nn.9} parent=11 // pred_check_branch
          %147 = sbr.rel (%p145) target = $region20
        $region19: #{message_passing_nn.9} parent=11 // pred_region
          _
        $region20: #{message_passing_nn.9} parent=11 // pred_fallthru
          _
      $region12: #{message_passing_nn.9} parent=5 // pred_fallthru
        _
      %p148 = scmp.lt.s32.totalorder %s12, 2
      // Predicated region
      $region21: #{message_passing_nn.9} parent=5 // pred_check
        %p149 = pneg %p148
      $region22: #{message_passing_nn.9} parent=5 // pred_check_branch
        %151 = sbr.rel (%p149) target = $region24
      $region23: #{message_passing_nn.9} parent=5 // pred_region
        // Predicated region
        $region25: #{message_passing_nn.9} parent=23 // pred_check
          %p152 = pneg %p32
        $region26: #{message_passing_nn.9} parent=23 // pred_check_branch
          %154 = sbr.rel (%p152) target = $region28
        $region27: #{message_passing_nn.9} parent=23 // pred_region
          %s155 = sand.u32 %s22, 1
          %s156 = sand.u32 %s22, 1
          %s157 = smul.addr %s156, 128
          %s158 = scalar_lea.vmem [#allocation4], %s157
          %s159 = smul.u32 4, %s12
          %s160 = smul.addr %s159, 8
          %s161 = scalar_lea.vmem %s0, %s160
          // Predicated region
          $region29: #{message_passing_nn.9} parent=27 // pred_check
            _
          $region30: #{message_passing_nn.9} parent=27 // pred_check_branch
            %163 = sbr.rel (0) target = $region32
          $region31: #{message_passing_nn.9} parent=27 // pred_region
            // Predicated region
            $region33: #{message_passing_nn.9} parent=31 // pred_check
              _
            $region34: #{message_passing_nn.9} parent=31 // pred_check_branch
              %165 = sbr.rel (0) target = $region36
            $region35: #{message_passing_nn.9} parent=31 // pred_region
              loop: start=0, step=1, limit=1
              $region37: #{message_passing_nn.9} parent=35 // loop_pre_header
                _
              $region38: #{message_passing_nn.9} parent=35 // loop_header
                %s167 = sphi 0, %s171
                %p168 = scmp.ge.s32.totalorder %s167, 1
                %s172 = sphi %s161, %s161
                %s173 = sphi %s158, %s158
              $region39: #{message_passing_nn.9} parent=35 // loop_header_branch
                %170 = sbr.rel (%p168) target = $region43
              $region40: #{message_passing_nn.9} parent=35 // loop_body
                %v174 = vld [vmem:[%s172] sm:$0xff]
                %175 = vst [vmem:[%s173] sm:$0xff] %v174
                %v176 = vld [vmem:[%s172 + $0x8] sm:$0xff]
                %177 = vst [vmem:[%s173 + $0x8] sm:$0xff] %v176
                %v178 = vld [vmem:[%s172 + $0x10] sm:$0xff]
                %179 = vst [vmem:[%s173 + $0x10] sm:$0xff] %v178
                %v180 = vld [vmem:[%s172 + $0x18] sm:$0xff]
                %181 = vst [vmem:[%s173 + $0x18] sm:$0xff] %v180
                %v182 = vld [vmem:[%s172 + $0x40] sm:$0xff]
                %183 = vst [vmem:[%s173 + $0x20] sm:$0xff] %v182
                %v184 = vld [vmem:[%s172 + $0x48] sm:$0xff]
                %185 = vst [vmem:[%s173 + $0x28] sm:$0xff] %v184
                %v186 = vld [vmem:[%s172 + $0x50] sm:$0xff]
                %187 = vst [vmem:[%s173 + $0x30] sm:$0xff] %v186
                %v188 = vld [vmem:[%s172 + $0x58] sm:$0xff]
                %189 = vst [vmem:[%s173 + $0x38] sm:$0xff] %v188
                %v190 = vld [vmem:[%s172 + $0x80] sm:$0xff]
                %191 = vst [vmem:[%s173 + $0x40] sm:$0xff] %v190
                %v192 = vld [vmem:[%s172 + $0x88] sm:$0xff]
                %193 = vst [vmem:[%s173 + $0x48] sm:$0xff] %v192
                %v194 = vld [vmem:[%s172 + $0x90] sm:$0xff]
                %195 = vst [vmem:[%s173 + $0x50] sm:$0xff] %v194
                %v196 = vld [vmem:[%s172 + $0x98] sm:$0xff]
                %197 = vst [vmem:[%s173 + $0x58] sm:$0xff] %v196
                %v198 = vld [vmem:[%s172 + $0xc0] sm:$0xff]
                %199 = vst [vmem:[%s173 + $0x60] sm:$0xff] %v198
                %v200 = vld [vmem:[%s172 + $0xc8] sm:$0xff]
                %201 = vst [vmem:[%s173 + $0x68] sm:$0xff] %v200
                %v202 = vld [vmem:[%s172 + $0xd0] sm:$0xff]
                %203 = vst [vmem:[%s173 + $0x70] sm:$0xff] %v202
                %v204 = vld [vmem:[%s172 + $0xd8] sm:$0xff]
                %205 = vst [vmem:[%s173 + $0x78] sm:$0xff] %v204
              $region41: #{message_passing_nn.9} parent=35 // loop_footer
                %s171 = sadd.s32 1, %s167
              $region42: #{message_passing_nn.9} parent=35 // loop_footer_branch
                %166 = sbr.rel target = $region38
              $region43: #{message_passing_nn.9} parent=35 // loop_exit
                _
            $region36: #{message_passing_nn.9} parent=31 // pred_fallthru
              _
            // Predicated region
            $region44: #{message_passing_nn.9} parent=31 // pred_check
              _
            $region45: #{message_passing_nn.9} parent=31 // pred_check_branch
              %207 = sbr.rel target = $region47
            $region46: #{message_passing_nn.9} parent=31 // pred_region
              _
            $region47: #{message_passing_nn.9} parent=31 // pred_fallthru
              _
          $region32: #{message_passing_nn.9} parent=27 // pred_fallthru
            _
          %208 = vnop
        $region28: #{message_passing_nn.9} parent=23 // pred_fallthru
          _
        // Predicated region
        $region48: #{message_passing_nn.9} parent=23 // pred_check
          %p209 = pneg %p58
        $region49: #{message_passing_nn.9} parent=23 // pred_check_branch
          %211 = sbr.rel (%p209) target = $region51
        $region50: #{message_passing_nn.9} parent=23 // pred_region
          %s212 = smul.u32 64, %s12
          %p213 = scmp.lt.s32.totalorder %s212, 127
          %s214 = scalar_select %p213, %s212, 127
          %s215 = smul.addr %s214, 4
          %s216 = scalar_lea.vmem %s1, %s215
          %s217 = smul.u32 64, %s12
        $region51: #{message_passing_nn.9} parent=23 // pred_fallthru
          _
      $region24: #{message_passing_nn.9} parent=5 // pred_fallthru
        _
      %p218 = scmp.le.s32.totalorder 1, %s12
      %p219 = scmp.lt.s32.totalorder %s12, 3
      %p220 = pnand %p218, %p219
      %p221 = pneg %p220
      // Predicated region
      $region52: #{message_passing_nn.9} parent=5 // pred_check
        _
      $region53: #{message_passing_nn.9} parent=5 // pred_check_branch
        %223 = sbr.rel (%p220) target = $region55
      $region54: #{message_passing_nn.9} parent=5 // pred_region
        %s224 = ssub.s32 %s12, 1
        %s225 = sand.u32 %s25, 1
        %s226 = sand.u32 %s25, 1
        %s227 = smul.addr %s226, 128
        %s228 = scalar_lea.vmem [#allocation4], %s227
        // Predicated region
        $region56: #{message_passing_nn.9} parent=54 // pred_check
          %p229 = pneg %p38
        $region57: #{message_passing_nn.9} parent=54 // pred_check_branch
          %231 = sbr.rel (%p229) target = $region59
        $region58: #{message_passing_nn.9} parent=54 // pred_region
          _
        $region59: #{message_passing_nn.9} parent=54 // pred_fallthru
          _
        %s232 = sand.u32 %s25, 1
        %s233 = sand.u32 %s25, 1
        %s234 = smul.addr %s233, 128
        %s235 = scalar_lea.vmem [#allocation4], %s234
        %p236 = pneg %p38
        %p237 = pneg %p35
        %s238 = smul.u32 64, %s17
        %p239 = scmp.lt.s32.totalorder %s238, 127
        %s240 = scalar_select %p239, %s238, 127
        %s241 = smul.addr %s240, 4
        %s242 = scalar_lea.vmem %s1, %s241
        %p243 = pneg %p64
        %p244 = pneg %p61
        %p245 = pneg %p85
        %p246 = pneg %p82
        %p247 = pneg %p106
        %p248 = pneg %p103
        %p249 = pneg %p127
        %p250 = pneg %p124
        %s251 = smul.u32 4, %s17
        %s252 = smul.u32 64, %s17
        %p253 = scmp.lt.s32.totalorder %s252, 127
        %s254 = scalar_select %p253, %s252, 127
        %s255 = smul.addr %s254, 4
        %s256 = scalar_lea.vmem %s1, %s255
        %s257 = smul.u32 64, %s17
        %p259 = scmp.eq.s32.totalorder %s17, 0
        // Predicated region
        $region60: #{message_passing_nn.9} parent=54 // pred_check
          %p260 = pneg %p259
        $region61: #{message_passing_nn.9} parent=54 // pred_check_branch
          %262 = sbr.rel (%p260) target = $region63
        $region62: #{message_passing_nn.9} parent=54 // pred_region
          %263 = vst [vmem:[#allocation2] sm:$0xff] 0.0
          %264 = vst [vmem:[#allocation2 + $0x8] sm:$0xff] 0.0
          %265 = vst [vmem:[#allocation2 + $0x10] sm:$0xff] 0.0
          %266 = vst [vmem:[#allocation2 + $0x18] sm:$0xff] 0.0
        $region63: #{message_passing_nn.9} parent=54 // pred_fallthru
          _
        %v267 = vld [vmem:[#allocation2] sm:$0xff]
        %v268 = vld [vmem:[#allocation2 + $0x8] sm:$0xff]
        %v269 = vld [vmem:[#allocation2 + $0x10] sm:$0xff]
        %v270 = vld [vmem:[#allocation2 + $0x18] sm:$0xff]
        %v271 = vld [vmem:[%s228] sm:$0xff]
        %v272 = vld [vmem:[%s228 + $0x8] sm:$0xff]
        %v273 = vld [vmem:[%s228 + $0x10] sm:$0xff]
        %v274 = vld [vmem:[%s228 + $0x18] sm:$0xff]
        %v275 = vld [vmem:[%s228 + $0x20] sm:$0xff]
        %v276 = vld [vmem:[%s228 + $0x28] sm:$0xff]
        %v277 = vld [vmem:[%s228 + $0x30] sm:$0xff]
        %v278 = vld [vmem:[%s228 + $0x38] sm:$0xff]
        %v279 = vld [vmem:[%s228 + $0x40] sm:$0xff]
        %v280 = vld [vmem:[%s228 + $0x48] sm:$0xff]
        %v281 = vld [vmem:[%s228 + $0x50] sm:$0xff]
        %v282 = vld [vmem:[%s228 + $0x58] sm:$0xff]
        %v283 = vld [vmem:[%s228 + $0x60] sm:$0xff]
        %v284 = vld [vmem:[%s228 + $0x68] sm:$0xff]
        %v285 = vld [vmem:[%s228 + $0x70] sm:$0xff]
        %v286 = vld [vmem:[%s228 + $0x78] sm:$0xff]
        %v287 = vpack.c.bf16 %v275, %v271
        %v288 = vpack.c.bf16 %v276, %v272
        %v289 = vpack.c.bf16 %v277, %v273
        %v290 = vpack.c.bf16 %v278, %v274
        %v291 = vpack.c.bf16 %v283, %v279
        %v292 = vpack.c.bf16 %v284, %v280
        %v293 = vpack.c.bf16 %v285, %v281
        %v294 = vpack.c.bf16 %v286, %v282
        %v295 = vld [vmem:[%s256] sm:$0xf]
        %v296 = vld [vmem:[%s256 + $0x4] sm:$0xf]
        %v297 = vld [vmem:[%s256 + $0x8] sm:$0xf]
        %v298 = vld [vmem:[%s256 + $0xc] sm:$0xf]
        %v299 = vld [vmem:[%s256 + $0x10] sm:$0xf]
        %v300 = vld [vmem:[%s256 + $0x14] sm:$0xf]
        %v301 = vld [vmem:[%s256 + $0x18] sm:$0xf]
        %v302 = vld [vmem:[%s256 + $0x1c] sm:$0xf]
        %v303 = vld [vmem:[%s256 + $0x20] sm:$0xf]
        %v304 = vld [vmem:[%s256 + $0x24] sm:$0xf]
        %v305 = vld [vmem:[%s256 + $0x28] sm:$0xf]
        %v306 = vld [vmem:[%s256 + $0x2c] sm:$0xf]
        %v307 = vld [vmem:[%s256 + $0x30] sm:$0xf]
        %v308 = vld [vmem:[%s256 + $0x34] sm:$0xf]
        %v309 = vld [vmem:[%s256 + $0x38] sm:$0xf]
        %v310 = vld [vmem:[%s256 + $0x3c] sm:$0xf]
        %v311 = vld [vmem:[%s256 + $0x40] sm:$0xf]
        %v312 = vld [vmem:[%s256 + $0x44] sm:$0xf]
        %v313 = vld [vmem:[%s256 + $0x48] sm:$0xf]
        %v314 = vld [vmem:[%s256 + $0x4c] sm:$0xf]
        %v315 = vld [vmem:[%s256 + $0x50] sm:$0xf]
        %v316 = vld [vmem:[%s256 + $0x54] sm:$0xf]
        %v317 = vld [vmem:[%s256 + $0x58] sm:$0xf]
        %v318 = vld [vmem:[%s256 + $0x5c] sm:$0xf]
        %v319 = vld [vmem:[%s256 + $0x60] sm:$0xf]
        %v320 = vld [vmem:[%s256 + $0x64] sm:$0xf]
        %v321 = vld [vmem:[%s256 + $0x68] sm:$0xf]
        %v322 = vld [vmem:[%s256 + $0x6c] sm:$0xf]
        %v323 = vld [vmem:[%s256 + $0x70] sm:$0xf]
        %v324 = vld [vmem:[%s256 + $0x74] sm:$0xf]
        %v325 = vld [vmem:[%s256 + $0x78] sm:$0xf]
        %v326 = vld [vmem:[%s256 + $0x7c] sm:$0xf]
        %v327 = vld [vmem:[%s256 + $0x80] sm:$0xf]
        %v328 = vld [vmem:[%s256 + $0x84] sm:$0xf]
        %v329 = vld [vmem:[%s256 + $0x88] sm:$0xf]
        %v330 = vld [vmem:[%s256 + $0x8c] sm:$0xf]
        %v331 = vld [vmem:[%s256 + $0x90] sm:$0xf]
        %v332 = vld [vmem:[%s256 + $0x94] sm:$0xf]
        %v333 = vld [vmem:[%s256 + $0x98] sm:$0xf]
        %v334 = vld [vmem:[%s256 + $0x9c] sm:$0xf]
        %v335 = vld [vmem:[%s256 + $0xa0] sm:$0xf]
        %v336 = vld [vmem:[%s256 + $0xa4] sm:$0xf]
        %v337 = vld [vmem:[%s256 + $0xa8] sm:$0xf]
        %v338 = vld [vmem:[%s256 + $0xac] sm:$0xf]
        %v339 = vld [vmem:[%s256 + $0xb0] sm:$0xf]
        %v340 = vld [vmem:[%s256 + $0xb4] sm:$0xf]
        %v341 = vld [vmem:[%s256 + $0xb8] sm:$0xf]
        %v342 = vld [vmem:[%s256 + $0xbc] sm:$0xf]
        %v343 = vld [vmem:[%s256 + $0xc0] sm:$0xf]
        %v344 = vld [vmem:[%s256 + $0xc4] sm:$0xf]
        %v345 = vld [vmem:[%s256 + $0xc8] sm:$0xf]
        %v346 = vld [vmem:[%s256 + $0xcc] sm:$0xf]
        %v347 = vld [vmem:[%s256 + $0xd0] sm:$0xf]
        %v348 = vld [vmem:[%s256 + $0xd4] sm:$0xf]
        %v349 = vld [vmem:[%s256 + $0xd8] sm:$0xf]
        %v350 = vld [vmem:[%s256 + $0xdc] sm:$0xf]
        %v351 = vld [vmem:[%s256 + $0xe0] sm:$0xf]
        %v352 = vld [vmem:[%s256 + $0xe4] sm:$0xf]
        %v353 = vld [vmem:[%s256 + $0xe8] sm:$0xf]
        %v354 = vld [vmem:[%s256 + $0xec] sm:$0xf]
        %v355 = vld [vmem:[%s256 + $0xf0] sm:$0xf]
        %v356 = vld [vmem:[%s256 + $0xf4] sm:$0xf]
        %v357 = vld [vmem:[%s256 + $0xf8] sm:$0xf]
        %v358 = vld [vmem:[%s256 + $0xfc] sm:$0xf]
        %v423 = vunpack.c.l.b16 %v295
        %v424 = vunpack.c.l.b16 %v296
        %v425 = vunpack.c.l.b16 %v297
        %v426 = vunpack.c.l.b16 %v298
        %v427 = vunpack.c.l.b16 %v299
        %v428 = vunpack.c.l.b16 %v300
        %v429 = vunpack.c.l.b16 %v301
        %v430 = vunpack.c.l.b16 %v302
        %v431 = vunpack.c.l.b16 %v303
        %v432 = vunpack.c.l.b16 %v304
        %v433 = vunpack.c.l.b16 %v305
        %v434 = vunpack.c.l.b16 %v306
        %v435 = vunpack.c.l.b16 %v307
        %v436 = vunpack.c.l.b16 %v308
        %v437 = vunpack.c.l.b16 %v309
        %v438 = vunpack.c.l.b16 %v310
        %v439 = vunpack.c.l.b16 %v311
        %v440 = vunpack.c.l.b16 %v312
        %v441 = vunpack.c.l.b16 %v313
        %v442 = vunpack.c.l.b16 %v314
        %v443 = vunpack.c.l.b16 %v315
        %v444 = vunpack.c.l.b16 %v316
        %v445 = vunpack.c.l.b16 %v317
        %v446 = vunpack.c.l.b16 %v318
        %v447 = vunpack.c.l.b16 %v319
        %v448 = vunpack.c.l.b16 %v320
        %v449 = vunpack.c.l.b16 %v321
        %v450 = vunpack.c.l.b16 %v322
        %v451 = vunpack.c.l.b16 %v323
        %v452 = vunpack.c.l.b16 %v324
        %v453 = vunpack.c.l.b16 %v325
        %v454 = vunpack.c.l.b16 %v326
        %v455 = vunpack.c.l.b16 %v327
        %v456 = vunpack.c.l.b16 %v328
        %v457 = vunpack.c.l.b16 %v329
        %v458 = vunpack.c.l.b16 %v330
        %v459 = vunpack.c.l.b16 %v331
        %v460 = vunpack.c.l.b16 %v332
        %v461 = vunpack.c.l.b16 %v333
        %v462 = vunpack.c.l.b16 %v334
        %v463 = vunpack.c.l.b16 %v335
        %v464 = vunpack.c.l.b16 %v336
        %v465 = vunpack.c.l.b16 %v337
        %v466 = vunpack.c.l.b16 %v338
        %v467 = vunpack.c.l.b16 %v339
        %v468 = vunpack.c.l.b16 %v340
        %v469 = vunpack.c.l.b16 %v341
        %v470 = vunpack.c.l.b16 %v342
        %v471 = vunpack.c.l.b16 %v343
        %v472 = vunpack.c.l.b16 %v344
        %v473 = vunpack.c.l.b16 %v345
        %v474 = vunpack.c.l.b16 %v346
        %v475 = vunpack.c.l.b16 %v347
        %v476 = vunpack.c.l.b16 %v348
        %v477 = vunpack.c.l.b16 %v349
        %v478 = vunpack.c.l.b16 %v350
        %v479 = vunpack.c.l.b16 %v351
        %v480 = vunpack.c.l.b16 %v352
        %v481 = vunpack.c.l.b16 %v353
        %v482 = vunpack.c.l.b16 %v354
        %v483 = vunpack.c.l.b16 %v355
        %v484 = vunpack.c.l.b16 %v356
        %v485 = vunpack.c.l.b16 %v357
        %v486 = vunpack.c.l.b16 %v358
        %v487 = vpack.c.b16 %v424, %v423
        %v488 = vpack.c.b16 %v426, %v425
        %v489 = vpack.c.b16 %v428, %v427
        %v490 = vpack.c.b16 %v430, %v429
        %v491 = vpack.c.b16 %v432, %v431
        %v492 = vpack.c.b16 %v434, %v433
        %v493 = vpack.c.b16 %v436, %v435
        %v494 = vpack.c.b16 %v438, %v437
        %v495 = vpack.c.b16 %v440, %v439
        %v496 = vpack.c.b16 %v442, %v441
        %v497 = vpack.c.b16 %v444, %v443
        %v498 = vpack.c.b16 %v446, %v445
        %v499 = vpack.c.b16 %v448, %v447
        %v500 = vpack.c.b16 %v450, %v449
        %v501 = vpack.c.b16 %v452, %v451
        %v502 = vpack.c.b16 %v454, %v453
        %v503 = vpack.c.b16 %v456, %v455
        %v504 = vpack.c.b16 %v458, %v457
        %v505 = vpack.c.b16 %v460, %v459
        %v506 = vpack.c.b16 %v462, %v461
        %v507 = vpack.c.b16 %v464, %v463
        %v508 = vpack.c.b16 %v466, %v465
        %v509 = vpack.c.b16 %v468, %v467
        %v510 = vpack.c.b16 %v470, %v469
        %v511 = vpack.c.b16 %v472, %v471
        %v512 = vpack.c.b16 %v474, %v473
        %v513 = vpack.c.b16 %v476, %v475
        %v514 = vpack.c.b16 %v478, %v477
        %v515 = vpack.c.b16 %v480, %v479
        %v516 = vpack.c.b16 %v482, %v481
        %v517 = vpack.c.b16 %v484, %v483
        %v518 = vpack.c.b16 %v486, %v485
        %551 = vmatprep.subr.bf16.mxu0 0
        %552 = vmatpush1.bf16.msra.mxu0 %v487
        %553 = vmatprep.subr.bf16.mxu0 0
        %554 = vmatpush1.bf16.msra.mxu0 %v488
        %555 = vmatprep.subr.bf16.mxu0 0
        %556 = vmatpush1.bf16.msra.mxu0 %v489
        %557 = vmatprep.subr.bf16.mxu0 0
        %558 = vmatpush1.bf16.msra.mxu0 %v490
        %559 = vmatprep.subr.bf16.mxu0 0
        %560 = vmatpush1.bf16.msra.mxu0 %v491
        %561 = vmatprep.subr.bf16.mxu0 0
        %562 = vmatpush1.bf16.msra.mxu0 %v492
        %563 = vmatprep.subr.bf16.mxu0 0
        %564 = vmatpush1.bf16.msra.mxu0 %v493
        %565 = vmatprep.subr.bf16.mxu0 0
        %566 = vmatpush1.bf16.msra.mxu0 %v494
        %567 = vmatprep.subr.bf16.mxu0 0
        %568 = vmatpush1.bf16.msra.mxu0 %v495
        %569 = vmatprep.subr.bf16.mxu0 0
        %570 = vmatpush1.bf16.msra.mxu0 %v496
        %571 = vmatprep.subr.bf16.mxu0 0
        %572 = vmatpush1.bf16.msra.mxu0 %v497
        %573 = vmatprep.subr.bf16.mxu0 0
        %574 = vmatpush1.bf16.msra.mxu0 %v498
        %575 = vmatprep.subr.bf16.mxu0 0
        %576 = vmatpush1.bf16.msra.mxu0 %v499
        %577 = vmatprep.subr.bf16.mxu0 0
        %578 = vmatpush1.bf16.msra.mxu0 %v500
        %579 = vmatprep.subr.bf16.mxu0 0
        %580 = vmatpush1.bf16.msra.mxu0 %v501
        %581 = vmatprep.subr.bf16.mxu0 0
        %582 = vmatpush1.bf16.msra.mxu0 %v502
        %583 = vmatprep.mubr.bf16.mxu0 %v288
        %584 = vmatmul.mubr.bf16.gmra.mrb[0].mxu0 %v287
        %v585 = vpop.f32.mrb[0].mxu0
        %v586 = vadd.f32 0.0, %v585
        %v587 = vpop.f32.mrb[0].mxu0
        %v588 = vpop.f32.mrb[0].mxu0
        %v589 = vadd.f32 0.0, %v588
        %v590 = vpop.f32.mrb[0].mxu0
        %591 = vmatprep.mubr.bf16.mxu0 %v292
        %592 = vmatmul.mubr.bf16.gmra.mrb[0].mxu0 %v291
        %v593 = vpop.f32.mrb[0].mxu0
        %v594 = vadd.f32 0.0, %v593
        %v595 = vpop.f32.mrb[0].mxu0
        %v596 = vpop.f32.mrb[0].mxu0
        %v597 = vadd.f32 0.0, %v596
        %v598 = vpop.f32.mrb[0].mxu0
        %599 = vdwg.mxu0
        %600 = vmatprep.subr.bf16.mxu0 0
        %601 = vmatpush1.bf16.msra.mxu0 %v503
        %602 = vmatprep.subr.bf16.mxu0 0
        %603 = vmatpush1.bf16.msra.mxu0 %v504
        %604 = vmatprep.subr.bf16.mxu0 0
        %605 = vmatpush1.bf16.msra.mxu0 %v505
        %606 = vmatprep.subr.bf16.mxu0 0
        %607 = vmatpush1.bf16.msra.mxu0 %v506
        %608 = vmatprep.subr.bf16.mxu0 0
        %609 = vmatpush1.bf16.msra.mxu0 %v507
        %610 = vmatprep.subr.bf16.mxu0 0
        %611 = vmatpush1.bf16.msra.mxu0 %v508
        %612 = vmatprep.subr.bf16.mxu0 0
        %613 = vmatpush1.bf16.msra.mxu0 %v509
        %614 = vmatprep.subr.bf16.mxu0 0
        %615 = vmatpush1.bf16.msra.mxu0 %v510
        %616 = vmatprep.subr.bf16.mxu0 0
        %617 = vmatpush1.bf16.msra.mxu0 %v511
        %618 = vmatprep.subr.bf16.mxu0 0
        %619 = vmatpush1.bf16.msra.mxu0 %v512
        %620 = vmatprep.subr.bf16.mxu0 0
        %621 = vmatpush1.bf16.msra.mxu0 %v513
        %622 = vmatprep.subr.bf16.mxu0 0
        %623 = vmatpush1.bf16.msra.mxu0 %v514
        %624 = vmatprep.subr.bf16.mxu0 0
        %625 = vmatpush1.bf16.msra.mxu0 %v515
        %626 = vmatprep.subr.bf16.mxu0 0
        %627 = vmatpush1.bf16.msra.mxu0 %v516
        %628 = vmatprep.subr.bf16.mxu0 0
        %629 = vmatpush1.bf16.msra.mxu0 %v517
        %630 = vmatprep.subr.bf16.mxu0 0
        %631 = vmatpush1.bf16.msra.mxu0 %v518
        %632 = vmatprep.mubr.bf16.mxu0 %v290
        %633 = vmatmul.mubr.bf16.gmra.mrb[0].mxu0 %v289
        %v634 = vpop.f32.mrb[0].mxu0
        %v635 = vadd.f32 %v586, %v634
        %v636 = vpop.f32.mrb[0].mxu0
        %v637 = vpop.f32.mrb[0].mxu0
        %v638 = vadd.f32 %v589, %v637
        %v639 = vpop.f32.mrb[0].mxu0
        %640 = vmatprep.mubr.bf16.mxu0 %v294
        %641 = vmatmul.mubr.bf16.gmra.mrb[0].mxu0 %v293
        %v642 = vpop.f32.mrb[0].mxu0
        %v643 = vadd.f32 %v594, %v642
        %v644 = vpop.f32.mrb[0].mxu0
        %v645 = vpop.f32.mrb[0].mxu0
        %v646 = vadd.f32 %v597, %v645
        %v647 = vpop.f32.mrb[0].mxu0
        %648 = vdwg.mxu0
        %v649 = vadd.f32 %v267, %v635
        %v650 = vadd.f32 %v268, %v638
        %v651 = vadd.f32 %v269, %v643
        %v652 = vadd.f32 %v270, %v646
        %653 = vst [vmem:[#allocation2] sm:$0xff] %v649
        %654 = vst [vmem:[#allocation2 + $0x8] sm:$0xff] %v650
        %655 = vst [vmem:[#allocation2 + $0x10] sm:$0xff] %v651
        %656 = vst [vmem:[#allocation2 + $0x18] sm:$0xff] %v652
        %p657 = scmp.eq.s32.totalorder %s17, 1
        // Predicated region
        $region64: #{message_passing_nn.9} parent=54 // pred_check
          %p658 = pneg %p657
        $region65: #{message_passing_nn.9} parent=54 // pred_check_branch
          %660 = sbr.rel (%p658) target = $region67
        $region66: #{message_passing_nn.9} parent=54 // pred_region
          %v661 = vld [vmem:[%s2] sm:$0x1]
          %v662 = vld [vmem:[#allocation2] sm:$0xff]
          %v663 = vld [vmem:[#allocation2 + $0x8] sm:$0xff]
          %v664 = vld [vmem:[#allocation2 + $0x10] sm:$0xff]
          %v665 = vld [vmem:[#allocation2 + $0x18] sm:$0xff]
          %v666 = vld [vmem:[#allocation3] sm:$0x1]
          %668 = vset.pattern.permute.xlu0 0
          %669 = vperm.xlu0 %668, %v666
          %v670 = vpop.permute.xlu0 %669
          %v672 = vlaneseq
          %v673 = vshrl.u32 %v672, 7
          %v674 = vsub.s32 0, %v673
          %v675 = vrot.slane %v670, %v674
          %vm676 = vcmask 261120
          %v678 = vsel %vm676, %v661, 0
          %680 = vmatprep.subr.mxu0 0.0
          %681 = vmatpush1.msra.mxu0 %v662
          %682 = vmatprep.subr.mxu0 0.0
          %683 = vmatpush1.msra.mxu0 %v663
          %684 = vmatprep.subr.mxu0 0.0
          %685 = vmatpush1.msra.mxu0 %v664
          %686 = vmatprep.subr.mxu0 0.0
          %687 = vmatpush1.msra.mxu0 %v665
          %688 = vmatprep.subr.mxu0 0.0
          %689 = vmatpush1.msra.mxu0 0.0
          %690 = vmatprep.subr.mxu0 0.0
          %691 = vmatpush1.msra.mxu0 0.0
          %692 = vmatprep.subr.mxu0 0.0
          %693 = vmatpush1.msra.mxu0 0.0
          %694 = vmatprep.subr.mxu0 0.0
          %695 = vmatpush1.msra.mxu0 0.0
          %696 = vmatprep.subr.mxu0 0.0
          %697 = vmatpush1.msra.mxu0 0.0
          %698 = vmatprep.subr.mxu0 0.0
          %699 = vmatpush1.msra.mxu0 0.0
          %700 = vmatprep.subr.mxu0 0.0
          %701 = vmatpush1.msra.mxu0 0.0
          %702 = vmatprep.subr.mxu0 0.0
          %703 = vmatpush1.msra.mxu0 0.0
          %704 = vmatprep.subr.mxu0 0.0
          %705 = vmatpush1.msra.mxu0 0.0
          %706 = vmatprep.subr.mxu0 0.0
          %707 = vmatpush1.msra.mxu0 0.0
          %708 = vmatprep.subr.mxu0 0.0
          %709 = vmatpush1.msra.mxu0 0.0
          %710 = vmatprep.subr.mxu0 0.0
          %711 = vmatpush1.msra.mxu0 0.0
          %712 = vmatprep.subr.mxu0 0.0
          %713 = vmatpush1.msra.mxu0 0.0
          %714 = vmatprep.subr.mxu0 0.0
          %715 = vmatpush1.msra.mxu0 0.0
          %716 = vmatprep.subr.mxu0 0.0
          %717 = vmatpush1.msra.mxu0 0.0
          %718 = vmatprep.subr.mxu0 0.0
          %719 = vmatpush1.msra.mxu0 0.0
          %720 = vmatprep.subr.mxu0 0.0
          %721 = vmatpush1.msra.mxu0 0.0
          %722 = vmatprep.subr.mxu0 0.0
          %723 = vmatpush1.msra.mxu0 0.0
          %724 = vmatprep.subr.mxu0 0.0
          %725 = vmatpush1.msra.mxu0 0.0
          %726 = vmatprep.subr.mxu0 0.0
          %727 = vmatpush1.msra.mxu0 0.0
          %728 = vmatprep.subr.mxu0 0.0
          %729 = vmatpush1.msra.mxu0 0.0
          %730 = vmatprep.subr.mxu0 0.0
          %731 = vmatpush1.msra.mxu0 0.0
          %732 = vmatprep.subr.mxu0 0.0
          %733 = vmatpush1.msra.mxu0 0.0
          %734 = vmatprep.subr.mxu0 0.0
          %735 = vmatpush1.msra.mxu0 0.0
          %736 = vmatprep.subr.mxu0 0.0
          %737 = vmatpush1.msra.mxu0 0.0
          %738 = vmatprep.subr.mxu0 0.0
          %739 = vmatpush1.msra.mxu0 0.0
          %740 = vmatprep.subr.mxu0 0.0
          %741 = vmatpush1.msra.mxu0 0.0
          %742 = vmatprep.subr.mxu0 0.0
          %743 = vmatpush1.msra.mxu0 0.0
          %744 = vmatprep.mubr.f32.mxu0 0.0
          %745 = vmatmul.mubr.f32.gmra.mrb[0].mxu0 %v678
          %v746 = vpop.f32.mrb[0].mxu0
          %v747 = vadd.f32 %v675, %v746
          %v748 = vpop.f32.mrb[0].mxu0
          %749 = vdwg.mxu0
          %750 = vst [vmem:[%s4] sm:$0x1] %v747
        $region67: #{message_passing_nn.9} parent=54 // pred_fallthru
          _
        // Predicated region
        $region68: #{message_passing_nn.9} parent=54 // pred_check
          %p751 = pneg %p124
        $region69: #{message_passing_nn.9} parent=54 // pred_check_branch
          %753 = sbr.rel (%p751) target = $region71
        $region70: #{message_passing_nn.9} parent=54 // pred_region
          _
        $region71: #{message_passing_nn.9} parent=54 // pred_fallthru
          _
        // Predicated region
        $region72: #{message_passing_nn.9} parent=54 // pred_check
          %p754 = pneg %p124
        $region73: #{message_passing_nn.9} parent=54 // pred_check_branch
          %756 = sbr.rel (%p754) target = $region75
        $region74: #{message_passing_nn.9} parent=54 // pred_region
          _
        $region75: #{message_passing_nn.9} parent=54 // pred_fallthru
          _
      $region55: #{message_passing_nn.9} parent=5 // pred_fallthru
        _
      %p757 = scmp.le.s32.totalorder 2, %s12
      // Predicated region
      $region76: #{message_passing_nn.9} parent=5 // pred_check
        %p758 = pneg %p757
      $region77: #{message_passing_nn.9} parent=5 // pred_check_branch
        %760 = sbr.rel (%p758) target = $region79
      $region78: #{message_passing_nn.9} parent=5 // pred_region
        %s761 = ssub.s32 %s12, 2
      $region79: #{message_passing_nn.9} parent=5 // pred_fallthru
        _
    $region6: #{message_passing_nn.9} parent=1 // loop_footer
      %s16 = sadd.s32 1, %s12
    $region7: #{message_passing_nn.9} parent=1 // loop_footer_branch
      %11 = sbr.rel target = $region3
    $region8: #{message_passing_nn.9} parent=1 // loop_exit
      _

</llo_original>
